<compile_context>
chip_gen: v5e
topology: v5e:2x2
jax: 0.10.0
libtpu: 0.0.40
codegen_flags: <defaults>
</compile_context>

<pallas_src>
import functools

import jax
import jax.numpy as jnp
from jax.experimental import pallas as pl
from jax.experimental.pallas import tpu as pltpu

# ----------------------------- configuration -------------------------------
INPUT_NF = 32      # input_nf == output_nf (required by the residual x + node_mlp(...))
OUTPUT_NF = 32
HIDDEN_NF = 32
NORMALIZATION_FACTOR = 4.0
AGGREGATION_METHOD = "sum"     # kernel implements 'sum' normalization
N_NODES = 16
N_EDGES = 48
N_GRAPHS = 4                   # batch of independent graphs

_F, _H, _O = INPUT_NF, HIDDEN_NF, OUTPUT_NF
assert _O == _F, "residual requires output_nf == input_nf"
assert _O == _H, "packed-weight layout assumes output_nf == hidden_nf"

# static row offsets inside the packed parameter buffer (width = HIDDEN_NF)
W_OFF_W1S = 0                    # edge_mlp layer-1, source half   (F, H)
W_OFF_W1T = _F                   # edge_mlp layer-1, target half   (F, H)
W_OFF_W2 = 2 * _F                # edge_mlp layer-2                (H, H)
W_OFF_WN1 = 2 * _F + _H          # node_mlp layer-1 [h; agg]       (F+H, H)
W_OFF_WN2 = 3 * _F + 2 * _H      # node_mlp layer-2                (H, O)
B_OFF = 3 * _F + 3 * _H          # biases b1, b2, bn1, bn2         (4, H)
WB_ROWS = 3 * _F + 3 * _H + 4    # 196 rows total


def _default_num_blocks(n_graphs: int) -> int:
    """One grid step on single-TC chips (v5e/v6e); two on v7x (2 TCs/chip)."""
    try:
        kind = jax.devices()[0].device_kind.lower()
    except Exception:  # pragma: no cover - never fail just for a perf hint
        kind = ""
    blocks = 2 if ("v7" in kind or "7x" in kind) else 1
    if blocks > n_graphs or n_graphs % blocks != 0:
        blocks = 1
    return blocks


# ------------------------------- kernel ------------------------------------
def gcl_kernel(h_ref, rc_ref, wb_ref, hout_ref, mij_ref):
    f32 = jnp.float32
    hi = jax.lax.Precision.HIGHEST   # exact gather / scatter-add on every gen

    h = h_ref[...]                   # (BN, F) f32  -- G graphs stacked on rows
    rc = rc_ref[...]                 # (BE, 2) int32: [row, col + BN]
    BN, F = h.shape
    BE = rc.shape[0]
    H = HIDDEN_NF

    # --- static slices of the packed parameter buffer (no data movement) ----
    w1s = wb_ref[W_OFF_W1S:W_OFF_W1S + F, :]
    w1t = wb_ref[W_OFF_W1T:W_OFF_W1T + F, :]
    w2 = wb_ref[W_OFF_W2:W_OFF_W2 + H, :]
    wn1 = wb_ref[W_OFF_WN1:W_OFF_WN1 + F + H, :]     # merged [wn1h; wn1a]
    wn2 = wb_ref[W_OFF_WN2:W_OFF_WN2 + H, :]
    b1 = wb_ref[B_OFF + 0:B_OFF + 1, :]
    b2 = wb_ref[B_OFF + 1:B_OFF + 2, :]
    bn1 = wb_ref[B_OFF + 2:B_OFF + 3, :]
    bn2 = wb_ref[B_OFF + 3:B_OFF + 4, :]

    # --- project node features ONCE before gathering to edges ---------------
    # concat([h[row], h[col]]) @ W1  ==  (h @ W1_src)[row] + (h @ W1_tgt)[col]
    hs = jnp.dot(h, w1s, preferred_element_type=f32)           # (BN, H)
    ht = jnp.dot(h, w1t, preferred_element_type=f32)           # (BN, H)
    hst = jnp.concatenate([hs, ht], axis=0)                    # (2*BN, H)

    # --- combined (block-diagonal) gather one-hot: [oh_row | oh_col] --------
    # row in [0, BN), col pre-offset host-side into [BN, 2*BN): disjoint ranges.
    j = jax.lax.broadcasted_iota(jnp.int32, (BE, 2 * BN), 1)
    row = rc[:, 0:1]
    colp = rc[:, 1:2]
    oh = jnp.logical_or(j == row, j == colp).astype(f32)       # (BE, 2*BN)

    # --- edge MLP:  silu(Linear([src, tgt])) -> silu(Linear(.)) -------------
    pre1 = jnp.dot(oh, hst, preferred_element_type=f32, precision=hi) + b1
    hmid = jax.nn.silu(pre1)
    mij = jax.nn.silu(jnp.dot(hmid, w2, preferred_element_type=f32) + b2)
    mij_ref[...] = mij.astype(mij_ref.dtype)                   # (BE, H)

    # --- unsorted_segment_sum(mij, row): contract the E axis directly -------
    oh_row = oh[:, :BN]                                        # (BE, BN)
    agg = jax.lax.dot_general(
        oh_row, mij,
        dimension_numbers=(((0,), (0,)), ((), ())),
        preferred_element_type=f32,
        precision=hi) * (1.0 / NORMALIZATION_FACTOR)           # (BN, H)

    # --- node MLP on concat([h, agg]) + residual -----------------------------
    hagg = jnp.concatenate([h, agg], axis=-1)                  # (BN, F+H)
    hn = jax.nn.silu(jnp.dot(hagg, wn1, preferred_element_type=f32) + bn1)
    out = jnp.dot(hn, wn2, preferred_element_type=f32) + bn2
    hout_ref[...] = (h + out).astype(hout_ref.dtype)


# ------------------------------- wrapper ------------------------------------
@functools.partial(jax.jit, static_argnames=("num_blocks",))
def gcl_forward(h, row, col, wb_packed, *, num_blocks=1):
    """h: (B, N, F) f32, row/col: (B, E) int32, wb_packed: (WB_ROWS, H) f32."""
    B, N, F = h.shape
    E = row.shape[1]
    H, O = HIDDEN_NF, OUTPUT_NF
    G = B // num_blocks            # graphs fused per grid step
    BN, BE = G * N, G * E

    # Local node offsets inside each fused block; pre-shift col into the
    # "target" half [BN, 2*BN) of the combined one-hot.
    local = (jnp.arange(B, dtype=jnp.int32) % G)[:, None] * N          # (B, 1)
    row_l = row.astype(jnp.int32) + local
    col_l = col.astype(jnp.int32) + local + BN
    rc = jnp.stack([row_l, col_l], axis=-1).reshape(num_blocks, BE, 2)
    h_blk = h.reshape(num_blocks, BN, F)                               # free reshape

    # advisory cost estimate so XLA can overlap this small call with neighbours
    flops_blk = 2 * (2 * BN * F * H + BE * 2 * BN * H + BE * H * H
                     + BE * BN * H + BN * (F + H) * H + BN * H * O)
    transc_blk = 2 * BE * H + BN * H
    bytes_acc = 4 * (B * N * F + 2 * B * E + WB_ROWS * H
                     + B * N * O + B * E * H)
    cost = pl.CostEstimate(flops=int(num_blocks * flops_blk),
                           transcendentals=int(num_blocks * transc_blk),
                           bytes_accessed=int(bytes_acc))

    hout, mij = pl.pallas_call(
        gcl_kernel,
        out_shape=(
            jax.ShapeDtypeStruct((num_blocks, BN, O), jnp.float32),
            jax.ShapeDtypeStruct((num_blocks, BE, H), jnp.float32),
        ),
        grid=(num_blocks,),
        in_specs=[
            pl.BlockSpec((None, BN, F), lambda b: (b, 0, 0)),   # node features
            pl.BlockSpec((None, BE, 2), lambda b: (b, 0, 0)),   # packed row/col
            pl.BlockSpec((WB_ROWS, H), lambda b: (0, 0)),       # packed weights+biases
        ],
        out_specs=(
            pl.BlockSpec((None, BN, O), lambda b: (b, 0, 0)),
            pl.BlockSpec((None, BE, H), lambda b: (b, 0, 0)),
        ),
        compiler_params=pltpu.CompilerParams(
            dimension_semantics=("parallel",)),                 # shard blocks across TCs (v7x)
        cost_estimate=cost,
    )(h_blk, rc, wb_packed)

    return hout.reshape(B, N, O), mij.reshape(B, E, H)


# --------------------------- pure-JAX reference ------------------------------
def gcl_reference_single(h, row, col, params):
    src = h[row]
    tgt = h[col]
    pre1 = src @ params["w1s"] + tgt @ params["w1t"] + params["b1"]
    hmid = jax.nn.silu(pre1)
    mij = jax.nn.silu(hmid @ params["w2"] + params["b2"])
    agg = jnp.zeros((h.shape[0], HIDDEN_NF), jnp.float32).at[row].add(mij)
    agg = agg / NORMALIZATION_FACTOR
    pre_n = h @ params["wn1h"] + agg @ params["wn1a"] + params["bn1"]
    out = jax.nn.silu(pre_n) @ params["wn2"] + params["bn2"]
    return h + out, mij


def gcl_reference(h, row, col, params):
    return jax.vmap(lambda hh, rr, cc: gcl_reference_single(hh, rr, cc, params))(
        h, row, col)


# ------------------------------ param init -----------------------------------
def init_params(key):
    F, H, O = INPUT_NF, HIDDEN_NF, OUTPUT_NF
    ks = jax.random.split(key, 10)

    def lin(k, fan_in, shape):
        return (jax.random.uniform(k, shape, jnp.float32, -1.0, 1.0)
                / jnp.sqrt(jnp.float32(fan_in)))

    return {
        # edge_mlp layer 1: Linear(2F -> H), weight split into source/target halves
        "w1s": lin(ks[0], 2 * F, (F, H)),
        "w1t": lin(ks[1], 2 * F, (F, H)),
        "b1":  lin(ks[2], 2 * F, (1, H)),
        # edge_mlp layer 2: Linear(H -> H)
        "w2":  lin(ks[3], H, (H, H)),
        "b2":  lin(ks[4], H, (1, H)),
        # node_mlp layer 1: Linear(H + F -> H), split into h-part and agg-part
        "wn1h": lin(ks[5], H + F, (F, H)),
        "wn1a": lin(ks[6], H + F, (H, H)),
        "bn1":  lin(ks[7], H + F, (1, H)),
        # node_mlp layer 2: Linear(H -> O)
        "wn2": lin(ks[8], H, (H, O)),
        "bn2": lin(ks[9], H, (1, O)),
    }


def pack_params(params):
    """Pack the 6 weight matrices AND the 4 biases into ONE buffer (fewer DMAs)."""
    return jnp.concatenate(
        [params["w1s"], params["w1t"], params["w2"],
         params["wn1h"], params["wn1a"], params["wn2"],
         params["b1"], params["b2"], params["bn1"], params["bn2"]],
        axis=0)                                                # (WB_ROWS, H)


# --------------------------------- main ---------------------------------------
if __name__ == "__main__":
    key = jax.random.PRNGKey(0)
    k_h, k_row, k_col, k_p = jax.random.split(key, 4)

    B = N_GRAPHS
    h = jax.random.normal(k_h, (B, N_NODES, INPUT_NF), jnp.float32)
    row = jax.random.randint(k_row, (B, N_EDGES), 0, N_NODES, jnp.int32)
    col = jax.random.randint(k_col, (B, N_EDGES), 0, N_NODES, jnp.int32)
    params = init_params(k_p)
    wb_packed = pack_params(params)
    assert wb_packed.shape == (WB_ROWS, HIDDEN_NF)

    num_blocks = _default_num_blocks(B)
    h_out, mij = gcl_forward(h, row, col, wb_packed, num_blocks=num_blocks)
    h_out, mij = jax.block_until_ready((h_out, mij))

    h_ref, mij_ref = gcl_reference(h, row, col, params)
    assert jnp.allclose(h_out, h_ref, rtol=1e-4, atol=1e-4), "h mismatch"
    assert jnp.allclose(mij, mij_ref, rtol=1e-4, atol=1e-4), "mij mismatch"

    print("KERNEL_OK")
</pallas_src>

<mosaic_0001>
module attributes {stable_mosaic.version = 11 : i64} {
  func.func @gcl_kernel(%arg0: i32, %arg1: memref<1x64x32xf32, #tpu.memory_space<vmem>>, %arg2: memref<1x192x2xi32, #tpu.memory_space<vmem>>, %arg3: memref<196x32xf32, #tpu.memory_space<vmem>>, %arg4: memref<1x64x32xf32, #tpu.memory_space<vmem>>, %arg5: memref<1x192x32xf32, #tpu.memory_space<vmem>>) attributes {dimension_semantics = [#tpu.dimension_semantics<parallel>], iteration_bounds = array<i64: 1>, scalar_prefetch = 0 : i64, scratch_operands = 0 : i64, tpu.core_type = #tpu.core_type<tc>, window_params = [{transform_indices = @transform_0, window_bounds = array<i64: 1, 64, 32>}, {transform_indices = @transform_1, window_bounds = array<i64: 1, 192, 2>}, {pipeline_mode = #tpu.pipeline_mode<synchronous>, transform_indices = @transform_2, window_bounds = array<i64: 196, 32>}, {transform_indices = @transform_3, window_bounds = array<i64: 1, 64, 32>}, {transform_indices = @transform_4, window_bounds = array<i64: 1, 192, 32>}]} {
    %c0 = arith.constant 0 : index
    %c0_0 = arith.constant 0 : index
    %c0_1 = arith.constant 0 : index
    %0 = vector.load %arg1[%c0, %c0_0, %c0_1] : memref<1x64x32xf32, #tpu.memory_space<vmem>>, vector<1x64x32xf32>
    %1 = vector.shape_cast %0 : vector<1x64x32xf32> to vector<64x32xf32>
    %c0_2 = arith.constant 0 : index
    %c0_3 = arith.constant 0 : index
    %c0_4 = arith.constant 0 : index
    %2 = vector.load %arg2[%c0_2, %c0_3, %c0_4] : memref<1x192x2xi32, #tpu.memory_space<vmem>>, vector<1x192x2xi32>
    %3 = vector.shape_cast %2 : vector<1x192x2xi32> to vector<192x2xi32>
    %c0_5 = arith.constant 0 : index
    %c0_6 = arith.constant 0 : index
    %4 = vector.load %arg3[%c0_5, %c0_6] : memref<196x32xf32, #tpu.memory_space<vmem>>, vector<32x32xf32>
    %c32 = arith.constant 32 : index
    %c0_7 = arith.constant 0 : index
    %5 = vector.load %arg3[%c32, %c0_7] : memref<196x32xf32, #tpu.memory_space<vmem>>, vector<32x32xf32>
    %c64 = arith.constant 64 : index
    %c0_8 = arith.constant 0 : index
    %6 = vector.load %arg3[%c64, %c0_8] : memref<196x32xf32, #tpu.memory_space<vmem>>, vector<32x32xf32>
    %c96 = arith.constant 96 : index
    %c0_9 = arith.constant 0 : index
    %7 = vector.load %arg3[%c96, %c0_9] : memref<196x32xf32, #tpu.memory_space<vmem>>, vector<64x32xf32>
    %c160 = arith.constant 160 : index
    %c0_10 = arith.constant 0 : index
    %8 = vector.load %arg3[%c160, %c0_10] : memref<196x32xf32, #tpu.memory_space<vmem>>, vector<32x32xf32>
    %c192 = arith.constant 192 : index
    %c0_11 = arith.constant 0 : index
    %9 = vector.load %arg3[%c192, %c0_11] : memref<196x32xf32, #tpu.memory_space<vmem>>, vector<1x32xf32>
    %c193 = arith.constant 193 : index
    %c0_12 = arith.constant 0 : index
    %10 = vector.load %arg3[%c193, %c0_12] : memref<196x32xf32, #tpu.memory_space<vmem>>, vector<1x32xf32>
    %c194 = arith.constant 194 : index
    %c0_13 = arith.constant 0 : index
    %11 = vector.load %arg3[%c194, %c0_13] : memref<196x32xf32, #tpu.memory_space<vmem>>, vector<1x32xf32>
    %c195 = arith.constant 195 : index
    %c0_14 = arith.constant 0 : index
    %12 = vector.load %arg3[%c195, %c0_14] : memref<196x32xf32, #tpu.memory_space<vmem>>, vector<1x32xf32>
    %cst = arith.constant dense<0.000000e+00> : vector<64x32xf32>
    %13 = tpu.matmul %1, %4, %cst {dimension_numbers = #tpu.dot_dimension_numbers<[1], [0], [0], [1], [0, 0, 1, 1], [], []>} : vector<64x32xf32>, vector<32x32xf32>, vector<64x32xf32> -> vector<64x32xf32>
    %cst_15 = arith.constant dense<0.000000e+00> : vector<64x32xf32>
    %14 = tpu.matmul %1, %5, %cst_15 {dimension_numbers = #tpu.dot_dimension_numbers<[1], [0], [0], [1], [0, 0, 1, 1], [], []>} : vector<64x32xf32>, vector<32x32xf32>, vector<64x32xf32> -> vector<64x32xf32>
    %15 = tpu.concatenate %13, %14 in 0 : vector<64x32xf32>, vector<64x32xf32> -> vector<128x32xf32>
    %16 = tpu.iota {dimensions = array<i32: 1>} : vector<192x128xi32>
    %17 = vector.extract_strided_slice %3 {offsets = [0, 0], sizes = [192, 1], strides = [1, 1]} : vector<192x2xi32> to vector<192x1xi32>
    %18 = vector.extract_strided_slice %3 {offsets = [0, 1], sizes = [192, 1], strides = [1, 1]} : vector<192x2xi32> to vector<192x1xi32>
    %19 = vector.broadcast %17 : vector<192x1xi32> to vector<192x128xi32>
    %20 = arith.cmpi eq, %16, %19 : vector<192x128xi32>
    %21 = vector.broadcast %18 : vector<192x1xi32> to vector<192x128xi32>
    %22 = arith.cmpi eq, %16, %21 : vector<192x128xi32>
    %23 = arith.ori %20, %22 : vector<192x128xi1>
    %24 = arith.extui %23 : vector<192x128xi1> to vector<192x128xi32>
    %25 = arith.sitofp %24 : vector<192x128xi32> to vector<192x128xf32>
    %cst_16 = arith.constant dense<0.000000e+00> : vector<192x32xf32>
    %26 = tpu.matmul %25, %15, %cst_16 {dimension_numbers = #tpu.dot_dimension_numbers<[1], [0], [0], [1], [0, 0, 1, 1], [], []>, precision = #tpu.contract_precision<fp32>} : vector<192x128xf32>, vector<128x32xf32>, vector<192x32xf32> -> vector<192x32xf32>
    %27 = vector.broadcast %9 : vector<1x32xf32> to vector<192x32xf32>
    %28 = arith.addf %26, %27 : vector<192x32xf32>
    %29 = arith.negf %28 : vector<192x32xf32>
    %30 = math.exp %29 : vector<192x32xf32>
    %cst_17 = arith.constant 1.000000e+00 : f32
    %31 = vector.broadcast %cst_17 : f32 to vector<192x32xf32>
    %32 = arith.addf %31, %30 : vector<192x32xf32>
    %33 = arith.divf %31, %32 : vector<192x32xf32>
    %34 = arith.mulf %28, %33 : vector<192x32xf32>
    %cst_18 = arith.constant dense<0.000000e+00> : vector<192x32xf32>
    %35 = tpu.matmul %34, %6, %cst_18 {dimension_numbers = #tpu.dot_dimension_numbers<[1], [0], [0], [1], [0, 0, 1, 1], [], []>} : vector<192x32xf32>, vector<32x32xf32>, vector<192x32xf32> -> vector<192x32xf32>
    %36 = vector.broadcast %10 : vector<1x32xf32> to vector<192x32xf32>
    %37 = arith.addf %35, %36 : vector<192x32xf32>
    %38 = arith.negf %37 : vector<192x32xf32>
    %39 = math.exp %38 : vector<192x32xf32>
    %cst_19 = arith.constant 1.000000e+00 : f32
    %40 = vector.broadcast %cst_19 : f32 to vector<192x32xf32>
    %41 = arith.addf %40, %39 : vector<192x32xf32>
    %42 = arith.divf %40, %41 : vector<192x32xf32>
    %43 = arith.mulf %37, %42 : vector<192x32xf32>
    %c0_20 = arith.constant 0 : index
    %c0_21 = arith.constant 0 : index
    %c0_22 = arith.constant 0 : index
    %44 = vector.load %arg5[%c0_20, %c0_21, %c0_22] : memref<1x192x32xf32, #tpu.memory_space<vmem>>, vector<1x192x32xf32>
    %45 = vector.shape_cast %44 : vector<1x192x32xf32> to vector<192x32xf32>
    %46 = vector.shape_cast %43 : vector<192x32xf32> to vector<1x192x32xf32>
    tpu.vector_store %arg5[%c0_20, %c0_21, %c0_22], %46 {strides = array<i32>} : memref<1x192x32xf32, #tpu.memory_space<vmem>>, vector<1x192x32xf32>,
    %47 = vector.extract_strided_slice %25 {offsets = [0, 0], sizes = [192, 64], strides = [1, 1]} : vector<192x128xf32> to vector<192x64xf32>
    %cst_23 = arith.constant dense<0.000000e+00> : vector<64x32xf32>
    %48 = tpu.matmul %47, %43, %cst_23 {dimension_numbers = #tpu.dot_dimension_numbers<[0], [0], [1], [1], [0, 1, 1, 1], [], []>, precision = #tpu.contract_precision<fp32>} : vector<192x64xf32>, vector<192x32xf32>, vector<64x32xf32> -> vector<64x32xf32>
    %cst_24 = arith.constant 2.500000e-01 : f32
    %49 = vector.broadcast %cst_24 : f32 to vector<64x32xf32>
    %50 = arith.mulf %48, %49 : vector<64x32xf32>
    %51 = tpu.concatenate %1, %50 in 1 : vector<64x32xf32>, vector<64x32xf32> -> vector<64x64xf32>
    %cst_25 = arith.constant dense<0.000000e+00> : vector<64x32xf32>
    %52 = tpu.matmul %51, %7, %cst_25 {dimension_numbers = #tpu.dot_dimension_numbers<[1], [0], [0], [1], [0, 0, 1, 1], [], []>} : vector<64x64xf32>, vector<64x32xf32>, vector<64x32xf32> -> vector<64x32xf32>
    %53 = vector.broadcast %11 : vector<1x32xf32> to vector<64x32xf32>
    %54 = arith.addf %52, %53 : vector<64x32xf32>
    %55 = arith.negf %54 : vector<64x32xf32>
    %56 = math.exp %55 : vector<64x32xf32>
    %cst_26 = arith.constant 1.000000e+00 : f32
    %57 = vector.broadcast %cst_26 : f32 to vector<64x32xf32>
    %58 = arith.addf %57, %56 : vector<64x32xf32>
    %59 = arith.divf %57, %58 : vector<64x32xf32>
    %60 = arith.mulf %54, %59 : vector<64x32xf32>
    %cst_27 = arith.constant dense<0.000000e+00> : vector<64x32xf32>
    %61 = tpu.matmul %60, %8, %cst_27 {dimension_numbers = #tpu.dot_dimension_numbers<[1], [0], [0], [1], [0, 0, 1, 1], [], []>} : vector<64x32xf32>, vector<32x32xf32>, vector<64x32xf32> -> vector<64x32xf32>
    %62 = vector.broadcast %12 : vector<1x32xf32> to vector<64x32xf32>
    %63 = arith.addf %61, %62 : vector<64x32xf32>
    %64 = arith.addf %1, %63 : vector<64x32xf32>
    %c0_28 = arith.constant 0 : index
    %c0_29 = arith.constant 0 : index
    %c0_30 = arith.constant 0 : index
    %65 = vector.load %arg4[%c0_28, %c0_29, %c0_30] : memref<1x64x32xf32, #tpu.memory_space<vmem>>, vector<1x64x32xf32>
    %66 = vector.shape_cast %65 : vector<1x64x32xf32> to vector<64x32xf32>
    %67 = vector.shape_cast %64 : vector<64x32xf32> to vector<1x64x32xf32>
    tpu.vector_store %arg4[%c0_28, %c0_29, %c0_30], %67 {strides = array<i32>} : memref<1x64x32xf32, #tpu.memory_space<vmem>>, vector<1x64x32xf32>,
    return
  }
  func.func @transform_0(%arg0: i32) -> (i32, i32, i32) {
    %c0_i32 = arith.constant 0 : i32
    %c0_i32_0 = arith.constant 0 : i32
    %c0_i32_1 = arith.constant 0 : i32
    return %arg0, %c0_i32, %c0_i32_0 : i32, i32, i32
  }
  func.func @transform_1(%arg0: i32) -> (i32, i32, i32) {
    %c0_i32 = arith.constant 0 : i32
    %c0_i32_0 = arith.constant 0 : i32
    %c0_i32_1 = arith.constant 0 : i32
    return %arg0, %c0_i32, %c0_i32_0 : i32, i32, i32
  }
  func.func @transform_2(%arg0: i32) -> (i32, i32) {
    %c0_i32 = arith.constant 0 : i32
    %c0_i32_0 = arith.constant 0 : i32
    %c0_i32_1 = arith.constant 0 : i32
    return %c0_i32, %c0_i32_0 : i32, i32
  }
  func.func @transform_3(%arg0: i32) -> (i32, i32, i32) {
    %c0_i32 = arith.constant 0 : i32
    %c0_i32_0 = arith.constant 0 : i32
    %c0_i32_1 = arith.constant 0 : i32
    return %arg0, %c0_i32, %c0_i32_0 : i32, i32, i32
  }
  func.func @transform_4(%arg0: i32) -> (i32, i32, i32) {
    %c0_i32 = arith.constant 0 : i32
    %c0_i32_0 = arith.constant 0 : i32
    %c0_i32_1 = arith.constant 0 : i32
    return %arg0, %c0_i32, %c0_i32_0 : i32, i32, i32
  }
}

</mosaic_0001>

<llo_original>
// kernel: gcl_forward.1
$region0: #{gcl_forward.1}
  #allocation0 [shape = 'u32[]', space=smem, size = 0x4, offset = 0x4, fixed_abs, tag = 'smem constant byte address 0x4 - core index']
  #allocation1 [shape = 'u32[72,128]{1,0:T(1,128)}', space=vmem, size = 0x9000, scoped, tag = 'internal scratch']
  %s0 = inlined_call_operand.vmem [shape: f32[1,64,32], index: 0, kind: input, shape index: {}]
  %s1 = inlined_call_operand.vmem [shape: s32[1,192,2], index: 1, kind: input, shape index: {}]
  %s2 = inlined_call_operand.vmem [shape: f32[196,32], index: 2, kind: input, shape index: {}]
  %s3 = inlined_call_operand.hbm [shape: f32[1,64,32], index: 3, kind: output, shape index: {0}]
  %s4 = inlined_call_operand.vmem [shape: f32[1,192,32], index: 4, kind: output, shape index: {1}]
  %5 = xla_tuple %s3, %s4
  %s6 = sld [smem:[#allocation0]]
  $region30: #{gcl_forward.1} parent=0
    _
  %s8 = ssub.s32 1, %s6
  %s9 = scalar_select 0, %s8, %s6
  $region1: #{gcl_forward.1} parent=0
    #allocation2 [shape = 'u8[32768]{0}', space=vmem, size = 0x8000, scoped, tag = 'output window, operand 0, single buffered']
    #allocation3 [shape = 's32[1]{0}', space=sflag, size = 0x4, scoped, tag = 'scoped memory for gcl_forward.1']
    %10 = vsyncpa [#allocation3], 0
    // Predicated region
    $region2: #{gcl_forward.1} parent=1 // pred_check
      _
    $region3: #{gcl_forward.1} parent=1 // pred_check_branch
      %12 = sbr.rel (0) target = $region5
    $region4: #{gcl_forward.1} parent=1 // pred_region
      _
    $region5: #{gcl_forward.1} parent=1 // pred_fallthru
      _
    // Predicated region
    $region6: #{gcl_forward.1} parent=1 // pred_check
      _
    $region7: #{gcl_forward.1} parent=1 // pred_check_branch
      %14 = sbr.rel (0) target = $region9
    $region8: #{gcl_forward.1} parent=1 // pred_region
      _
    $region9: #{gcl_forward.1} parent=1 // pred_fallthru
      _
    // Predicated region
    $region10: #{gcl_forward.1} parent=1 // pred_check
      _
    $region11: #{gcl_forward.1} parent=1 // pred_check_branch
      %16 = sbr.rel (0) target = $region13
    $region12: #{gcl_forward.1} parent=1 // pred_region
      _
    $region13: #{gcl_forward.1} parent=1 // pred_fallthru
      _
    %v17 = vld [vmem:[%s0] sm:$0xff]
    %v18 = vld [vmem:[%s0 + $0x8] sm:$0xff]
    %v19 = vld [vmem:[%s0 + $0x10] sm:$0xff]
    %v20 = vld [vmem:[%s0 + $0x18] sm:$0xff]
    %v21 = vld [vmem:[%s0 + $0x20] sm:$0xff]
    %v22 = vld [vmem:[%s0 + $0x28] sm:$0xff]
    %v23 = vld [vmem:[%s0 + $0x30] sm:$0xff]
    %v24 = vld [vmem:[%s0 + $0x38] sm:$0xff]
    %v25 = vld [vmem:[%s1] sm:$0xff]
    %v26 = vld [vmem:[%s1 + $0x8] sm:$0xff]
    %v27 = vld [vmem:[%s1 + $0x10] sm:$0xff]
    %v28 = vld [vmem:[%s1 + $0x18] sm:$0xff]
    %v29 = vld [vmem:[%s1 + $0x20] sm:$0xff]
    %v30 = vld [vmem:[%s1 + $0x28] sm:$0xff]
    %v31 = vld [vmem:[%s1 + $0x30] sm:$0xff]
    %v32 = vld [vmem:[%s1 + $0x38] sm:$0xff]
    %v33 = vld [vmem:[%s1 + $0x40] sm:$0xff]
    %v34 = vld [vmem:[%s1 + $0x48] sm:$0xff]
    %v35 = vld [vmem:[%s1 + $0x50] sm:$0xff]
    %v36 = vld [vmem:[%s1 + $0x58] sm:$0xff]
    %v37 = vld [vmem:[%s1 + $0x60] sm:$0xff]
    %v38 = vld [vmem:[%s1 + $0x68] sm:$0xff]
    %v39 = vld [vmem:[%s1 + $0x70] sm:$0xff]
    %v40 = vld [vmem:[%s1 + $0x78] sm:$0xff]
    %v41 = vld [vmem:[%s1 + $0x80] sm:$0xff]
    %v42 = vld [vmem:[%s1 + $0x88] sm:$0xff]
    %v43 = vld [vmem:[%s1 + $0x90] sm:$0xff]
    %v44 = vld [vmem:[%s1 + $0x98] sm:$0xff]
    %v45 = vld [vmem:[%s1 + $0xa0] sm:$0xff]
    %v46 = vld [vmem:[%s1 + $0xa8] sm:$0xff]
    %v47 = vld [vmem:[%s1 + $0xb0] sm:$0xff]
    %v48 = vld [vmem:[%s1 + $0xb8] sm:$0xff]
    %v49 = vld [vmem:[%s2] sm:$0xff]
    %v50 = vld [vmem:[%s2 + $0x8] sm:$0xff]
    %v51 = vld [vmem:[%s2 + $0x10] sm:$0xff]
    %v52 = vld [vmem:[%s2 + $0x18] sm:$0xff]
    %v53 = vld [vmem:[%s2 + $0x20] sm:$0xff]
    %v54 = vld [vmem:[%s2 + $0x28] sm:$0xff]
    %v55 = vld [vmem:[%s2 + $0x30] sm:$0xff]
    %v56 = vld [vmem:[%s2 + $0x38] sm:$0xff]
    %v57 = vld [vmem:[%s2 + $0x40] sm:$0xff]
    %v58 = vld [vmem:[%s2 + $0x48] sm:$0xff]
    %v59 = vld [vmem:[%s2 + $0x50] sm:$0xff]
    %v60 = vld [vmem:[%s2 + $0x58] sm:$0xff]
    %v61 = vld [vmem:[%s2 + $0x60] sm:$0xff]
    %v62 = vld [vmem:[%s2 + $0x68] sm:$0xff]
    %v63 = vld [vmem:[%s2 + $0x70] sm:$0xff]
    %v64 = vld [vmem:[%s2 + $0x78] sm:$0xff]
    %v65 = vld [vmem:[%s2 + $0x80] sm:$0xff]
    %v66 = vld [vmem:[%s2 + $0x88] sm:$0xff]
    %v67 = vld [vmem:[%s2 + $0x90] sm:$0xff]
    %v68 = vld [vmem:[%s2 + $0x98] sm:$0xff]
    %v69 = vld [vmem:[%s2 + $0xa0] sm:$0xff]
    %v70 = vld [vmem:[%s2 + $0xa8] sm:$0xff]
    %v71 = vld [vmem:[%s2 + $0xb0] sm:$0xff]
    %v72 = vld [vmem:[%s2 + $0xb8] sm:$0xff]
    %v73 = vld [vmem:[%s2 + $0xc0] sm:$0x1]
    %v74 = vld [vmem:[%s2 + $0xc1] sm:$0x1]
    %v75 = vld [vmem:[%s2 + $0xc2] sm:$0x1]
    %v76 = vld [vmem:[%s2 + $0xc3] sm:$0x1]
    %vm77 = vcmask 261120
    %v79 = vsel %vm77, %v17, 0
    %v82 = vsel %vm77, %v18, 0
    %v85 = vsel %vm77, %v19, 0
    %v88 = vsel %vm77, %v20, 0
    %v91 = vsel %vm77, %v21, 0
    %v94 = vsel %vm77, %v22, 0
    %v97 = vsel %vm77, %v23, 0
    %v100 = vsel %vm77, %v24, 0
    %102 = vmatpush.msra.mxu0 0.0
    %103 = vmatpush.msra.mxu0 0.0
    %104 = vmatpush.msra.mxu0 0.0
    %105 = vmatpush.msra.mxu0 0.0
    %106 = vmatpush.msra.mxu0 0.0
    %107 = vmatpush.msra.mxu0 0.0
    %108 = vmatpush.msra.mxu0 0.0
    %109 = vmatpush.msra.mxu0 0.0
    %110 = vmatpush.msra.mxu0 0.0
    %111 = vmatpush.msra.mxu0 0.0
    %112 = vmatpush.msra.mxu0 0.0
    %113 = vmatpush.msra.mxu0 0.0
    %114 = vmatpush.msra.mxu0 %v52
    %115 = vmatpush.msra.mxu0 %v51
    %116 = vmatpush.msra.mxu0 %v50
    %117 = vmatpush.msra.mxu0 %v49
    %118 = vmatmul.f32.gmra.mxu0 %v79
    %v119 = vpop.f32.mrf.mxu0
    %v120 = vadd.f32 0.0, %v119
    %121 = vmatmul.f32.gmra.mxu0 %v82
    %v122 = vpop.f32.mrf.mxu0
    %v123 = vadd.f32 0.0, %v122
    %124 = vmatmul.f32.gmra.mxu0 %v85
    %v125 = vpop.f32.mrf.mxu0
    %v126 = vadd.f32 0.0, %v125
    %127 = vmatmul.f32.gmra.mxu0 %v88
    %v128 = vpop.f32.mrf.mxu0
    %v129 = vadd.f32 0.0, %v128
    %130 = vmatmul.f32.gmra.mxu0 %v91
    %v131 = vpop.f32.mrf.mxu0
    %v132 = vadd.f32 0.0, %v131
    %133 = vmatmul.f32.gmra.mxu0 %v94
    %v134 = vpop.f32.mrf.mxu0
    %v135 = vadd.f32 0.0, %v134
    %136 = vmatmul.f32.gmra.mxu0 %v97
    %v137 = vpop.f32.mrf.mxu0
    %v138 = vadd.f32 0.0, %v137
    %139 = vmatmul.f32.gmra.mxu0 %v100
    %v140 = vpop.f32.mrf.mxu0
    %v141 = vadd.f32 0.0, %v140
    %142 = vdwg.mxu0
    %143 = vmatpush.msra.mxu0 0.0
    %144 = vmatpush.msra.mxu0 0.0
    %145 = vmatpush.msra.mxu0 0.0
    %146 = vmatpush.msra.mxu0 0.0
    %147 = vmatpush.msra.mxu0 0.0
    %148 = vmatpush.msra.mxu0 0.0
    %149 = vmatpush.msra.mxu0 0.0
    %150 = vmatpush.msra.mxu0 0.0
    %151 = vmatpush.msra.mxu0 0.0
    %152 = vmatpush.msra.mxu0 0.0
    %153 = vmatpush.msra.mxu0 0.0
    %154 = vmatpush.msra.mxu0 0.0
    %155 = vmatpush.msra.mxu0 %v56
    %156 = vmatpush.msra.mxu0 %v55
    %157 = vmatpush.msra.mxu0 %v54
    %158 = vmatpush.msra.mxu0 %v53
    %159 = vmatmul.f32.gmra.mxu0 %v79
    %v160 = vpop.f32.mrf.mxu0
    %v161 = vadd.f32 0.0, %v160
    %162 = vmatmul.f32.gmra.mxu0 %v82
    %v163 = vpop.f32.mrf.mxu0
    %v164 = vadd.f32 0.0, %v163
    %165 = vmatmul.f32.gmra.mxu0 %v85
    %v166 = vpop.f32.mrf.mxu0
    %v167 = vadd.f32 0.0, %v166
    %168 = vmatmul.f32.gmra.mxu0 %v88
    %v169 = vpop.f32.mrf.mxu0
    %v170 = vadd.f32 0.0, %v169
    %171 = vmatmul.f32.gmra.mxu0 %v91
    %v172 = vpop.f32.mrf.mxu0
    %v173 = vadd.f32 0.0, %v172
    %174 = vmatmul.f32.gmra.mxu0 %v94
    %v175 = vpop.f32.mrf.mxu0
    %v176 = vadd.f32 0.0, %v175
    %177 = vmatmul.f32.gmra.mxu0 %v97
    %v178 = vpop.f32.mrf.mxu0
    %v179 = vadd.f32 0.0, %v178
    %180 = vmatmul.f32.gmra.mxu0 %v100
    %v181 = vpop.f32.mrf.mxu0
    %v182 = vadd.f32 0.0, %v181
    %183 = vdwg.mxu0
    %v184 = vlaneseq
    %v185 = vand.u32 %v184, 127
    %186 = vset.pattern.permute.xlu0 0
    %187 = vperm.xlu0 %186, %v25
    %v188 = vpop.permute.xlu0 %187
    %189 = vset.pattern.permute.xlu0 0
    %190 = vperm.xlu0 %189, %v26
    %v191 = vpop.permute.xlu0 %190
    %192 = vset.pattern.permute.xlu0 0
    %193 = vperm.xlu0 %192, %v27
    %v194 = vpop.permute.xlu0 %193
    %195 = vset.pattern.permute.xlu0 0
    %196 = vperm.xlu0 %195, %v28
    %v197 = vpop.permute.xlu0 %196
    %198 = vset.pattern.permute.xlu0 0
    %199 = vperm.xlu0 %198, %v29
    %v200 = vpop.permute.xlu0 %199
    %201 = vset.pattern.permute.xlu0 0
    %202 = vperm.xlu0 %201, %v30
    %v203 = vpop.permute.xlu0 %202
    %204 = vset.pattern.permute.xlu0 0
    %205 = vperm.xlu0 %204, %v31
    %v206 = vpop.permute.xlu0 %205
    %207 = vset.pattern.permute.xlu0 0
    %208 = vperm.xlu0 %207, %v32
    %v209 = vpop.permute.xlu0 %208
    %210 = vset.pattern.permute.xlu0 0
    %211 = vperm.xlu0 %210, %v33
    %v212 = vpop.permute.xlu0 %211
    %213 = vset.pattern.permute.xlu0 0
    %214 = vperm.xlu0 %213, %v34
    %v215 = vpop.permute.xlu0 %214
    %216 = vset.pattern.permute.xlu0 0
    %217 = vperm.xlu0 %216, %v35
    %v218 = vpop.permute.xlu0 %217
    %219 = vset.pattern.permute.xlu0 0
    %220 = vperm.xlu0 %219, %v36
    %v221 = vpop.permute.xlu0 %220
    %222 = vset.pattern.permute.xlu0 0
    %223 = vperm.xlu0 %222, %v37
    %v224 = vpop.permute.xlu0 %223
    %225 = vset.pattern.permute.xlu0 0
    %226 = vperm.xlu0 %225, %v38
    %v227 = vpop.permute.xlu0 %226
    %228 = vset.pattern.permute.xlu0 0
    %229 = vperm.xlu0 %228, %v39
    %v230 = vpop.permute.xlu0 %229
    %231 = vset.pattern.permute.xlu0 0
    %232 = vperm.xlu0 %231, %v40
    %v233 = vpop.permute.xlu0 %232
    %234 = vset.pattern.permute.xlu0 0
    %235 = vperm.xlu0 %234, %v41
    %v236 = vpop.permute.xlu0 %235
    %237 = vset.pattern.permute.xlu0 0
    %238 = vperm.xlu0 %237, %v42
    %v239 = vpop.permute.xlu0 %238
    %240 = vset.pattern.permute.xlu0 0
    %241 = vperm.xlu0 %240, %v43
    %v242 = vpop.permute.xlu0 %241
    %243 = vset.pattern.permute.xlu0 0
    %244 = vperm.xlu0 %243, %v44
    %v245 = vpop.permute.xlu0 %244
    %246 = vset.pattern.permute.xlu0 0
    %247 = vperm.xlu0 %246, %v45
    %v248 = vpop.permute.xlu0 %247
    %249 = vset.pattern.permute.xlu0 0
    %250 = vperm.xlu0 %249, %v46
    %v251 = vpop.permute.xlu0 %250
    %252 = vset.pattern.permute.xlu0 0
    %253 = vperm.xlu0 %252, %v47
    %v254 = vpop.permute.xlu0 %253
    %255 = vset.pattern.permute.xlu0 0
    %256 = vperm.xlu0 %255, %v48
    %v257 = vpop.permute.xlu0 %256
    %vm258 = vcmp.eq.s32.totalorder %v185, %v188
    %vm259 = vcmp.eq.s32.totalorder %v185, %v191
    %vm260 = vcmp.eq.s32.totalorder %v185, %v194
    %vm261 = vcmp.eq.s32.totalorder %v185, %v197
    %vm262 = vcmp.eq.s32.totalorder %v185, %v200
    %vm263 = vcmp.eq.s32.totalorder %v185, %v203
    %vm264 = vcmp.eq.s32.totalorder %v185, %v206
    %vm265 = vcmp.eq.s32.totalorder %v185, %v209
    %vm266 = vcmp.eq.s32.totalorder %v185, %v212
    %vm267 = vcmp.eq.s32.totalorder %v185, %v215
    %vm268 = vcmp.eq.s32.totalorder %v185, %v218
    %vm269 = vcmp.eq.s32.totalorder %v185, %v221
    %vm270 = vcmp.eq.s32.totalorder %v185, %v224
    %vm271 = vcmp.eq.s32.totalorder %v185, %v227
    %vm272 = vcmp.eq.s32.totalorder %v185, %v230
    %vm273 = vcmp.eq.s32.totalorder %v185, %v233
    %vm274 = vcmp.eq.s32.totalorder %v185, %v236
    %vm275 = vcmp.eq.s32.totalorder %v185, %v239
    %vm276 = vcmp.eq.s32.totalorder %v185, %v242
    %vm277 = vcmp.eq.s32.totalorder %v185, %v245
    %vm278 = vcmp.eq.s32.totalorder %v185, %v248
    %vm279 = vcmp.eq.s32.totalorder %v185, %v251
    %vm280 = vcmp.eq.s32.totalorder %v185, %v254
    %vm281 = vcmp.eq.s32.totalorder %v185, %v257
    %282 = vset.pattern.permute.xlu0 1
    %283 = vperm.xlu0 %282, %v25
    %v284 = vpop.permute.xlu0 %283
    %285 = vset.pattern.permute.xlu0 1
    %286 = vperm.xlu0 %285, %v26
    %v287 = vpop.permute.xlu0 %286
    %288 = vset.pattern.permute.xlu0 1
    %289 = vperm.xlu0 %288, %v27
    %v290 = vpop.permute.xlu0 %289
    %291 = vset.pattern.permute.xlu0 1
    %292 = vperm.xlu0 %291, %v28
    %v293 = vpop.permute.xlu0 %292
    %294 = vset.pattern.permute.xlu0 1
    %295 = vperm.xlu0 %294, %v29
    %v296 = vpop.permute.xlu0 %295
    %297 = vset.pattern.permute.xlu0 1
    %298 = vperm.xlu0 %297, %v30
    %v299 = vpop.permute.xlu0 %298
    %300 = vset.pattern.permute.xlu0 1
    %301 = vperm.xlu0 %300, %v31
    %v302 = vpop.permute.xlu0 %301
    %303 = vset.pattern.permute.xlu0 1
    %304 = vperm.xlu0 %303, %v32
    %v305 = vpop.permute.xlu0 %304
    %306 = vset.pattern.permute.xlu0 1
    %307 = vperm.xlu0 %306, %v33
    %v308 = vpop.permute.xlu0 %307
    %309 = vset.pattern.permute.xlu0 1
    %310 = vperm.xlu0 %309, %v34
    %v311 = vpop.permute.xlu0 %310
    %312 = vset.pattern.permute.xlu0 1
    %313 = vperm.xlu0 %312, %v35
    %v314 = vpop.permute.xlu0 %313
    %315 = vset.pattern.permute.xlu0 1
    %316 = vperm.xlu0 %315, %v36
    %v317 = vpop.permute.xlu0 %316
    %318 = vset.pattern.permute.xlu0 1
    %319 = vperm.xlu0 %318, %v37
    %v320 = vpop.permute.xlu0 %319
    %321 = vset.pattern.permute.xlu0 1
    %322 = vperm.xlu0 %321, %v38
    %v323 = vpop.permute.xlu0 %322
    %324 = vset.pattern.permute.xlu0 1
    %325 = vperm.xlu0 %324, %v39
    %v326 = vpop.permute.xlu0 %325
    %327 = vset.pattern.permute.xlu0 1
    %328 = vperm.xlu0 %327, %v40
    %v329 = vpop.permute.xlu0 %328
    %330 = vset.pattern.permute.xlu0 1
    %331 = vperm.xlu0 %330, %v41
    %v332 = vpop.permute.xlu0 %331
    %333 = vset.pattern.permute.xlu0 1
    %334 = vperm.xlu0 %333, %v42
    %v335 = vpop.permute.xlu0 %334
    %336 = vset.pattern.permute.xlu0 1
    %337 = vperm.xlu0 %336, %v43
    %v338 = vpop.permute.xlu0 %337
    %339 = vset.pattern.permute.xlu0 1
    %340 = vperm.xlu0 %339, %v44
    %v341 = vpop.permute.xlu0 %340
    %342 = vset.pattern.permute.xlu0 1
    %343 = vperm.xlu0 %342, %v45
    %v344 = vpop.permute.xlu0 %343
    %345 = vset.pattern.permute.xlu0 1
    %346 = vperm.xlu0 %345, %v46
    %v347 = vpop.permute.xlu0 %346
    %348 = vset.pattern.permute.xlu0 1
    %349 = vperm.xlu0 %348, %v47
    %v350 = vpop.permute.xlu0 %349
    %351 = vset.pattern.permute.xlu0 1
    %352 = vperm.xlu0 %351, %v48
    %v353 = vpop.permute.xlu0 %352
    %vm354 = vcmp.eq.s32.totalorder %v185, %v284
    %vm355 = vcmp.eq.s32.totalorder %v185, %v287
    %vm356 = vcmp.eq.s32.totalorder %v185, %v290
    %vm357 = vcmp.eq.s32.totalorder %v185, %v293
    %vm358 = vcmp.eq.s32.totalorder %v185, %v296
    %vm359 = vcmp.eq.s32.totalorder %v185, %v299
    %vm360 = vcmp.eq.s32.totalorder %v185, %v302
    %vm361 = vcmp.eq.s32.totalorder %v185, %v305
    %vm362 = vcmp.eq.s32.totalorder %v185, %v308
    %vm363 = vcmp.eq.s32.totalorder %v185, %v311
    %vm364 = vcmp.eq.s32.totalorder %v185, %v314
    %vm365 = vcmp.eq.s32.totalorder %v185, %v317
    %vm366 = vcmp.eq.s32.totalorder %v185, %v320
    %vm367 = vcmp.eq.s32.totalorder %v185, %v323
    %vm368 = vcmp.eq.s32.totalorder %v185, %v326
    %vm369 = vcmp.eq.s32.totalorder %v185, %v329
    %vm370 = vcmp.eq.s32.totalorder %v185, %v332
    %vm371 = vcmp.eq.s32.totalorder %v185, %v335
    %vm372 = vcmp.eq.s32.totalorder %v185, %v338
    %vm373 = vcmp.eq.s32.totalorder %v185, %v341
    %vm374 = vcmp.eq.s32.totalorder %v185, %v344
    %vm375 = vcmp.eq.s32.totalorder %v185, %v347
    %vm376 = vcmp.eq.s32.totalorder %v185, %v350
    %vm377 = vcmp.eq.s32.totalorder %v185, %v353
    %vm378 = vmor %vm258, %vm354
    %vm379 = vmor %vm259, %vm355
    %vm380 = vmor %vm260, %vm356
    %vm381 = vmor %vm261, %vm357
    %vm382 = vmor %vm262, %vm358
    %vm383 = vmor %vm263, %vm359
    %vm384 = vmor %vm264, %vm360
    %vm385 = vmor %vm265, %vm361
    %vm386 = vmor %vm266, %vm362
    %vm387 = vmor %vm267, %vm363
    %vm388 = vmor %vm268, %vm364
    %vm389 = vmor %vm269, %vm365
    %vm390 = vmor %vm270, %vm366
    %vm391 = vmor %vm271, %vm367
    %vm392 = vmor %vm272, %vm368
    %vm393 = vmor %vm273, %vm369
    %vm394 = vmor %vm274, %vm370
    %vm395 = vmor %vm275, %vm371
    %vm396 = vmor %vm276, %vm372
    %vm397 = vmor %vm277, %vm373
    %vm398 = vmor %vm278, %vm374
    %vm399 = vmor %vm279, %vm375
    %vm400 = vmor %vm280, %vm376
    %vm401 = vmor %vm281, %vm377
    %v402 = vsel %vm378, 1, 0
    %v403 = vsel %vm379, 1, 0
    %v404 = vsel %vm380, 1, 0
    %v405 = vsel %vm381, 1, 0
    %v406 = vsel %vm382, 1, 0
    %v407 = vsel %vm383, 1, 0
    %v408 = vsel %vm384, 1, 0
    %v409 = vsel %vm385, 1, 0
    %v410 = vsel %vm386, 1, 0
    %v411 = vsel %vm387, 1, 0
    %v412 = vsel %vm388, 1, 0
    %v413 = vsel %vm389, 1, 0
    %v414 = vsel %vm390, 1, 0
    %v415 = vsel %vm391, 1, 0
    %v416 = vsel %vm392, 1, 0
    %v417 = vsel %vm393, 1, 0
    %v418 = vsel %vm394, 1, 0
    %v419 = vsel %vm395, 1, 0
    %v420 = vsel %vm396, 1, 0
    %v421 = vsel %vm397, 1, 0
    %v422 = vsel %vm398, 1, 0
    %v423 = vsel %vm399, 1, 0
    %v424 = vsel %vm400, 1, 0
    %v425 = vsel %vm401, 1, 0
    %v426 = vcvt.s32.f32 %v402
    %v427 = vcvt.s32.f32 %v403
    %v428 = vcvt.s32.f32 %v404
    %v429 = vcvt.s32.f32 %v405
    %v430 = vcvt.s32.f32 %v406
    %v431 = vcvt.s32.f32 %v407
    %v432 = vcvt.s32.f32 %v408
    %v433 = vcvt.s32.f32 %v409
    %v434 = vcvt.s32.f32 %v410
    %v435 = vcvt.s32.f32 %v411
    %v436 = vcvt.s32.f32 %v412
    %v437 = vcvt.s32.f32 %v413
    %v438 = vcvt.s32.f32 %v414
    %v439 = vcvt.s32.f32 %v415
    %v440 = vcvt.s32.f32 %v416
    %v441 = vcvt.s32.f32 %v417
    %v442 = vcvt.s32.f32 %v418
    %v443 = vcvt.s32.f32 %v419
    %v444 = vcvt.s32.f32 %v420
    %v445 = vcvt.s32.f32 %v421
    %v446 = vcvt.s32.f32 %v422
    %v447 = vcvt.s32.f32 %v423
    %v448 = vcvt.s32.f32 %v424
    %v449 = vcvt.s32.f32 %v425
    %v450 = vperm.slane %v73, 0
    %v451 = vand.u32 %v182, 4294901760
    %452 = vmatpush.msra.mxu0 %v451
    %v453 = vand.u32 %v179, 4294901760
    %454 = vmatpush.msra.mxu0 %v453
    %v455 = vand.u32 %v176, 4294901760
    %456 = vmatpush.msra.mxu0 %v455
    %v457 = vand.u32 %v173, 4294901760
    %458 = vmatpush.msra.mxu0 %v457
    %v459 = vand.u32 %v170, 4294901760
    %460 = vmatpush.msra.mxu0 %v459
    %v461 = vand.u32 %v167, 4294901760
    %462 = vmatpush.msra.mxu0 %v461
    %v463 = vand.u32 %v164, 4294901760
    %464 = vmatpush.msra.mxu0 %v463
    %v465 = vand.u32 %v161, 4294901760
    %466 = vmatpush.msra.mxu0 %v465
    %v467 = vand.u32 %v141, 4294901760
    %468 = vmatpush.msra.mxu0 %v467
    %v469 = vand.u32 %v138, 4294901760
    %470 = vmatpush.msra.mxu0 %v469
    %v471 = vand.u32 %v135, 4294901760
    %472 = vmatpush.msra.mxu0 %v471
    %v473 = vand.u32 %v132, 4294901760
    %474 = vmatpush.msra.mxu0 %v473
    %v475 = vand.u32 %v129, 4294901760
    %476 = vmatpush.msra.mxu0 %v475
    %v477 = vand.u32 %v126, 4294901760
    %478 = vmatpush.msra.mxu0 %v477
    %v479 = vand.u32 %v123, 4294901760
    %480 = vmatpush.msra.mxu0 %v479
    %v481 = vand.u32 %v120, 4294901760
    %482 = vmatpush.msra.mxu0 %v481
    %v483 = vand.u32 %v426, 4294901760
    %v484 = vsub.f32 %v426, %v483
    %v485 = vand.u32 %v484, 4294901760
    %v486 = vsub.f32 %v484, %v485
    %v487 = vand.u32 %v486, 4294901760
    %488 = vmatmul.f32.gmra.mxu0 %v487
    %v489 = vpop.f32.mrf.mxu0
    %v490 = vadd.f32 %v450, %v489
    %v491 = vand.u32 %v427, 4294901760
    %v492 = vsub.f32 %v427, %v491
    %v493 = vand.u32 %v492, 4294901760
    %v494 = vsub.f32 %v492, %v493
    %v495 = vand.u32 %v494, 4294901760
    %496 = vmatmul.f32.gmra.mxu0 %v495
    %v497 = vpop.f32.mrf.mxu0
    %v498 = vadd.f32 %v450, %v497
    %v499 = vand.u32 %v428, 4294901760
    %v500 = vsub.f32 %v428, %v499
    %v501 = vand.u32 %v500, 4294901760
    %v502 = vsub.f32 %v500, %v501
    %v503 = vand.u32 %v502, 4294901760
    %504 = vmatmul.f32.gmra.mxu0 %v503
    %v505 = vpop.f32.mrf.mxu0
    %v506 = vadd.f32 %v450, %v505
    %v507 = vand.u32 %v429, 4294901760
    %v508 = vsub.f32 %v429, %v507
    %v509 = vand.u32 %v508, 4294901760
    %v510 = vsub.f32 %v508, %v509
    %v511 = vand.u32 %v510, 4294901760
    %512 = vmatmul.f32.gmra.mxu0 %v511
    %v513 = vpop.f32.mrf.mxu0
    %v514 = vadd.f32 %v450, %v513
    %v515 = vand.u32 %v430, 4294901760
    %v516 = vsub.f32 %v430, %v515
    %v517 = vand.u32 %v516, 4294901760
    %v518 = vsub.f32 %v516, %v517
    %v519 = vand.u32 %v518, 4294901760
    %520 = vmatmul.f32.gmra.mxu0 %v519
    %v521 = vpop.f32.mrf.mxu0
    %v522 = vadd.f32 %v450, %v521
    %v523 = vand.u32 %v431, 4294901760
    %v524 = vsub.f32 %v431, %v523
    %v525 = vand.u32 %v524, 4294901760
    %v526 = vsub.f32 %v524, %v525
    %v527 = vand.u32 %v526, 4294901760
    %528 = vmatmul.f32.gmra.mxu0 %v527
    %v529 = vpop.f32.mrf.mxu0
    %v530 = vadd.f32 %v450, %v529
    %v531 = vand.u32 %v432, 4294901760
    %v532 = vsub.f32 %v432, %v531
    %v533 = vand.u32 %v532, 4294901760
    %v534 = vsub.f32 %v532, %v533
    %v535 = vand.u32 %v534, 4294901760
    %536 = vmatmul.f32.gmra.mxu0 %v535
    %v537 = vpop.f32.mrf.mxu0
    %v538 = vadd.f32 %v450, %v537
    %v539 = vand.u32 %v433, 4294901760
    %v540 = vsub.f32 %v433, %v539
    %v541 = vand.u32 %v540, 4294901760
    %v542 = vsub.f32 %v540, %v541
    %v543 = vand.u32 %v542, 4294901760
    %544 = vmatmul.f32.gmra.mxu0 %v543
    %v545 = vpop.f32.mrf.mxu0
    %v546 = vadd.f32 %v450, %v545
    %v547 = vand.u32 %v434, 4294901760
    %v548 = vsub.f32 %v434, %v547
    %v549 = vand.u32 %v548, 4294901760
    %v550 = vsub.f32 %v548, %v549
    %v551 = vand.u32 %v550, 4294901760
    %552 = vmatmul.f32.gmra.mxu0 %v551
    %v553 = vpop.f32.mrf.mxu0
    %v554 = vadd.f32 %v450, %v553
    %v555 = vand.u32 %v435, 4294901760
    %v556 = vsub.f32 %v435, %v555
    %v557 = vand.u32 %v556, 4294901760
    %v558 = vsub.f32 %v556, %v557
    %v559 = vand.u32 %v558, 4294901760
    %560 = vmatmul.f32.gmra.mxu0 %v559
    %v561 = vpop.f32.mrf.mxu0
    %v562 = vadd.f32 %v450, %v561
    %v563 = vand.u32 %v436, 4294901760
    %v564 = vsub.f32 %v436, %v563
    %v565 = vand.u32 %v564, 4294901760
    %v566 = vsub.f32 %v564, %v565
    %v567 = vand.u32 %v566, 4294901760
    %568 = vmatmul.f32.gmra.mxu0 %v567
    %v569 = vpop.f32.mrf.mxu0
    %v570 = vadd.f32 %v450, %v569
    %v571 = vand.u32 %v437, 4294901760
    %v572 = vsub.f32 %v437, %v571
    %v573 = vand.u32 %v572, 4294901760
    %v574 = vsub.f32 %v572, %v573
    %v575 = vand.u32 %v574, 4294901760
    %576 = vmatmul.f32.gmra.mxu0 %v575
    %v577 = vpop.f32.mrf.mxu0
    %v578 = vadd.f32 %v450, %v577
    %v579 = vand.u32 %v438, 4294901760
    %v580 = vsub.f32 %v438, %v579
    %v581 = vand.u32 %v580, 4294901760
    %v582 = vsub.f32 %v580, %v581
    %v583 = vand.u32 %v582, 4294901760
    %584 = vmatmul.f32.gmra.mxu0 %v583
    %v585 = vpop.f32.mrf.mxu0
    %v586 = vadd.f32 %v450, %v585
    %v587 = vand.u32 %v439, 4294901760
    %v588 = vsub.f32 %v439, %v587
    %v589 = vand.u32 %v588, 4294901760
    %v590 = vsub.f32 %v588, %v589
    %v591 = vand.u32 %v590, 4294901760
    %592 = vmatmul.f32.gmra.mxu0 %v591
    %v593 = vpop.f32.mrf.mxu0
    %v594 = vadd.f32 %v450, %v593
    %v595 = vand.u32 %v440, 4294901760
    %v596 = vsub.f32 %v440, %v595
    %v597 = vand.u32 %v596, 4294901760
    %v598 = vsub.f32 %v596, %v597
    %v599 = vand.u32 %v598, 4294901760
    %600 = vmatmul.f32.gmra.mxu0 %v599
    %v601 = vpop.f32.mrf.mxu0
    %v602 = vadd.f32 %v450, %v601
    %v603 = vand.u32 %v441, 4294901760
    %v604 = vsub.f32 %v441, %v603
    %v605 = vand.u32 %v604, 4294901760
    %v606 = vsub.f32 %v604, %v605
    %v607 = vand.u32 %v606, 4294901760
    %608 = vmatmul.f32.gmra.mxu0 %v607
    %v609 = vpop.f32.mrf.mxu0
    %v610 = vadd.f32 %v450, %v609
    %v611 = vand.u32 %v442, 4294901760
    %v612 = vsub.f32 %v442, %v611
    %v613 = vand.u32 %v612, 4294901760
    %v614 = vsub.f32 %v612, %v613
    %v615 = vand.u32 %v614, 4294901760
    %616 = vmatmul.f32.gmra.mxu0 %v615
    %v617 = vpop.f32.mrf.mxu0
    %v618 = vadd.f32 %v450, %v617
    %v619 = vand.u32 %v443, 4294901760
    %v620 = vsub.f32 %v443, %v619
    %v621 = vand.u32 %v620, 4294901760
    %v622 = vsub.f32 %v620, %v621
    %v623 = vand.u32 %v622, 4294901760
    %624 = vmatmul.f32.gmra.mxu0 %v623
    %v625 = vpop.f32.mrf.mxu0
    %v626 = vadd.f32 %v450, %v625
    %v627 = vand.u32 %v444, 4294901760
    %v628 = vsub.f32 %v444, %v627
    %v629 = vand.u32 %v628, 4294901760
    %v630 = vsub.f32 %v628, %v629
    %v631 = vand.u32 %v630, 4294901760
    %632 = vmatmul.f32.gmra.mxu0 %v631
    %v633 = vpop.f32.mrf.mxu0
    %v634 = vadd.f32 %v450, %v633
    %v635 = vand.u32 %v445, 4294901760
    %v636 = vsub.f32 %v445, %v635
    %v637 = vand.u32 %v636, 4294901760
    %v638 = vsub.f32 %v636, %v637
    %v639 = vand.u32 %v638, 4294901760
    %640 = vmatmul.f32.gmra.mxu0 %v639
    %v641 = vpop.f32.mrf.mxu0
    %v642 = vadd.f32 %v450, %v641
    %v643 = vand.u32 %v446, 4294901760
    %v644 = vsub.f32 %v446, %v643
    %v645 = vand.u32 %v644, 4294901760
    %v646 = vsub.f32 %v644, %v645
    %v647 = vand.u32 %v646, 4294901760
    %648 = vmatmul.f32.gmra.mxu0 %v647
    %v649 = vpop.f32.mrf.mxu0
    %v650 = vadd.f32 %v450, %v649
    %v651 = vand.u32 %v447, 4294901760
    %v652 = vsub.f32 %v447, %v651
    %v653 = vand.u32 %v652, 4294901760
    %v654 = vsub.f32 %v652, %v653
    %v655 = vand.u32 %v654, 4294901760
    %656 = vmatmul.f32.gmra.mxu0 %v655
    %v657 = vpop.f32.mrf.mxu0
    %v658 = vadd.f32 %v450, %v657
    %v659 = vand.u32 %v448, 4294901760
    %v660 = vsub.f32 %v448, %v659
    %v661 = vand.u32 %v660, 4294901760
    %v662 = vsub.f32 %v660, %v661
    %v663 = vand.u32 %v662, 4294901760
    %664 = vmatmul.f32.gmra.mxu0 %v663
    %v665 = vpop.f32.mrf.mxu0
    %v666 = vadd.f32 %v450, %v665
    %v667 = vand.u32 %v449, 4294901760
    %v668 = vsub.f32 %v449, %v667
    %v669 = vand.u32 %v668, 4294901760
    %v670 = vsub.f32 %v668, %v669
    %v671 = vand.u32 %v670, 4294901760
    %672 = vmatmul.f32.gmra.mxu0 %v671
    %v673 = vpop.f32.mrf.mxu0
    %v674 = vadd.f32 %v450, %v673
    %675 = vdwg.mxu0
    %v676 = vand.u32 %v182, 4294901760
    %v677 = vsub.f32 %v182, %v676
    %v678 = vand.u32 %v677, 4294901760
    %v679 = vsub.f32 %v677, %v678
    %v680 = vand.u32 %v679, 4294901760
    %681 = vmatpush.msra.mxu0 %v680
    %v682 = vand.u32 %v179, 4294901760
    %v683 = vsub.f32 %v179, %v682
    %v684 = vand.u32 %v683, 4294901760
    %v685 = vsub.f32 %v683, %v684
    %v686 = vand.u32 %v685, 4294901760
    %687 = vmatpush.msra.mxu0 %v686
    %v688 = vand.u32 %v176, 4294901760
    %v689 = vsub.f32 %v176, %v688
    %v690 = vand.u32 %v689, 4294901760
    %v691 = vsub.f32 %v689, %v690
    %v692 = vand.u32 %v691, 4294901760
    %693 = vmatpush.msra.mxu0 %v692
    %v694 = vand.u32 %v173, 4294901760
    %v695 = vsub.f32 %v173, %v694
    %v696 = vand.u32 %v695, 4294901760
    %v697 = vsub.f32 %v695, %v696
    %v698 = vand.u32 %v697, 4294901760
    %699 = vmatpush.msra.mxu0 %v698
    %v700 = vand.u32 %v170, 4294901760
    %v701 = vsub.f32 %v170, %v700
    %v702 = vand.u32 %v701, 4294901760
    %v703 = vsub.f32 %v701, %v702
    %v704 = vand.u32 %v703, 4294901760
    %705 = vmatpush.msra.mxu0 %v704
    %v706 = vand.u32 %v167, 4294901760
    %v707 = vsub.f32 %v167, %v706
    %v708 = vand.u32 %v707, 4294901760
    %v709 = vsub.f32 %v707, %v708
    %v710 = vand.u32 %v709, 4294901760
    %711 = vmatpush.msra.mxu0 %v710
    %v712 = vand.u32 %v164, 4294901760
    %v713 = vsub.f32 %v164, %v712
    %v714 = vand.u32 %v713, 4294901760
    %v715 = vsub.f32 %v713, %v714
    %v716 = vand.u32 %v715, 4294901760
    %717 = vmatpush.msra.mxu0 %v716
    %v718 = vand.u32 %v161, 4294901760
    %v719 = vsub.f32 %v161, %v718
    %v720 = vand.u32 %v719, 4294901760
    %v721 = vsub.f32 %v719, %v720
    %v722 = vand.u32 %v721, 4294901760
    %723 = vmatpush.msra.mxu0 %v722
    %v724 = vand.u32 %v141, 4294901760
    %v725 = vsub.f32 %v141, %v724
    %v726 = vand.u32 %v725, 4294901760
    %v727 = vsub.f32 %v725, %v726
    %v728 = vand.u32 %v727, 4294901760
    %729 = vmatpush.msra.mxu0 %v728
    %v730 = vand.u32 %v138, 4294901760
    %v731 = vsub.f32 %v138, %v730
    %v732 = vand.u32 %v731, 4294901760
    %v733 = vsub.f32 %v731, %v732
    %v734 = vand.u32 %v733, 4294901760
    %735 = vmatpush.msra.mxu0 %v734
    %v736 = vand.u32 %v135, 4294901760
    %v737 = vsub.f32 %v135, %v736
    %v738 = vand.u32 %v737, 4294901760
    %v739 = vsub.f32 %v737, %v738
    %v740 = vand.u32 %v739, 4294901760
    %741 = vmatpush.msra.mxu0 %v740
    %v742 = vand.u32 %v132, 4294901760
    %v743 = vsub.f32 %v132, %v742
    %v744 = vand.u32 %v743, 4294901760
    %v745 = vsub.f32 %v743, %v744
    %v746 = vand.u32 %v745, 4294901760
    %747 = vmatpush.msra.mxu0 %v746
    %v748 = vand.u32 %v129, 4294901760
    %v749 = vsub.f32 %v129, %v748
    %v750 = vand.u32 %v749, 4294901760
    %v751 = vsub.f32 %v749, %v750
    %v752 = vand.u32 %v751, 4294901760
    %753 = vmatpush.msra.mxu0 %v752
    %v754 = vand.u32 %v126, 4294901760
    %v755 = vsub.f32 %v126, %v754
    %v756 = vand.u32 %v755, 4294901760
    %v757 = vsub.f32 %v755, %v756
    %v758 = vand.u32 %v757, 4294901760
    %759 = vmatpush.msra.mxu0 %v758
    %v760 = vand.u32 %v123, 4294901760
    %v761 = vsub.f32 %v123, %v760
    %v762 = vand.u32 %v761, 4294901760
    %v763 = vsub.f32 %v761, %v762
    %v764 = vand.u32 %v763, 4294901760
    %765 = vmatpush.msra.mxu0 %v764
    %v766 = vand.u32 %v120, 4294901760
    %v767 = vsub.f32 %v120, %v766
    %v768 = vand.u32 %v767, 4294901760
    %v769 = vsub.f32 %v767, %v768
    %v770 = vand.u32 %v769, 4294901760
    %771 = vmatpush.msra.mxu0 %v770
    %v772 = vand.u32 %v426, 4294901760
    %773 = vmatmul.f32.gmra.mxu0 %v772
    %v774 = vpop.f32.mrf.mxu0
    %v775 = vadd.f32 %v490, %v774
    %v776 = vand.u32 %v427, 4294901760
    %777 = vmatmul.f32.gmra.mxu0 %v776
    %v778 = vpop.f32.mrf.mxu0
    %v779 = vadd.f32 %v498, %v778
    %v780 = vand.u32 %v428, 4294901760
    %781 = vmatmul.f32.gmra.mxu0 %v780
    %v782 = vpop.f32.mrf.mxu0
    %v783 = vadd.f32 %v506, %v782
    %v784 = vand.u32 %v429, 4294901760
    %785 = vmatmul.f32.gmra.mxu0 %v784
    %v786 = vpop.f32.mrf.mxu0
    %v787 = vadd.f32 %v514, %v786
    %v788 = vand.u32 %v430, 4294901760
    %789 = vmatmul.f32.gmra.mxu0 %v788
    %v790 = vpop.f32.mrf.mxu0
    %v791 = vadd.f32 %v522, %v790
    %v792 = vand.u32 %v431, 4294901760
    %793 = vmatmul.f32.gmra.mxu0 %v792
    %v794 = vpop.f32.mrf.mxu0
    %v795 = vadd.f32 %v530, %v794
    %v796 = vand.u32 %v432, 4294901760
    %797 = vmatmul.f32.gmra.mxu0 %v796
    %v798 = vpop.f32.mrf.mxu0
    %v799 = vadd.f32 %v538, %v798
    %v800 = vand.u32 %v433, 4294901760
    %801 = vmatmul.f32.gmra.mxu0 %v800
    %v802 = vpop.f32.mrf.mxu0
    %v803 = vadd.f32 %v546, %v802
    %v804 = vand.u32 %v434, 4294901760
    %805 = vmatmul.f32.gmra.mxu0 %v804
    %v806 = vpop.f32.mrf.mxu0
    %v807 = vadd.f32 %v554, %v806
    %v808 = vand.u32 %v435, 4294901760
    %809 = vmatmul.f32.gmra.mxu0 %v808
    %v810 = vpop.f32.mrf.mxu0
    %v811 = vadd.f32 %v562, %v810
    %v812 = vand.u32 %v436, 4294901760
    %813 = vmatmul.f32.gmra.mxu0 %v812
    %v814 = vpop.f32.mrf.mxu0
    %v815 = vadd.f32 %v570, %v814
    %v816 = vand.u32 %v437, 4294901760
    %817 = vmatmul.f32.gmra.mxu0 %v816
    %v818 = vpop.f32.mrf.mxu0
    %v819 = vadd.f32 %v578, %v818
    %v820 = vand.u32 %v438, 4294901760
    %821 = vmatmul.f32.gmra.mxu0 %v820
    %v822 = vpop.f32.mrf.mxu0
    %v823 = vadd.f32 %v586, %v822
    %v824 = vand.u32 %v439, 4294901760
    %825 = vmatmul.f32.gmra.mxu0 %v824
    %v826 = vpop.f32.mrf.mxu0
    %v827 = vadd.f32 %v594, %v826
    %v828 = vand.u32 %v440, 4294901760
    %829 = vmatmul.f32.gmra.mxu0 %v828
    %v830 = vpop.f32.mrf.mxu0
    %v831 = vadd.f32 %v602, %v830
    %v832 = vand.u32 %v441, 4294901760
    %833 = vmatmul.f32.gmra.mxu0 %v832
    %v834 = vpop.f32.mrf.mxu0
    %v835 = vadd.f32 %v610, %v834
    %v836 = vand.u32 %v442, 4294901760
    %837 = vmatmul.f32.gmra.mxu0 %v836
    %v838 = vpop.f32.mrf.mxu0
    %v839 = vadd.f32 %v618, %v838
    %v840 = vand.u32 %v443, 4294901760
    %841 = vmatmul.f32.gmra.mxu0 %v840
    %v842 = vpop.f32.mrf.mxu0
    %v843 = vadd.f32 %v626, %v842
    %v844 = vand.u32 %v444, 4294901760
    %845 = vmatmul.f32.gmra.mxu0 %v844
    %v846 = vpop.f32.mrf.mxu0
    %v847 = vadd.f32 %v634, %v846
    %v848 = vand.u32 %v445, 4294901760
    %849 = vmatmul.f32.gmra.mxu0 %v848
    %v850 = vpop.f32.mrf.mxu0
    %v851 = vadd.f32 %v642, %v850
    %v852 = vand.u32 %v446, 4294901760
    %853 = vmatmul.f32.gmra.mxu0 %v852
    %v854 = vpop.f32.mrf.mxu0
    %v855 = vadd.f32 %v650, %v854
    %v856 = vand.u32 %v447, 4294901760
    %857 = vmatmul.f32.gmra.mxu0 %v856
    %v858 = vpop.f32.mrf.mxu0
    %v859 = vadd.f32 %v658, %v858
    %v860 = vand.u32 %v448, 4294901760
    %861 = vmatmul.f32.gmra.mxu0 %v860
    %v862 = vpop.f32.mrf.mxu0
    %v863 = vadd.f32 %v666, %v862
    %v864 = vand.u32 %v449, 4294901760
    %865 = vmatmul.f32.gmra.mxu0 %v864
    %v866 = vpop.f32.mrf.mxu0
    %v867 = vadd.f32 %v674, %v866
    %868 = vdwg.mxu0
    %v869 = vand.u32 %v182, 4294901760
    %v870 = vsub.f32 %v182, %v869
    %871 = vmatpush.msra.mxu0 %v870
    %v872 = vand.u32 %v179, 4294901760
    %v873 = vsub.f32 %v179, %v872
    %874 = vmatpush.msra.mxu0 %v873
    %v875 = vand.u32 %v176, 4294901760
    %v876 = vsub.f32 %v176, %v875
    %877 = vmatpush.msra.mxu0 %v876
    %v878 = vand.u32 %v173, 4294901760
    %v879 = vsub.f32 %v173, %v878
    %880 = vmatpush.msra.mxu0 %v879
    %v881 = vand.u32 %v170, 4294901760
    %v882 = vsub.f32 %v170, %v881
    %883 = vmatpush.msra.mxu0 %v882
    %v884 = vand.u32 %v167, 4294901760
    %v885 = vsub.f32 %v167, %v884
    %886 = vmatpush.msra.mxu0 %v885
    %v887 = vand.u32 %v164, 4294901760
    %v888 = vsub.f32 %v164, %v887
    %889 = vmatpush.msra.mxu0 %v888
    %v890 = vand.u32 %v161, 4294901760
    %v891 = vsub.f32 %v161, %v890
    %892 = vmatpush.msra.mxu0 %v891
    %v893 = vand.u32 %v141, 4294901760
    %v894 = vsub.f32 %v141, %v893
    %895 = vmatpush.msra.mxu0 %v894
    %v896 = vand.u32 %v138, 4294901760
    %v897 = vsub.f32 %v138, %v896
    %898 = vmatpush.msra.mxu0 %v897
    %v899 = vand.u32 %v135, 4294901760
    %v900 = vsub.f32 %v135, %v899
    %901 = vmatpush.msra.mxu0 %v900
    %v902 = vand.u32 %v132, 4294901760
    %v903 = vsub.f32 %v132, %v902
    %904 = vmatpush.msra.mxu0 %v903
    %v905 = vand.u32 %v129, 4294901760
    %v906 = vsub.f32 %v129, %v905
    %907 = vmatpush.msra.mxu0 %v906
    %v908 = vand.u32 %v126, 4294901760
    %v909 = vsub.f32 %v126, %v908
    %910 = vmatpush.msra.mxu0 %v909
    %v911 = vand.u32 %v123, 4294901760
    %v912 = vsub.f32 %v123, %v911
    %913 = vmatpush.msra.mxu0 %v912
    %v914 = vand.u32 %v120, 4294901760
    %v915 = vsub.f32 %v120, %v914
    %916 = vmatpush.msra.mxu0 %v915
    %v917 = vand.u32 %v426, 4294901760
    %v918 = vsub.f32 %v426, %v917
    %919 = vmatmul.f32.gmra.mxu0 %v918
    %v920 = vpop.f32.mrf.mxu0
    %v921 = vadd.f32 %v775, %v920
    %v922 = vand.u32 %v427, 4294901760
    %v923 = vsub.f32 %v427, %v922
    %924 = vmatmul.f32.gmra.mxu0 %v923
    %v925 = vpop.f32.mrf.mxu0
    %v926 = vadd.f32 %v779, %v925
    %v927 = vand.u32 %v428, 4294901760
    %v928 = vsub.f32 %v428, %v927
    %929 = vmatmul.f32.gmra.mxu0 %v928
    %v930 = vpop.f32.mrf.mxu0
    %v931 = vadd.f32 %v783, %v930
    %v932 = vand.u32 %v429, 4294901760
    %v933 = vsub.f32 %v429, %v932
    %934 = vmatmul.f32.gmra.mxu0 %v933
    %v935 = vpop.f32.mrf.mxu0
    %v936 = vadd.f32 %v787, %v935
    %v937 = vand.u32 %v430, 4294901760
    %v938 = vsub.f32 %v430, %v937
    %939 = vmatmul.f32.gmra.mxu0 %v938
    %v940 = vpop.f32.mrf.mxu0
    %v941 = vadd.f32 %v791, %v940
    %v942 = vand.u32 %v431, 4294901760
    %v943 = vsub.f32 %v431, %v942
    %944 = vmatmul.f32.gmra.mxu0 %v943
    %v945 = vpop.f32.mrf.mxu0
    %v946 = vadd.f32 %v795, %v945
    %v947 = vand.u32 %v432, 4294901760
    %v948 = vsub.f32 %v432, %v947
    %949 = vmatmul.f32.gmra.mxu0 %v948
    %v950 = vpop.f32.mrf.mxu0
    %v951 = vadd.f32 %v799, %v950
    %v952 = vand.u32 %v433, 4294901760
    %v953 = vsub.f32 %v433, %v952
    %954 = vmatmul.f32.gmra.mxu0 %v953
    %v955 = vpop.f32.mrf.mxu0
    %v956 = vadd.f32 %v803, %v955
    %v957 = vand.u32 %v434, 4294901760
    %v958 = vsub.f32 %v434, %v957
    %959 = vmatmul.f32.gmra.mxu0 %v958
    %v960 = vpop.f32.mrf.mxu0
    %v961 = vadd.f32 %v807, %v960
    %v962 = vand.u32 %v435, 4294901760
    %v963 = vsub.f32 %v435, %v962
    %964 = vmatmul.f32.gmra.mxu0 %v963
    %v965 = vpop.f32.mrf.mxu0
    %v966 = vadd.f32 %v811, %v965
    %v967 = vand.u32 %v436, 4294901760
    %v968 = vsub.f32 %v436, %v967
    %969 = vmatmul.f32.gmra.mxu0 %v968
    %v970 = vpop.f32.mrf.mxu0
    %v971 = vadd.f32 %v815, %v970
    %v972 = vand.u32 %v437, 4294901760
    %v973 = vsub.f32 %v437, %v972
    %974 = vmatmul.f32.gmra.mxu0 %v973
    %v975 = vpop.f32.mrf.mxu0
    %v976 = vadd.f32 %v819, %v975
    %v977 = vand.u32 %v438, 4294901760
    %v978 = vsub.f32 %v438, %v977
    %979 = vmatmul.f32.gmra.mxu0 %v978
    %v980 = vpop.f32.mrf.mxu0
    %v981 = vadd.f32 %v823, %v980
    %v982 = vand.u32 %v439, 4294901760
    %v983 = vsub.f32 %v439, %v982
    %984 = vmatmul.f32.gmra.mxu0 %v983
    %v985 = vpop.f32.mrf.mxu0
    %v986 = vadd.f32 %v827, %v985
    %v987 = vand.u32 %v440, 4294901760
    %v988 = vsub.f32 %v440, %v987
    %989 = vmatmul.f32.gmra.mxu0 %v988
    %v990 = vpop.f32.mrf.mxu0
    %v991 = vadd.f32 %v831, %v990
    %v992 = vand.u32 %v441, 4294901760
    %v993 = vsub.f32 %v441, %v992
    %994 = vmatmul.f32.gmra.mxu0 %v993
    %v995 = vpop.f32.mrf.mxu0
    %v996 = vadd.f32 %v835, %v995
    %v997 = vand.u32 %v442, 4294901760
    %v998 = vsub.f32 %v442, %v997
    %999 = vmatmul.f32.gmra.mxu0 %v998
    %v1000 = vpop.f32.mrf.mxu0
    %v1001 = vadd.f32 %v839, %v1000
    %v1002 = vand.u32 %v443, 4294901760
    %v1003 = vsub.f32 %v443, %v1002
    %1004 = vmatmul.f32.gmra.mxu0 %v1003
    %v1005 = vpop.f32.mrf.mxu0
    %v1006 = vadd.f32 %v843, %v1005
    %v1007 = vand.u32 %v444, 4294901760
    %v1008 = vsub.f32 %v444, %v1007
    %1009 = vmatmul.f32.gmra.mxu0 %v1008
    %v1010 = vpop.f32.mrf.mxu0
    %v1011 = vadd.f32 %v847, %v1010
    %v1012 = vand.u32 %v445, 4294901760
    %v1013 = vsub.f32 %v445, %v1012
    %1014 = vmatmul.f32.gmra.mxu0 %v1013
    %v1015 = vpop.f32.mrf.mxu0
    %v1016 = vadd.f32 %v851, %v1015
    %v1017 = vand.u32 %v446, 4294901760
    %v1018 = vsub.f32 %v446, %v1017
    %1019 = vmatmul.f32.gmra.mxu0 %v1018
    %v1020 = vpop.f32.mrf.mxu0
    %v1021 = vadd.f32 %v855, %v1020
    %v1022 = vand.u32 %v447, 4294901760
    %v1023 = vsub.f32 %v447, %v1022
    %1024 = vmatmul.f32.gmra.mxu0 %v1023
    %v1025 = vpop.f32.mrf.mxu0
    %v1026 = vadd.f32 %v859, %v1025
    %v1027 = vand.u32 %v448, 4294901760
    %v1028 = vsub.f32 %v448, %v1027
    %1029 = vmatmul.f32.gmra.mxu0 %v1028
    %v1030 = vpop.f32.mrf.mxu0
    %v1031 = vadd.f32 %v863, %v1030
    %v1032 = vand.u32 %v449, 4294901760
    %v1033 = vsub.f32 %v449, %v1032
    %1034 = vmatmul.f32.gmra.mxu0 %v1033
    %v1035 = vpop.f32.mrf.mxu0
    %v1036 = vadd.f32 %v867, %v1035
    %1037 = vdwg.mxu0
    %v1038 = vand.u32 %v182, 4294901760
    %1039 = vmatpush.msra.mxu0 %v1038
    %v1040 = vand.u32 %v179, 4294901760
    %1041 = vmatpush.msra.mxu0 %v1040
    %v1042 = vand.u32 %v176, 4294901760
    %1043 = vmatpush.msra.mxu0 %v1042
    %v1044 = vand.u32 %v173, 4294901760
    %1045 = vmatpush.msra.mxu0 %v1044
    %v1046 = vand.u32 %v170, 4294901760
    %1047 = vmatpush.msra.mxu0 %v1046
    %v1048 = vand.u32 %v167, 4294901760
    %1049 = vmatpush.msra.mxu0 %v1048
    %v1050 = vand.u32 %v164, 4294901760
    %1051 = vmatpush.msra.mxu0 %v1050
    %v1052 = vand.u32 %v161, 4294901760
    %1053 = vmatpush.msra.mxu0 %v1052
    %v1054 = vand.u32 %v141, 4294901760
    %1055 = vmatpush.msra.mxu0 %v1054
    %v1056 = vand.u32 %v138, 4294901760
    %1057 = vmatpush.msra.mxu0 %v1056
    %v1058 = vand.u32 %v135, 4294901760
    %1059 = vmatpush.msra.mxu0 %v1058
    %v1060 = vand.u32 %v132, 4294901760
    %1061 = vmatpush.msra.mxu0 %v1060
    %v1062 = vand.u32 %v129, 4294901760
    %1063 = vmatpush.msra.mxu0 %v1062
    %v1064 = vand.u32 %v126, 4294901760
    %1065 = vmatpush.msra.mxu0 %v1064
    %v1066 = vand.u32 %v123, 4294901760
    %1067 = vmatpush.msra.mxu0 %v1066
    %v1068 = vand.u32 %v120, 4294901760
    %1069 = vmatpush.msra.mxu0 %v1068
    %v1070 = vand.u32 %v426, 4294901760
    %v1071 = vsub.f32 %v426, %v1070
    %v1072 = vand.u32 %v1071, 4294901760
    %1073 = vmatmul.f32.gmra.mxu0 %v1072
    %v1074 = vpop.f32.mrf.mxu0
    %v1075 = vadd.f32 %v921, %v1074
    %v1076 = vand.u32 %v427, 4294901760
    %v1077 = vsub.f32 %v427, %v1076
    %v1078 = vand.u32 %v1077, 4294901760
    %1079 = vmatmul.f32.gmra.mxu0 %v1078
    %v1080 = vpop.f32.mrf.mxu0
    %v1081 = vadd.f32 %v926, %v1080
    %v1082 = vand.u32 %v428, 4294901760
    %v1083 = vsub.f32 %v428, %v1082
    %v1084 = vand.u32 %v1083, 4294901760
    %1085 = vmatmul.f32.gmra.mxu0 %v1084
    %v1086 = vpop.f32.mrf.mxu0
    %v1087 = vadd.f32 %v931, %v1086
    %v1088 = vand.u32 %v429, 4294901760
    %v1089 = vsub.f32 %v429, %v1088
    %v1090 = vand.u32 %v1089, 4294901760
    %1091 = vmatmul.f32.gmra.mxu0 %v1090
    %v1092 = vpop.f32.mrf.mxu0
    %v1093 = vadd.f32 %v936, %v1092
    %v1094 = vand.u32 %v430, 4294901760
    %v1095 = vsub.f32 %v430, %v1094
    %v1096 = vand.u32 %v1095, 4294901760
    %1097 = vmatmul.f32.gmra.mxu0 %v1096
    %v1098 = vpop.f32.mrf.mxu0
    %v1099 = vadd.f32 %v941, %v1098
    %v1100 = vand.u32 %v431, 4294901760
    %v1101 = vsub.f32 %v431, %v1100
    %v1102 = vand.u32 %v1101, 4294901760
    %1103 = vmatmul.f32.gmra.mxu0 %v1102
    %v1104 = vpop.f32.mrf.mxu0
    %v1105 = vadd.f32 %v946, %v1104
    %v1106 = vand.u32 %v432, 4294901760
    %v1107 = vsub.f32 %v432, %v1106
    %v1108 = vand.u32 %v1107, 4294901760
    %1109 = vmatmul.f32.gmra.mxu0 %v1108
    %v1110 = vpop.f32.mrf.mxu0
    %v1111 = vadd.f32 %v951, %v1110
    %v1112 = vand.u32 %v433, 4294901760
    %v1113 = vsub.f32 %v433, %v1112
    %v1114 = vand.u32 %v1113, 4294901760
    %1115 = vmatmul.f32.gmra.mxu0 %v1114
    %v1116 = vpop.f32.mrf.mxu0
    %v1117 = vadd.f32 %v956, %v1116
    %v1118 = vand.u32 %v434, 4294901760
    %v1119 = vsub.f32 %v434, %v1118
    %v1120 = vand.u32 %v1119, 4294901760
    %1121 = vmatmul.f32.gmra.mxu0 %v1120
    %v1122 = vpop.f32.mrf.mxu0
    %v1123 = vadd.f32 %v961, %v1122
    %v1124 = vand.u32 %v435, 4294901760
    %v1125 = vsub.f32 %v435, %v1124
    %v1126 = vand.u32 %v1125, 4294901760
    %1127 = vmatmul.f32.gmra.mxu0 %v1126
    %v1128 = vpop.f32.mrf.mxu0
    %v1129 = vadd.f32 %v966, %v1128
    %v1130 = vand.u32 %v436, 4294901760
    %v1131 = vsub.f32 %v436, %v1130
    %v1132 = vand.u32 %v1131, 4294901760
    %1133 = vmatmul.f32.gmra.mxu0 %v1132
    %v1134 = vpop.f32.mrf.mxu0
    %v1135 = vadd.f32 %v971, %v1134
    %v1136 = vand.u32 %v437, 4294901760
    %v1137 = vsub.f32 %v437, %v1136
    %v1138 = vand.u32 %v1137, 4294901760
    %1139 = vmatmul.f32.gmra.mxu0 %v1138
    %v1140 = vpop.f32.mrf.mxu0
    %v1141 = vadd.f32 %v976, %v1140
    %v1142 = vand.u32 %v438, 4294901760
    %v1143 = vsub.f32 %v438, %v1142
    %v1144 = vand.u32 %v1143, 4294901760
    %1145 = vmatmul.f32.gmra.mxu0 %v1144
    %v1146 = vpop.f32.mrf.mxu0
    %v1147 = vadd.f32 %v981, %v1146
    %v1148 = vand.u32 %v439, 4294901760
    %v1149 = vsub.f32 %v439, %v1148
    %v1150 = vand.u32 %v1149, 4294901760
    %1151 = vmatmul.f32.gmra.mxu0 %v1150
    %v1152 = vpop.f32.mrf.mxu0
    %v1153 = vadd.f32 %v986, %v1152
    %v1154 = vand.u32 %v440, 4294901760
    %v1155 = vsub.f32 %v440, %v1154
    %v1156 = vand.u32 %v1155, 4294901760
    %1157 = vmatmul.f32.gmra.mxu0 %v1156
    %v1158 = vpop.f32.mrf.mxu0
    %v1159 = vadd.f32 %v991, %v1158
    %v1160 = vand.u32 %v441, 4294901760
    %v1161 = vsub.f32 %v441, %v1160
    %v1162 = vand.u32 %v1161, 4294901760
    %1163 = vmatmul.f32.gmra.mxu0 %v1162
    %v1164 = vpop.f32.mrf.mxu0
    %v1165 = vadd.f32 %v996, %v1164
    %v1166 = vand.u32 %v442, 4294901760
    %v1167 = vsub.f32 %v442, %v1166
    %v1168 = vand.u32 %v1167, 4294901760
    %1169 = vmatmul.f32.gmra.mxu0 %v1168
    %v1170 = vpop.f32.mrf.mxu0
    %v1171 = vadd.f32 %v1001, %v1170
    %v1172 = vand.u32 %v443, 4294901760
    %v1173 = vsub.f32 %v443, %v1172
    %v1174 = vand.u32 %v1173, 4294901760
    %1175 = vmatmul.f32.gmra.mxu0 %v1174
    %v1176 = vpop.f32.mrf.mxu0
    %v1177 = vadd.f32 %v1006, %v1176
    %v1178 = vand.u32 %v444, 4294901760
    %v1179 = vsub.f32 %v444, %v1178
    %v1180 = vand.u32 %v1179, 4294901760
    %1181 = vmatmul.f32.gmra.mxu0 %v1180
    %v1182 = vpop.f32.mrf.mxu0
    %v1183 = vadd.f32 %v1011, %v1182
    %v1184 = vand.u32 %v445, 4294901760
    %v1185 = vsub.f32 %v445, %v1184
    %v1186 = vand.u32 %v1185, 4294901760
    %1187 = vmatmul.f32.gmra.mxu0 %v1186
    %v1188 = vpop.f32.mrf.mxu0
    %v1189 = vadd.f32 %v1016, %v1188
    %v1190 = vand.u32 %v446, 4294901760
    %v1191 = vsub.f32 %v446, %v1190
    %v1192 = vand.u32 %v1191, 4294901760
    %1193 = vmatmul.f32.gmra.mxu0 %v1192
    %v1194 = vpop.f32.mrf.mxu0
    %v1195 = vadd.f32 %v1021, %v1194
    %v1196 = vand.u32 %v447, 4294901760
    %v1197 = vsub.f32 %v447, %v1196
    %v1198 = vand.u32 %v1197, 4294901760
    %1199 = vmatmul.f32.gmra.mxu0 %v1198
    %v1200 = vpop.f32.mrf.mxu0
    %v1201 = vadd.f32 %v1026, %v1200
    %v1202 = vand.u32 %v448, 4294901760
    %v1203 = vsub.f32 %v448, %v1202
    %v1204 = vand.u32 %v1203, 4294901760
    %1205 = vmatmul.f32.gmra.mxu0 %v1204
    %v1206 = vpop.f32.mrf.mxu0
    %v1207 = vadd.f32 %v1031, %v1206
    %v1208 = vand.u32 %v449, 4294901760
    %v1209 = vsub.f32 %v449, %v1208
    %v1210 = vand.u32 %v1209, 4294901760
    %1211 = vmatmul.f32.gmra.mxu0 %v1210
    %v1212 = vpop.f32.mrf.mxu0
    %v1213 = vadd.f32 %v1036, %v1212
    %1214 = vdwg.mxu0
    %v1215 = vand.u32 %v182, 4294901760
    %v1216 = vsub.f32 %v182, %v1215
    %v1217 = vand.u32 %v1216, 4294901760
    %1218 = vmatpush.msra.mxu0 %v1217
    %v1219 = vand.u32 %v179, 4294901760
    %v1220 = vsub.f32 %v179, %v1219
    %v1221 = vand.u32 %v1220, 4294901760
    %1222 = vmatpush.msra.mxu0 %v1221
    %v1223 = vand.u32 %v176, 4294901760
    %v1224 = vsub.f32 %v176, %v1223
    %v1225 = vand.u32 %v1224, 4294901760
    %1226 = vmatpush.msra.mxu0 %v1225
    %v1227 = vand.u32 %v173, 4294901760
    %v1228 = vsub.f32 %v173, %v1227
    %v1229 = vand.u32 %v1228, 4294901760
    %1230 = vmatpush.msra.mxu0 %v1229
    %v1231 = vand.u32 %v170, 4294901760
    %v1232 = vsub.f32 %v170, %v1231
    %v1233 = vand.u32 %v1232, 4294901760
    %1234 = vmatpush.msra.mxu0 %v1233
    %v1235 = vand.u32 %v167, 4294901760
    %v1236 = vsub.f32 %v167, %v1235
    %v1237 = vand.u32 %v1236, 4294901760
    %1238 = vmatpush.msra.mxu0 %v1237
    %v1239 = vand.u32 %v164, 4294901760
    %v1240 = vsub.f32 %v164, %v1239
    %v1241 = vand.u32 %v1240, 4294901760
    %1242 = vmatpush.msra.mxu0 %v1241
    %v1243 = vand.u32 %v161, 4294901760
    %v1244 = vsub.f32 %v161, %v1243
    %v1245 = vand.u32 %v1244, 4294901760
    %1246 = vmatpush.msra.mxu0 %v1245
    %v1247 = vand.u32 %v141, 4294901760
    %v1248 = vsub.f32 %v141, %v1247
    %v1249 = vand.u32 %v1248, 4294901760
    %1250 = vmatpush.msra.mxu0 %v1249
    %v1251 = vand.u32 %v138, 4294901760
    %v1252 = vsub.f32 %v138, %v1251
    %v1253 = vand.u32 %v1252, 4294901760
    %1254 = vmatpush.msra.mxu0 %v1253
    %v1255 = vand.u32 %v135, 4294901760
    %v1256 = vsub.f32 %v135, %v1255
    %v1257 = vand.u32 %v1256, 4294901760
    %1258 = vmatpush.msra.mxu0 %v1257
    %v1259 = vand.u32 %v132, 4294901760
    %v1260 = vsub.f32 %v132, %v1259
    %v1261 = vand.u32 %v1260, 4294901760
    %1262 = vmatpush.msra.mxu0 %v1261
    %v1263 = vand.u32 %v129, 4294901760
    %v1264 = vsub.f32 %v129, %v1263
    %v1265 = vand.u32 %v1264, 4294901760
    %1266 = vmatpush.msra.mxu0 %v1265
    %v1267 = vand.u32 %v126, 4294901760
    %v1268 = vsub.f32 %v126, %v1267
    %v1269 = vand.u32 %v1268, 4294901760
    %1270 = vmatpush.msra.mxu0 %v1269
    %v1271 = vand.u32 %v123, 4294901760
    %v1272 = vsub.f32 %v123, %v1271
    %v1273 = vand.u32 %v1272, 4294901760
    %1274 = vmatpush.msra.mxu0 %v1273
    %v1275 = vand.u32 %v120, 4294901760
    %v1276 = vsub.f32 %v120, %v1275
    %v1277 = vand.u32 %v1276, 4294901760
    %1278 = vmatpush.msra.mxu0 %v1277
    %v1279 = vand.u32 %v426, 4294901760
    %1280 = vmatmul.f32.gmra.mxu0 %v1279
    %v1281 = vpop.f32.mrf.mxu0
    %v1282 = vadd.f32 %v1075, %v1281
    %v1283 = vand.u32 %v427, 4294901760
    %1284 = vmatmul.f32.gmra.mxu0 %v1283
    %v1285 = vpop.f32.mrf.mxu0
    %v1286 = vadd.f32 %v1081, %v1285
    %v1287 = vand.u32 %v428, 4294901760
    %1288 = vmatmul.f32.gmra.mxu0 %v1287
    %v1289 = vpop.f32.mrf.mxu0
    %v1290 = vadd.f32 %v1087, %v1289
    %v1291 = vand.u32 %v429, 4294901760
    %1292 = vmatmul.f32.gmra.mxu0 %v1291
    %v1293 = vpop.f32.mrf.mxu0
    %v1294 = vadd.f32 %v1093, %v1293
    %v1295 = vand.u32 %v430, 4294901760
    %1296 = vmatmul.f32.gmra.mxu0 %v1295
    %v1297 = vpop.f32.mrf.mxu0
    %v1298 = vadd.f32 %v1099, %v1297
    %v1299 = vand.u32 %v431, 4294901760
    %1300 = vmatmul.f32.gmra.mxu0 %v1299
    %v1301 = vpop.f32.mrf.mxu0
    %v1302 = vadd.f32 %v1105, %v1301
    %v1303 = vand.u32 %v432, 4294901760
    %1304 = vmatmul.f32.gmra.mxu0 %v1303
    %v1305 = vpop.f32.mrf.mxu0
    %v1306 = vadd.f32 %v1111, %v1305
    %v1307 = vand.u32 %v433, 4294901760
    %1308 = vmatmul.f32.gmra.mxu0 %v1307
    %v1309 = vpop.f32.mrf.mxu0
    %v1310 = vadd.f32 %v1117, %v1309
    %v1311 = vand.u32 %v434, 4294901760
    %1312 = vmatmul.f32.gmra.mxu0 %v1311
    %v1313 = vpop.f32.mrf.mxu0
    %v1314 = vadd.f32 %v1123, %v1313
    %v1315 = vand.u32 %v435, 4294901760
    %1316 = vmatmul.f32.gmra.mxu0 %v1315
    %v1317 = vpop.f32.mrf.mxu0
    %v1318 = vadd.f32 %v1129, %v1317
    %v1319 = vand.u32 %v436, 4294901760
    %1320 = vmatmul.f32.gmra.mxu0 %v1319
    %v1321 = vpop.f32.mrf.mxu0
    %v1322 = vadd.f32 %v1135, %v1321
    %v1323 = vand.u32 %v437, 4294901760
    %1324 = vmatmul.f32.gmra.mxu0 %v1323
    %v1325 = vpop.f32.mrf.mxu0
    %v1326 = vadd.f32 %v1141, %v1325
    %v1327 = vand.u32 %v438, 4294901760
    %1328 = vmatmul.f32.gmra.mxu0 %v1327
    %v1329 = vpop.f32.mrf.mxu0
    %v1330 = vadd.f32 %v1147, %v1329
    %v1331 = vand.u32 %v439, 4294901760
    %1332 = vmatmul.f32.gmra.mxu0 %v1331
    %v1333 = vpop.f32.mrf.mxu0
    %v1334 = vadd.f32 %v1153, %v1333
    %v1335 = vand.u32 %v440, 4294901760
    %1336 = vmatmul.f32.gmra.mxu0 %v1335
    %v1337 = vpop.f32.mrf.mxu0
    %v1338 = vadd.f32 %v1159, %v1337
    %v1339 = vand.u32 %v441, 4294901760
    %1340 = vmatmul.f32.gmra.mxu0 %v1339
    %v1341 = vpop.f32.mrf.mxu0
    %v1342 = vadd.f32 %v1165, %v1341
    %v1343 = vand.u32 %v442, 4294901760
    %1344 = vmatmul.f32.gmra.mxu0 %v1343
    %v1345 = vpop.f32.mrf.mxu0
    %v1346 = vadd.f32 %v1171, %v1345
    %v1347 = vand.u32 %v443, 4294901760
    %1348 = vmatmul.f32.gmra.mxu0 %v1347
    %v1349 = vpop.f32.mrf.mxu0
    %v1350 = vadd.f32 %v1177, %v1349
    %v1351 = vand.u32 %v444, 4294901760
    %1352 = vmatmul.f32.gmra.mxu0 %v1351
    %v1353 = vpop.f32.mrf.mxu0
    %v1354 = vadd.f32 %v1183, %v1353
    %v1355 = vand.u32 %v445, 4294901760
    %1356 = vmatmul.f32.gmra.mxu0 %v1355
    %v1357 = vpop.f32.mrf.mxu0
    %v1358 = vadd.f32 %v1189, %v1357
    %v1359 = vand.u32 %v446, 4294901760
    %1360 = vmatmul.f32.gmra.mxu0 %v1359
    %v1361 = vpop.f32.mrf.mxu0
    %v1362 = vadd.f32 %v1195, %v1361
    %v1363 = vand.u32 %v447, 4294901760
    %1364 = vmatmul.f32.gmra.mxu0 %v1363
    %v1365 = vpop.f32.mrf.mxu0
    %v1366 = vadd.f32 %v1201, %v1365
    %v1367 = vand.u32 %v448, 4294901760
    %1368 = vmatmul.f32.gmra.mxu0 %v1367
    %v1369 = vpop.f32.mrf.mxu0
    %v1370 = vadd.f32 %v1207, %v1369
    %v1371 = vand.u32 %v449, 4294901760
    %1372 = vmatmul.f32.gmra.mxu0 %v1371
    %v1373 = vpop.f32.mrf.mxu0
    %v1374 = vadd.f32 %v1213, %v1373
    %1375 = vdwg.mxu0
    %v1376 = vand.u32 %v182, 4294901760
    %1377 = vmatpush.msra.mxu0 %v1376
    %v1378 = vand.u32 %v179, 4294901760
    %1379 = vmatpush.msra.mxu0 %v1378
    %v1380 = vand.u32 %v176, 4294901760
    %1381 = vmatpush.msra.mxu0 %v1380
    %v1382 = vand.u32 %v173, 4294901760
    %1383 = vmatpush.msra.mxu0 %v1382
    %v1384 = vand.u32 %v170, 4294901760
    %1385 = vmatpush.msra.mxu0 %v1384
    %v1386 = vand.u32 %v167, 4294901760
    %1387 = vmatpush.msra.mxu0 %v1386
    %v1388 = vand.u32 %v164, 4294901760
    %1389 = vmatpush.msra.mxu0 %v1388
    %v1390 = vand.u32 %v161, 4294901760
    %1391 = vmatpush.msra.mxu0 %v1390
    %v1392 = vand.u32 %v141, 4294901760
    %1393 = vmatpush.msra.mxu0 %v1392
    %v1394 = vand.u32 %v138, 4294901760
    %1395 = vmatpush.msra.mxu0 %v1394
    %v1396 = vand.u32 %v135, 4294901760
    %1397 = vmatpush.msra.mxu0 %v1396
    %v1398 = vand.u32 %v132, 4294901760
    %1399 = vmatpush.msra.mxu0 %v1398
    %v1400 = vand.u32 %v129, 4294901760
    %1401 = vmatpush.msra.mxu0 %v1400
    %v1402 = vand.u32 %v126, 4294901760
    %1403 = vmatpush.msra.mxu0 %v1402
    %v1404 = vand.u32 %v123, 4294901760
    %1405 = vmatpush.msra.mxu0 %v1404
    %v1406 = vand.u32 %v120, 4294901760
    %1407 = vmatpush.msra.mxu0 %v1406
    %v1408 = vand.u32 %v426, 4294901760
    %1409 = vmatmul.f32.gmra.mxu0 %v1408
    %v1410 = vpop.f32.mrf.mxu0
    %v1411 = vadd.f32 %v1282, %v1410
    %v1412 = vand.u32 %v427, 4294901760
    %1413 = vmatmul.f32.gmra.mxu0 %v1412
    %v1414 = vpop.f32.mrf.mxu0
    %v1415 = vadd.f32 %v1286, %v1414
    %v1416 = vand.u32 %v428, 4294901760
    %1417 = vmatmul.f32.gmra.mxu0 %v1416
    %v1418 = vpop.f32.mrf.mxu0
    %v1419 = vadd.f32 %v1290, %v1418
    %v1420 = vand.u32 %v429, 4294901760
    %1421 = vmatmul.f32.gmra.mxu0 %v1420
    %v1422 = vpop.f32.mrf.mxu0
    %v1423 = vadd.f32 %v1294, %v1422
    %v1424 = vand.u32 %v430, 4294901760
    %1425 = vmatmul.f32.gmra.mxu0 %v1424
    %v1426 = vpop.f32.mrf.mxu0
    %v1427 = vadd.f32 %v1298, %v1426
    %v1428 = vand.u32 %v431, 4294901760
    %1429 = vmatmul.f32.gmra.mxu0 %v1428
    %v1430 = vpop.f32.mrf.mxu0
    %v1431 = vadd.f32 %v1302, %v1430
    %v1432 = vand.u32 %v432, 4294901760
    %1433 = vmatmul.f32.gmra.mxu0 %v1432
    %v1434 = vpop.f32.mrf.mxu0
    %v1435 = vadd.f32 %v1306, %v1434
    %v1436 = vand.u32 %v433, 4294901760
    %1437 = vmatmul.f32.gmra.mxu0 %v1436
    %v1438 = vpop.f32.mrf.mxu0
    %v1439 = vadd.f32 %v1310, %v1438
    %v1440 = vand.u32 %v434, 4294901760
    %1441 = vmatmul.f32.gmra.mxu0 %v1440
    %v1442 = vpop.f32.mrf.mxu0
    %v1443 = vadd.f32 %v1314, %v1442
    %v1444 = vand.u32 %v435, 4294901760
    %1445 = vmatmul.f32.gmra.mxu0 %v1444
    %v1446 = vpop.f32.mrf.mxu0
    %v1447 = vadd.f32 %v1318, %v1446
    %v1448 = vand.u32 %v436, 4294901760
    %1449 = vmatmul.f32.gmra.mxu0 %v1448
    %v1450 = vpop.f32.mrf.mxu0
    %v1451 = vadd.f32 %v1322, %v1450
    %v1452 = vand.u32 %v437, 4294901760
    %1453 = vmatmul.f32.gmra.mxu0 %v1452
    %v1454 = vpop.f32.mrf.mxu0
    %v1455 = vadd.f32 %v1326, %v1454
    %v1456 = vand.u32 %v438, 4294901760
    %1457 = vmatmul.f32.gmra.mxu0 %v1456
    %v1458 = vpop.f32.mrf.mxu0
    %v1459 = vadd.f32 %v1330, %v1458
    %v1460 = vand.u32 %v439, 4294901760
    %1461 = vmatmul.f32.gmra.mxu0 %v1460
    %v1462 = vpop.f32.mrf.mxu0
    %v1463 = vadd.f32 %v1334, %v1462
    %v1464 = vand.u32 %v440, 4294901760
    %1465 = vmatmul.f32.gmra.mxu0 %v1464
    %v1466 = vpop.f32.mrf.mxu0
    %v1467 = vadd.f32 %v1338, %v1466
    %v1468 = vand.u32 %v441, 4294901760
    %1469 = vmatmul.f32.gmra.mxu0 %v1468
    %v1470 = vpop.f32.mrf.mxu0
    %v1471 = vadd.f32 %v1342, %v1470
    %v1472 = vand.u32 %v442, 4294901760
    %1473 = vmatmul.f32.gmra.mxu0 %v1472
    %v1474 = vpop.f32.mrf.mxu0
    %v1475 = vadd.f32 %v1346, %v1474
    %v1476 = vand.u32 %v443, 4294901760
    %1477 = vmatmul.f32.gmra.mxu0 %v1476
    %v1478 = vpop.f32.mrf.mxu0
    %v1479 = vadd.f32 %v1350, %v1478
    %v1480 = vand.u32 %v444, 4294901760
    %1481 = vmatmul.f32.gmra.mxu0 %v1480
    %v1482 = vpop.f32.mrf.mxu0
    %v1483 = vadd.f32 %v1354, %v1482
    %v1484 = vand.u32 %v445, 4294901760
    %1485 = vmatmul.f32.gmra.mxu0 %v1484
    %v1486 = vpop.f32.mrf.mxu0
    %v1487 = vadd.f32 %v1358, %v1486
    %v1488 = vand.u32 %v446, 4294901760
    %1489 = vmatmul.f32.gmra.mxu0 %v1488
    %v1490 = vpop.f32.mrf.mxu0
    %v1491 = vadd.f32 %v1362, %v1490
    %v1492 = vand.u32 %v447, 4294901760
    %1493 = vmatmul.f32.gmra.mxu0 %v1492
    %v1494 = vpop.f32.mrf.mxu0
    %v1495 = vadd.f32 %v1366, %v1494
    %v1496 = vand.u32 %v448, 4294901760
    %1497 = vmatmul.f32.gmra.mxu0 %v1496
    %v1498 = vpop.f32.mrf.mxu0
    %v1499 = vadd.f32 %v1370, %v1498
    %v1500 = vand.u32 %v449, 4294901760
    %1501 = vmatmul.f32.gmra.mxu0 %v1500
    %v1502 = vpop.f32.mrf.mxu0
    %v1503 = vadd.f32 %v1374, %v1502
    %1504 = vdwg.mxu0
    %v1505 = vxor.u32 %v1411, 2147483648
    %v1506 = vxor.u32 %v1415, 2147483648
    %v1507 = vxor.u32 %v1419, 2147483648
    %v1508 = vxor.u32 %v1423, 2147483648
    %v1509 = vxor.u32 %v1427, 2147483648
    %v1510 = vxor.u32 %v1431, 2147483648
    %v1511 = vxor.u32 %v1435, 2147483648
    %v1512 = vxor.u32 %v1439, 2147483648
    %v1513 = vxor.u32 %v1443, 2147483648
    %v1514 = vxor.u32 %v1447, 2147483648
    %v1515 = vxor.u32 %v1451, 2147483648
    %v1516 = vxor.u32 %v1455, 2147483648
    %v1517 = vxor.u32 %v1459, 2147483648
    %v1518 = vxor.u32 %v1463, 2147483648
    %v1519 = vxor.u32 %v1467, 2147483648
    %v1520 = vxor.u32 %v1471, 2147483648
    %v1521 = vxor.u32 %v1475, 2147483648
    %v1522 = vxor.u32 %v1479, 2147483648
    %v1523 = vxor.u32 %v1483, 2147483648
    %v1524 = vxor.u32 %v1487, 2147483648
    %v1525 = vxor.u32 %v1491, 2147483648
    %v1526 = vxor.u32 %v1495, 2147483648
    %v1527 = vxor.u32 %v1499, 2147483648
    %v1528 = vxor.u32 %v1503, 2147483648
    %v1529 = vmul.f32 %v1505, 1.442695
    %v1530 = vpow.pop %v1529
    %v1531 = vmul.f32 %v1506, 1.442695
    %v1532 = vpow.pop %v1531
    %v1533 = vmul.f32 %v1507, 1.442695
    %v1534 = vpow.pop %v1533
    %v1535 = vmul.f32 %v1508, 1.442695
    %v1536 = vpow.pop %v1535
    %v1537 = vmul.f32 %v1509, 1.442695
    %v1538 = vpow.pop %v1537
    %v1539 = vmul.f32 %v1510, 1.442695
    %v1540 = vpow.pop %v1539
    %v1541 = vmul.f32 %v1511, 1.442695
    %v1542 = vpow.pop %v1541
    %v1543 = vmul.f32 %v1512, 1.442695
    %v1544 = vpow.pop %v1543
    %v1545 = vmul.f32 %v1513, 1.442695
    %v1546 = vpow.pop %v1545
    %v1547 = vmul.f32 %v1514, 1.442695
    %v1548 = vpow.pop %v1547
    %v1549 = vmul.f32 %v1515, 1.442695
    %v1550 = vpow.pop %v1549
    %v1551 = vmul.f32 %v1516, 1.442695
    %v1552 = vpow.pop %v1551
    %v1553 = vmul.f32 %v1517, 1.442695
    %v1554 = vpow.pop %v1553
    %v1555 = vmul.f32 %v1518, 1.442695
    %v1556 = vpow.pop %v1555
    %v1557 = vmul.f32 %v1519, 1.442695
    %v1558 = vpow.pop %v1557
    %v1559 = vmul.f32 %v1520, 1.442695
    %v1560 = vpow.pop %v1559
    %v1561 = vmul.f32 %v1521, 1.442695
    %v1562 = vpow.pop %v1561
    %v1563 = vmul.f32 %v1522, 1.442695
    %v1564 = vpow.pop %v1563
    %v1565 = vmul.f32 %v1523, 1.442695
    %v1566 = vpow.pop %v1565
    %v1567 = vmul.f32 %v1524, 1.442695
    %v1568 = vpow.pop %v1567
    %v1569 = vmul.f32 %v1525, 1.442695
    %v1570 = vpow.pop %v1569
    %v1571 = vmul.f32 %v1526, 1.442695
    %v1572 = vpow.pop %v1571
    %v1573 = vmul.f32 %v1527, 1.442695
    %v1574 = vpow.pop %v1573
    %v1575 = vmul.f32 %v1528, 1.442695
    %v1576 = vpow.pop %v1575
    %v1577 = vadd.f32 %v1530, 1.0
    %v1578 = vadd.f32 %v1532, 1.0
    %v1579 = vadd.f32 %v1534, 1.0
    %v1580 = vadd.f32 %v1536, 1.0
    %v1581 = vadd.f32 %v1538, 1.0
    %v1582 = vadd.f32 %v1540, 1.0
    %v1583 = vadd.f32 %v1542, 1.0
    %v1584 = vadd.f32 %v1544, 1.0
    %v1585 = vadd.f32 %v1546, 1.0
    %v1586 = vadd.f32 %v1548, 1.0
    %v1587 = vadd.f32 %v1550, 1.0
    %v1588 = vadd.f32 %v1552, 1.0
    %v1589 = vadd.f32 %v1554, 1.0
    %v1590 = vadd.f32 %v1556, 1.0
    %v1591 = vadd.f32 %v1558, 1.0
    %v1592 = vadd.f32 %v1560, 1.0
    %v1593 = vadd.f32 %v1562, 1.0
    %v1594 = vadd.f32 %v1564, 1.0
    %v1595 = vadd.f32 %v1566, 1.0
    %v1596 = vadd.f32 %v1568, 1.0
    %v1597 = vadd.f32 %v1570, 1.0
    %v1598 = vadd.f32 %v1572, 1.0
    %v1599 = vadd.f32 %v1574, 1.0
    %v1600 = vadd.f32 %v1576, 1.0
    %v1601 = vrcp.pop %v1577
    %v1602 = vmul.f32 %v1577, %v1601
    %v1603 = vsub.f32 1.0, %v1602
    %v1604 = vmul.f32 %v1601, %v1603
    %v1605 = vadd.f32 %v1601, %v1604
    %vm1606 = vweird.f32 %v1577
    %vm1607 = vweird.f32 %v1601
    %vm1608 = vmor %vm1606, %vm1607
    %v1609 = vsel %vm1608, %v1601, %v1605
    %v1610 = vand.u32 2147483647, %v1577
    %vm1611 = vcmp.eq.f32.partialorder %v1610, 8.507059e+37
    %v1612 = vand.u32 %v1577, 2147483648
    %v1613 = vor.u32 1.1754944e-38, %v1612
    %v1614 = vsel %vm1611, %v1613, %v1609
    %v1615 = vmul.f32 1.0, %v1614
    %v1616 = vrcp.pop %v1578
    %v1617 = vmul.f32 %v1578, %v1616
    %v1618 = vsub.f32 1.0, %v1617
    %v1619 = vmul.f32 %v1616, %v1618
    %v1620 = vadd.f32 %v1616, %v1619
    %vm1621 = vweird.f32 %v1578
    %vm1622 = vweird.f32 %v1616
    %vm1623 = vmor %vm1621, %vm1622
    %v1624 = vsel %vm1623, %v1616, %v1620
    %v1625 = vand.u32 2147483647, %v1578
    %vm1626 = vcmp.eq.f32.partialorder %v1625, 8.507059e+37
    %v1627 = vand.u32 %v1578, 2147483648
    %v1628 = vor.u32 1.1754944e-38, %v1627
    %v1629 = vsel %vm1626, %v1628, %v1624
    %v1630 = vmul.f32 1.0, %v1629
    %v1631 = vrcp.pop %v1579
    %v1632 = vmul.f32 %v1579, %v1631
    %v1633 = vsub.f32 1.0, %v1632
    %v1634 = vmul.f32 %v1631, %v1633
    %v1635 = vadd.f32 %v1631, %v1634
    %vm1636 = vweird.f32 %v1579
    %vm1637 = vweird.f32 %v1631
    %vm1638 = vmor %vm1636, %vm1637
    %v1639 = vsel %vm1638, %v1631, %v1635
    %v1640 = vand.u32 2147483647, %v1579
    %vm1641 = vcmp.eq.f32.partialorder %v1640, 8.507059e+37
    %v1642 = vand.u32 %v1579, 2147483648
    %v1643 = vor.u32 1.1754944e-38, %v1642
    %v1644 = vsel %vm1641, %v1643, %v1639
    %v1645 = vmul.f32 1.0, %v1644
    %v1646 = vrcp.pop %v1580
    %v1647 = vmul.f32 %v1580, %v1646
    %v1648 = vsub.f32 1.0, %v1647
    %v1649 = vmul.f32 %v1646, %v1648
    %v1650 = vadd.f32 %v1646, %v1649
    %vm1651 = vweird.f32 %v1580
    %vm1652 = vweird.f32 %v1646
    %vm1653 = vmor %vm1651, %vm1652
    %v1654 = vsel %vm1653, %v1646, %v1650
    %v1655 = vand.u32 2147483647, %v1580
    %vm1656 = vcmp.eq.f32.partialorder %v1655, 8.507059e+37
    %v1657 = vand.u32 %v1580, 2147483648
    %v1658 = vor.u32 1.1754944e-38, %v1657
    %v1659 = vsel %vm1656, %v1658, %v1654
    %v1660 = vmul.f32 1.0, %v1659
    %v1661 = vrcp.pop %v1581
    %v1662 = vmul.f32 %v1581, %v1661
    %v1663 = vsub.f32 1.0, %v1662
    %v1664 = vmul.f32 %v1661, %v1663
    %v1665 = vadd.f32 %v1661, %v1664
    %vm1666 = vweird.f32 %v1581
    %vm1667 = vweird.f32 %v1661
    %vm1668 = vmor %vm1666, %vm1667
    %v1669 = vsel %vm1668, %v1661, %v1665
    %v1670 = vand.u32 2147483647, %v1581
    %vm1671 = vcmp.eq.f32.partialorder %v1670, 8.507059e+37
    %v1672 = vand.u32 %v1581, 2147483648
    %v1673 = vor.u32 1.1754944e-38, %v1672
    %v1674 = vsel %vm1671, %v1673, %v1669
    %v1675 = vmul.f32 1.0, %v1674
    %v1676 = vrcp.pop %v1582
    %v1677 = vmul.f32 %v1582, %v1676
    %v1678 = vsub.f32 1.0, %v1677
    %v1679 = vmul.f32 %v1676, %v1678
    %v1680 = vadd.f32 %v1676, %v1679
    %vm1681 = vweird.f32 %v1582
    %vm1682 = vweird.f32 %v1676
    %vm1683 = vmor %vm1681, %vm1682
    %v1684 = vsel %vm1683, %v1676, %v1680
    %v1685 = vand.u32 2147483647, %v1582
    %vm1686 = vcmp.eq.f32.partialorder %v1685, 8.507059e+37
    %v1687 = vand.u32 %v1582, 2147483648
    %v1688 = vor.u32 1.1754944e-38, %v1687
    %v1689 = vsel %vm1686, %v1688, %v1684
    %v1690 = vmul.f32 1.0, %v1689
    %v1691 = vrcp.pop %v1583
    %v1692 = vmul.f32 %v1583, %v1691
    %v1693 = vsub.f32 1.0, %v1692
    %v1694 = vmul.f32 %v1691, %v1693
    %v1695 = vadd.f32 %v1691, %v1694
    %vm1696 = vweird.f32 %v1583
    %vm1697 = vweird.f32 %v1691
    %vm1698 = vmor %vm1696, %vm1697
    %v1699 = vsel %vm1698, %v1691, %v1695
    %v1700 = vand.u32 2147483647, %v1583
    %vm1701 = vcmp.eq.f32.partialorder %v1700, 8.507059e+37
    %v1702 = vand.u32 %v1583, 2147483648
    %v1703 = vor.u32 1.1754944e-38, %v1702
    %v1704 = vsel %vm1701, %v1703, %v1699
    %v1705 = vmul.f32 1.0, %v1704
    %v1706 = vrcp.pop %v1584
    %v1707 = vmul.f32 %v1584, %v1706
    %v1708 = vsub.f32 1.0, %v1707
    %v1709 = vmul.f32 %v1706, %v1708
    %v1710 = vadd.f32 %v1706, %v1709
    %vm1711 = vweird.f32 %v1584
    %vm1712 = vweird.f32 %v1706
    %vm1713 = vmor %vm1711, %vm1712
    %v1714 = vsel %vm1713, %v1706, %v1710
    %v1715 = vand.u32 2147483647, %v1584
    %vm1716 = vcmp.eq.f32.partialorder %v1715, 8.507059e+37
    %v1717 = vand.u32 %v1584, 2147483648
    %v1718 = vor.u32 1.1754944e-38, %v1717
    %v1719 = vsel %vm1716, %v1718, %v1714
    %v1720 = vmul.f32 1.0, %v1719
    %v1721 = vrcp.pop %v1585
    %v1722 = vmul.f32 %v1585, %v1721
    %v1723 = vsub.f32 1.0, %v1722
    %v1724 = vmul.f32 %v1721, %v1723
    %v1725 = vadd.f32 %v1721, %v1724
    %vm1726 = vweird.f32 %v1585
    %vm1727 = vweird.f32 %v1721
    %vm1728 = vmor %vm1726, %vm1727
    %v1729 = vsel %vm1728, %v1721, %v1725
    %v1730 = vand.u32 2147483647, %v1585
    %vm1731 = vcmp.eq.f32.partialorder %v1730, 8.507059e+37
    %v1732 = vand.u32 %v1585, 2147483648
    %v1733 = vor.u32 1.1754944e-38, %v1732
    %v1734 = vsel %vm1731, %v1733, %v1729
    %v1735 = vmul.f32 1.0, %v1734
    %v1736 = vrcp.pop %v1586
    %v1737 = vmul.f32 %v1586, %v1736
    %v1738 = vsub.f32 1.0, %v1737
    %v1739 = vmul.f32 %v1736, %v1738
    %v1740 = vadd.f32 %v1736, %v1739
    %vm1741 = vweird.f32 %v1586
    %vm1742 = vweird.f32 %v1736
    %vm1743 = vmor %vm1741, %vm1742
    %v1744 = vsel %vm1743, %v1736, %v1740
    %v1745 = vand.u32 2147483647, %v1586
    %vm1746 = vcmp.eq.f32.partialorder %v1745, 8.507059e+37
    %v1747 = vand.u32 %v1586, 2147483648
    %v1748 = vor.u32 1.1754944e-38, %v1747
    %v1749 = vsel %vm1746, %v1748, %v1744
    %v1750 = vmul.f32 1.0, %v1749
    %v1751 = vrcp.pop %v1587
    %v1752 = vmul.f32 %v1587, %v1751
    %v1753 = vsub.f32 1.0, %v1752
    %v1754 = vmul.f32 %v1751, %v1753
    %v1755 = vadd.f32 %v1751, %v1754
    %vm1756 = vweird.f32 %v1587
    %vm1757 = vweird.f32 %v1751
    %vm1758 = vmor %vm1756, %vm1757
    %v1759 = vsel %vm1758, %v1751, %v1755
    %v1760 = vand.u32 2147483647, %v1587
    %vm1761 = vcmp.eq.f32.partialorder %v1760, 8.507059e+37
    %v1762 = vand.u32 %v1587, 2147483648
    %v1763 = vor.u32 1.1754944e-38, %v1762
    %v1764 = vsel %vm1761, %v1763, %v1759
    %v1765 = vmul.f32 1.0, %v1764
    %v1766 = vrcp.pop %v1588
    %v1767 = vmul.f32 %v1588, %v1766
    %v1768 = vsub.f32 1.0, %v1767
    %v1769 = vmul.f32 %v1766, %v1768
    %v1770 = vadd.f32 %v1766, %v1769
    %vm1771 = vweird.f32 %v1588
    %vm1772 = vweird.f32 %v1766
    %vm1773 = vmor %vm1771, %vm1772
    %v1774 = vsel %vm1773, %v1766, %v1770
    %v1775 = vand.u32 2147483647, %v1588
    %vm1776 = vcmp.eq.f32.partialorder %v1775, 8.507059e+37
    %v1777 = vand.u32 %v1588, 2147483648
    %v1778 = vor.u32 1.1754944e-38, %v1777
    %v1779 = vsel %vm1776, %v1778, %v1774
    %v1780 = vmul.f32 1.0, %v1779
    %v1781 = vrcp.pop %v1589
    %v1782 = vmul.f32 %v1589, %v1781
    %v1783 = vsub.f32 1.0, %v1782
    %v1784 = vmul.f32 %v1781, %v1783
    %v1785 = vadd.f32 %v1781, %v1784
    %vm1786 = vweird.f32 %v1589
    %vm1787 = vweird.f32 %v1781
    %vm1788 = vmor %vm1786, %vm1787
    %v1789 = vsel %vm1788, %v1781, %v1785
    %v1790 = vand.u32 2147483647, %v1589
    %vm1791 = vcmp.eq.f32.partialorder %v1790, 8.507059e+37
    %v1792 = vand.u32 %v1589, 2147483648
    %v1793 = vor.u32 1.1754944e-38, %v1792
    %v1794 = vsel %vm1791, %v1793, %v1789
    %v1795 = vmul.f32 1.0, %v1794
    %v1796 = vrcp.pop %v1590
    %v1797 = vmul.f32 %v1590, %v1796
    %v1798 = vsub.f32 1.0, %v1797
    %v1799 = vmul.f32 %v1796, %v1798
    %v1800 = vadd.f32 %v1796, %v1799
    %vm1801 = vweird.f32 %v1590
    %vm1802 = vweird.f32 %v1796
    %vm1803 = vmor %vm1801, %vm1802
    %v1804 = vsel %vm1803, %v1796, %v1800
    %v1805 = vand.u32 2147483647, %v1590
    %vm1806 = vcmp.eq.f32.partialorder %v1805, 8.507059e+37
    %v1807 = vand.u32 %v1590, 2147483648
    %v1808 = vor.u32 1.1754944e-38, %v1807
    %v1809 = vsel %vm1806, %v1808, %v1804
    %v1810 = vmul.f32 1.0, %v1809
    %v1811 = vrcp.pop %v1591
    %v1812 = vmul.f32 %v1591, %v1811
    %v1813 = vsub.f32 1.0, %v1812
    %v1814 = vmul.f32 %v1811, %v1813
    %v1815 = vadd.f32 %v1811, %v1814
    %vm1816 = vweird.f32 %v1591
    %vm1817 = vweird.f32 %v1811
    %vm1818 = vmor %vm1816, %vm1817
    %v1819 = vsel %vm1818, %v1811, %v1815
    %v1820 = vand.u32 2147483647, %v1591
    %vm1821 = vcmp.eq.f32.partialorder %v1820, 8.507059e+37
    %v1822 = vand.u32 %v1591, 2147483648
    %v1823 = vor.u32 1.1754944e-38, %v1822
    %v1824 = vsel %vm1821, %v1823, %v1819
    %v1825 = vmul.f32 1.0, %v1824
    %v1826 = vrcp.pop %v1592
    %v1827 = vmul.f32 %v1592, %v1826
    %v1828 = vsub.f32 1.0, %v1827
    %v1829 = vmul.f32 %v1826, %v1828
    %v1830 = vadd.f32 %v1826, %v1829
    %vm1831 = vweird.f32 %v1592
    %vm1832 = vweird.f32 %v1826
    %vm1833 = vmor %vm1831, %vm1832
    %v1834 = vsel %vm1833, %v1826, %v1830
    %v1835 = vand.u32 2147483647, %v1592
    %vm1836 = vcmp.eq.f32.partialorder %v1835, 8.507059e+37
    %v1837 = vand.u32 %v1592, 2147483648
    %v1838 = vor.u32 1.1754944e-38, %v1837
    %v1839 = vsel %vm1836, %v1838, %v1834
    %v1840 = vmul.f32 1.0, %v1839
    %v1841 = vrcp.pop %v1593
    %v1842 = vmul.f32 %v1593, %v1841
    %v1843 = vsub.f32 1.0, %v1842
    %v1844 = vmul.f32 %v1841, %v1843
    %v1845 = vadd.f32 %v1841, %v1844
    %vm1846 = vweird.f32 %v1593
    %vm1847 = vweird.f32 %v1841
    %vm1848 = vmor %vm1846, %vm1847
    %v1849 = vsel %vm1848, %v1841, %v1845
    %v1850 = vand.u32 2147483647, %v1593
    %vm1851 = vcmp.eq.f32.partialorder %v1850, 8.507059e+37
    %v1852 = vand.u32 %v1593, 2147483648
    %v1853 = vor.u32 1.1754944e-38, %v1852
    %v1854 = vsel %vm1851, %v1853, %v1849
    %v1855 = vmul.f32 1.0, %v1854
    %v1856 = vrcp.pop %v1594
    %v1857 = vmul.f32 %v1594, %v1856
    %v1858 = vsub.f32 1.0, %v1857
    %v1859 = vmul.f32 %v1856, %v1858
    %v1860 = vadd.f32 %v1856, %v1859
    %vm1861 = vweird.f32 %v1594
    %vm1862 = vweird.f32 %v1856
    %vm1863 = vmor %vm1861, %vm1862
    %v1864 = vsel %vm1863, %v1856, %v1860
    %v1865 = vand.u32 2147483647, %v1594
    %vm1866 = vcmp.eq.f32.partialorder %v1865, 8.507059e+37
    %v1867 = vand.u32 %v1594, 2147483648
    %v1868 = vor.u32 1.1754944e-38, %v1867
    %v1869 = vsel %vm1866, %v1868, %v1864
    %v1870 = vmul.f32 1.0, %v1869
    %v1871 = vrcp.pop %v1595
    %v1872 = vmul.f32 %v1595, %v1871
    %v1873 = vsub.f32 1.0, %v1872
    %v1874 = vmul.f32 %v1871, %v1873
    %v1875 = vadd.f32 %v1871, %v1874
    %vm1876 = vweird.f32 %v1595
    %vm1877 = vweird.f32 %v1871
    %vm1878 = vmor %vm1876, %vm1877
    %v1879 = vsel %vm1878, %v1871, %v1875
    %v1880 = vand.u32 2147483647, %v1595
    %vm1881 = vcmp.eq.f32.partialorder %v1880, 8.507059e+37
    %v1882 = vand.u32 %v1595, 2147483648
    %v1883 = vor.u32 1.1754944e-38, %v1882
    %v1884 = vsel %vm1881, %v1883, %v1879
    %v1885 = vmul.f32 1.0, %v1884
    %v1886 = vrcp.pop %v1596
    %v1887 = vmul.f32 %v1596, %v1886
    %v1888 = vsub.f32 1.0, %v1887
    %v1889 = vmul.f32 %v1886, %v1888
    %v1890 = vadd.f32 %v1886, %v1889
    %vm1891 = vweird.f32 %v1596
    %vm1892 = vweird.f32 %v1886
    %vm1893 = vmor %vm1891, %vm1892
    %v1894 = vsel %vm1893, %v1886, %v1890
    %v1895 = vand.u32 2147483647, %v1596
    %vm1896 = vcmp.eq.f32.partialorder %v1895, 8.507059e+37
    %v1897 = vand.u32 %v1596, 2147483648
    %v1898 = vor.u32 1.1754944e-38, %v1897
    %v1899 = vsel %vm1896, %v1898, %v1894
    %v1900 = vmul.f32 1.0, %v1899
    %v1901 = vrcp.pop %v1597
    %v1902 = vmul.f32 %v1597, %v1901
    %v1903 = vsub.f32 1.0, %v1902
    %v1904 = vmul.f32 %v1901, %v1903
    %v1905 = vadd.f32 %v1901, %v1904
    %vm1906 = vweird.f32 %v1597
    %vm1907 = vweird.f32 %v1901
    %vm1908 = vmor %vm1906, %vm1907
    %v1909 = vsel %vm1908, %v1901, %v1905
    %v1910 = vand.u32 2147483647, %v1597
    %vm1911 = vcmp.eq.f32.partialorder %v1910, 8.507059e+37
    %v1912 = vand.u32 %v1597, 2147483648
    %v1913 = vor.u32 1.1754944e-38, %v1912
    %v1914 = vsel %vm1911, %v1913, %v1909
    %v1915 = vmul.f32 1.0, %v1914
    %v1916 = vrcp.pop %v1598
    %v1917 = vmul.f32 %v1598, %v1916
    %v1918 = vsub.f32 1.0, %v1917
    %v1919 = vmul.f32 %v1916, %v1918
    %v1920 = vadd.f32 %v1916, %v1919
    %vm1921 = vweird.f32 %v1598
    %vm1922 = vweird.f32 %v1916
    %vm1923 = vmor %vm1921, %vm1922
    %v1924 = vsel %vm1923, %v1916, %v1920
    %v1925 = vand.u32 2147483647, %v1598
    %vm1926 = vcmp.eq.f32.partialorder %v1925, 8.507059e+37
    %v1927 = vand.u32 %v1598, 2147483648
    %v1928 = vor.u32 1.1754944e-38, %v1927
    %v1929 = vsel %vm1926, %v1928, %v1924
    %v1930 = vmul.f32 1.0, %v1929
    %v1931 = vrcp.pop %v1599
    %v1932 = vmul.f32 %v1599, %v1931
    %v1933 = vsub.f32 1.0, %v1932
    %v1934 = vmul.f32 %v1931, %v1933
    %v1935 = vadd.f32 %v1931, %v1934
    %vm1936 = vweird.f32 %v1599
    %vm1937 = vweird.f32 %v1931
    %vm1938 = vmor %vm1936, %vm1937
    %v1939 = vsel %vm1938, %v1931, %v1935
    %v1940 = vand.u32 2147483647, %v1599
    %vm1941 = vcmp.eq.f32.partialorder %v1940, 8.507059e+37
    %v1942 = vand.u32 %v1599, 2147483648
    %v1943 = vor.u32 1.1754944e-38, %v1942
    %v1944 = vsel %vm1941, %v1943, %v1939
    %v1945 = vmul.f32 1.0, %v1944
    %v1946 = vrcp.pop %v1600
    %v1947 = vmul.f32 %v1600, %v1946
    %v1948 = vsub.f32 1.0, %v1947
    %v1949 = vmul.f32 %v1946, %v1948
    %v1950 = vadd.f32 %v1946, %v1949
    %vm1951 = vweird.f32 %v1600
    %vm1952 = vweird.f32 %v1946
    %vm1953 = vmor %vm1951, %vm1952
    %v1954 = vsel %vm1953, %v1946, %v1950
    %v1955 = vand.u32 2147483647, %v1600
    %vm1956 = vcmp.eq.f32.partialorder %v1955, 8.507059e+37
    %v1957 = vand.u32 %v1600, 2147483648
    %v1958 = vor.u32 1.1754944e-38, %v1957
    %v1959 = vsel %vm1956, %v1958, %v1954
    %v1960 = vmul.f32 1.0, %v1959
    %v1961 = vmul.f32 %v1411, %v1615
    %v1962 = vmul.f32 %v1415, %v1630
    %v1963 = vmul.f32 %v1419, %v1645
    %v1964 = vmul.f32 %v1423, %v1660
    %v1965 = vmul.f32 %v1427, %v1675
    %v1966 = vmul.f32 %v1431, %v1690
    %v1967 = vmul.f32 %v1435, %v1705
    %v1968 = vmul.f32 %v1439, %v1720
    %v1969 = vmul.f32 %v1443, %v1735
    %v1970 = vmul.f32 %v1447, %v1750
    %v1971 = vmul.f32 %v1451, %v1765
    %v1972 = vmul.f32 %v1455, %v1780
    %v1973 = vmul.f32 %v1459, %v1795
    %v1974 = vmul.f32 %v1463, %v1810
    %v1975 = vmul.f32 %v1467, %v1825
    %v1976 = vmul.f32 %v1471, %v1840
    %v1977 = vmul.f32 %v1475, %v1855
    %v1978 = vmul.f32 %v1479, %v1870
    %v1979 = vmul.f32 %v1483, %v1885
    %v1980 = vmul.f32 %v1487, %v1900
    %v1981 = vmul.f32 %v1491, %v1915
    %v1982 = vmul.f32 %v1495, %v1930
    %v1983 = vmul.f32 %v1499, %v1945
    %v1984 = vmul.f32 %v1503, %v1960
    %v1985 = vperm.slane %v74, 0
    %v1987 = vsel %vm77, %v1961, 0
    %v1990 = vsel %vm77, %v1962, 0
    %v1993 = vsel %vm77, %v1963, 0
    %v1996 = vsel %vm77, %v1964, 0
    %v1999 = vsel %vm77, %v1965, 0
    %v2002 = vsel %vm77, %v1966, 0
    %v2005 = vsel %vm77, %v1967, 0
    %v2008 = vsel %vm77, %v1968, 0
    %v2011 = vsel %vm77, %v1969, 0
    %v2014 = vsel %vm77, %v1970, 0
    %v2017 = vsel %vm77, %v1971, 0
    %v2020 = vsel %vm77, %v1972, 0
    %v2023 = vsel %vm77, %v1973, 0
    %v2026 = vsel %vm77, %v1974, 0
    %v2029 = vsel %vm77, %v1975, 0
    %v2032 = vsel %vm77, %v1976, 0
    %v2035 = vsel %vm77, %v1977, 0
    %v2038 = vsel %vm77, %v1978, 0
    %v2041 = vsel %vm77, %v1979, 0
    %v2044 = vsel %vm77, %v1980, 0
    %v2047 = vsel %vm77, %v1981, 0
    %v2050 = vsel %vm77, %v1982, 0
    %v2053 = vsel %vm77, %v1983, 0
    %v2056 = vsel %vm77, %v1984, 0
    %2058 = vmatpush.msra.mxu0 0.0
    %2059 = vmatpush.msra.mxu0 0.0
    %2060 = vmatpush.msra.mxu0 0.0
    %2061 = vmatpush.msra.mxu0 0.0
    %2062 = vmatpush.msra.mxu0 0.0
    %2063 = vmatpush.msra.mxu0 0.0
    %2064 = vmatpush.msra.mxu0 0.0
    %2065 = vmatpush.msra.mxu0 0.0
    %2066 = vmatpush.msra.mxu0 0.0
    %2067 = vmatpush.msra.mxu0 0.0
    %2068 = vmatpush.msra.mxu0 0.0
    %2069 = vmatpush.msra.mxu0 0.0
    %2070 = vmatpush.msra.mxu0 %v60
    %2071 = vmatpush.msra.mxu0 %v59
    %2072 = vmatpush.msra.mxu0 %v58
    %2073 = vmatpush.msra.mxu0 %v57
    %2074 = vmatmul.f32.gmra.mxu0 %v1987
    %v2075 = vpop.f32.mrf.mxu0
    %v2076 = vadd.f32 %v1985, %v2075
    %2077 = vmatmul.f32.gmra.mxu0 %v1990
    %v2078 = vpop.f32.mrf.mxu0
    %v2079 = vadd.f32 %v1985, %v2078
    %2080 = vmatmul.f32.gmra.mxu0 %v1993
    %v2081 = vpop.f32.mrf.mxu0
    %v2082 = vadd.f32 %v1985, %v2081
    %2083 = vmatmul.f32.gmra.mxu0 %v1996
    %v2084 = vpop.f32.mrf.mxu0
    %v2085 = vadd.f32 %v1985, %v2084
    %2086 = vmatmul.f32.gmra.mxu0 %v1999
    %v2087 = vpop.f32.mrf.mxu0
    %v2088 = vadd.f32 %v1985, %v2087
    %2089 = vmatmul.f32.gmra.mxu0 %v2002
    %v2090 = vpop.f32.mrf.mxu0
    %v2091 = vadd.f32 %v1985, %v2090
    %2092 = vmatmul.f32.gmra.mxu0 %v2005
    %v2093 = vpop.f32.mrf.mxu0
    %v2094 = vadd.f32 %v1985, %v2093
    %2095 = vmatmul.f32.gmra.mxu0 %v2008
    %v2096 = vpop.f32.mrf.mxu0
    %v2097 = vadd.f32 %v1985, %v2096
    %2098 = vmatmul.f32.gmra.mxu0 %v2011
    %v2099 = vpop.f32.mrf.mxu0
    %v2100 = vadd.f32 %v1985, %v2099
    %2101 = vmatmul.f32.gmra.mxu0 %v2014
    %v2102 = vpop.f32.mrf.mxu0
    %v2103 = vadd.f32 %v1985, %v2102
    %2104 = vmatmul.f32.gmra.mxu0 %v2017
    %v2105 = vpop.f32.mrf.mxu0
    %v2106 = vadd.f32 %v1985, %v2105
    %2107 = vmatmul.f32.gmra.mxu0 %v2020
    %v2108 = vpop.f32.mrf.mxu0
    %v2109 = vadd.f32 %v1985, %v2108
    %2110 = vmatmul.f32.gmra.mxu0 %v2023
    %v2111 = vpop.f32.mrf.mxu0
    %v2112 = vadd.f32 %v1985, %v2111
    %2113 = vmatmul.f32.gmra.mxu0 %v2026
    %v2114 = vpop.f32.mrf.mxu0
    %v2115 = vadd.f32 %v1985, %v2114
    %2116 = vmatmul.f32.gmra.mxu0 %v2029
    %v2117 = vpop.f32.mrf.mxu0
    %v2118 = vadd.f32 %v1985, %v2117
    %2119 = vmatmul.f32.gmra.mxu0 %v2032
    %v2120 = vpop.f32.mrf.mxu0
    %v2121 = vadd.f32 %v1985, %v2120
    %2122 = vmatmul.f32.gmra.mxu0 %v2035
    %v2123 = vpop.f32.mrf.mxu0
    %v2124 = vadd.f32 %v1985, %v2123
    %2125 = vmatmul.f32.gmra.mxu0 %v2038
    %v2126 = vpop.f32.mrf.mxu0
    %v2127 = vadd.f32 %v1985, %v2126
    %2128 = vmatmul.f32.gmra.mxu0 %v2041
    %v2129 = vpop.f32.mrf.mxu0
    %v2130 = vadd.f32 %v1985, %v2129
    %2131 = vmatmul.f32.gmra.mxu0 %v2044
    %v2132 = vpop.f32.mrf.mxu0
    %v2133 = vadd.f32 %v1985, %v2132
    %2134 = vmatmul.f32.gmra.mxu0 %v2047
    %v2135 = vpop.f32.mrf.mxu0
    %v2136 = vadd.f32 %v1985, %v2135
    %2137 = vmatmul.f32.gmra.mxu0 %v2050
    %v2138 = vpop.f32.mrf.mxu0
    %v2139 = vadd.f32 %v1985, %v2138
    %2140 = vmatmul.f32.gmra.mxu0 %v2053
    %v2141 = vpop.f32.mrf.mxu0
    %v2142 = vadd.f32 %v1985, %v2141
    %2143 = vmatmul.f32.gmra.mxu0 %v2056
    %v2144 = vpop.f32.mrf.mxu0
    %v2145 = vadd.f32 %v1985, %v2144
    %2146 = vdwg.mxu0
    %v2147 = vxor.u32 %v2076, 2147483648
    %v2148 = vxor.u32 %v2079, 2147483648
    %v2149 = vxor.u32 %v2082, 2147483648
    %v2150 = vxor.u32 %v2085, 2147483648
    %v2151 = vxor.u32 %v2088, 2147483648
    %v2152 = vxor.u32 %v2091, 2147483648
    %v2153 = vxor.u32 %v2094, 2147483648
    %v2154 = vxor.u32 %v2097, 2147483648
    %v2155 = vxor.u32 %v2100, 2147483648
    %v2156 = vxor.u32 %v2103, 2147483648
    %v2157 = vxor.u32 %v2106, 2147483648
    %v2158 = vxor.u32 %v2109, 2147483648
    %v2159 = vxor.u32 %v2112, 2147483648
    %v2160 = vxor.u32 %v2115, 2147483648
    %v2161 = vxor.u32 %v2118, 2147483648
    %v2162 = vxor.u32 %v2121, 2147483648
    %v2163 = vxor.u32 %v2124, 2147483648
    %v2164 = vxor.u32 %v2127, 2147483648
    %v2165 = vxor.u32 %v2130, 2147483648
    %v2166 = vxor.u32 %v2133, 2147483648
    %v2167 = vxor.u32 %v2136, 2147483648
    %v2168 = vxor.u32 %v2139, 2147483648
    %v2169 = vxor.u32 %v2142, 2147483648
    %v2170 = vxor.u32 %v2145, 2147483648
    %v2171 = vmul.f32 %v2147, 1.442695
    %v2172 = vpow.pop %v2171
    %v2173 = vmul.f32 %v2148, 1.442695
    %v2174 = vpow.pop %v2173
    %v2175 = vmul.f32 %v2149, 1.442695
    %v2176 = vpow.pop %v2175
    %v2177 = vmul.f32 %v2150, 1.442695
    %v2178 = vpow.pop %v2177
    %v2179 = vmul.f32 %v2151, 1.442695
    %v2180 = vpow.pop %v2179
    %v2181 = vmul.f32 %v2152, 1.442695
    %v2182 = vpow.pop %v2181
    %v2183 = vmul.f32 %v2153, 1.442695
    %v2184 = vpow.pop %v2183
    %v2185 = vmul.f32 %v2154, 1.442695
    %v2186 = vpow.pop %v2185
    %v2187 = vmul.f32 %v2155, 1.442695
    %v2188 = vpow.pop %v2187
    %v2189 = vmul.f32 %v2156, 1.442695
    %v2190 = vpow.pop %v2189
    %v2191 = vmul.f32 %v2157, 1.442695
    %v2192 = vpow.pop %v2191
    %v2193 = vmul.f32 %v2158, 1.442695
    %v2194 = vpow.pop %v2193
    %v2195 = vmul.f32 %v2159, 1.442695
    %v2196 = vpow.pop %v2195
    %v2197 = vmul.f32 %v2160, 1.442695
    %v2198 = vpow.pop %v2197
    %v2199 = vmul.f32 %v2161, 1.442695
    %v2200 = vpow.pop %v2199
    %v2201 = vmul.f32 %v2162, 1.442695
    %v2202 = vpow.pop %v2201
    %v2203 = vmul.f32 %v2163, 1.442695
    %v2204 = vpow.pop %v2203
    %v2205 = vmul.f32 %v2164, 1.442695
    %v2206 = vpow.pop %v2205
    %v2207 = vmul.f32 %v2165, 1.442695
    %v2208 = vpow.pop %v2207
    %v2209 = vmul.f32 %v2166, 1.442695
    %v2210 = vpow.pop %v2209
    %v2211 = vmul.f32 %v2167, 1.442695
    %v2212 = vpow.pop %v2211
    %v2213 = vmul.f32 %v2168, 1.442695
    %v2214 = vpow.pop %v2213
    %v2215 = vmul.f32 %v2169, 1.442695
    %v2216 = vpow.pop %v2215
    %v2217 = vmul.f32 %v2170, 1.442695
    %v2218 = vpow.pop %v2217
    %v2219 = vadd.f32 %v2172, 1.0
    %v2220 = vadd.f32 %v2174, 1.0
    %v2221 = vadd.f32 %v2176, 1.0
    %v2222 = vadd.f32 %v2178, 1.0
    %v2223 = vadd.f32 %v2180, 1.0
    %v2224 = vadd.f32 %v2182, 1.0
    %v2225 = vadd.f32 %v2184, 1.0
    %v2226 = vadd.f32 %v2186, 1.0
    %v2227 = vadd.f32 %v2188, 1.0
    %v2228 = vadd.f32 %v2190, 1.0
    %v2229 = vadd.f32 %v2192, 1.0
    %v2230 = vadd.f32 %v2194, 1.0
    %v2231 = vadd.f32 %v2196, 1.0
    %v2232 = vadd.f32 %v2198, 1.0
    %v2233 = vadd.f32 %v2200, 1.0
    %v2234 = vadd.f32 %v2202, 1.0
    %v2235 = vadd.f32 %v2204, 1.0
    %v2236 = vadd.f32 %v2206, 1.0
    %v2237 = vadd.f32 %v2208, 1.0
    %v2238 = vadd.f32 %v2210, 1.0
    %v2239 = vadd.f32 %v2212, 1.0
    %v2240 = vadd.f32 %v2214, 1.0
    %v2241 = vadd.f32 %v2216, 1.0
    %v2242 = vadd.f32 %v2218, 1.0
    %v2243 = vrcp.pop %v2219
    %v2244 = vmul.f32 %v2219, %v2243
    %v2245 = vsub.f32 1.0, %v2244
    %v2246 = vmul.f32 %v2243, %v2245
    %v2247 = vadd.f32 %v2243, %v2246
    %vm2248 = vweird.f32 %v2219
    %vm2249 = vweird.f32 %v2243
    %vm2250 = vmor %vm2248, %vm2249
    %v2251 = vsel %vm2250, %v2243, %v2247
    %v2252 = vand.u32 2147483647, %v2219
    %vm2253 = vcmp.eq.f32.partialorder %v2252, 8.507059e+37
    %v2254 = vand.u32 %v2219, 2147483648
    %v2255 = vor.u32 1.1754944e-38, %v2254
    %v2256 = vsel %vm2253, %v2255, %v2251
    %v2257 = vmul.f32 1.0, %v2256
    %v2258 = vrcp.pop %v2220
    %v2259 = vmul.f32 %v2220, %v2258
    %v2260 = vsub.f32 1.0, %v2259
    %v2261 = vmul.f32 %v2258, %v2260
    %v2262 = vadd.f32 %v2258, %v2261
    %vm2263 = vweird.f32 %v2220
    %vm2264 = vweird.f32 %v2258
    %vm2265 = vmor %vm2263, %vm2264
    %v2266 = vsel %vm2265, %v2258, %v2262
    %v2267 = vand.u32 2147483647, %v2220
    %vm2268 = vcmp.eq.f32.partialorder %v2267, 8.507059e+37
    %v2269 = vand.u32 %v2220, 2147483648
    %v2270 = vor.u32 1.1754944e-38, %v2269
    %v2271 = vsel %vm2268, %v2270, %v2266
    %v2272 = vmul.f32 1.0, %v2271
    %v2273 = vrcp.pop %v2221
    %v2274 = vmul.f32 %v2221, %v2273
    %v2275 = vsub.f32 1.0, %v2274
    %v2276 = vmul.f32 %v2273, %v2275
    %v2277 = vadd.f32 %v2273, %v2276
    %vm2278 = vweird.f32 %v2221
    %vm2279 = vweird.f32 %v2273
    %vm2280 = vmor %vm2278, %vm2279
    %v2281 = vsel %vm2280, %v2273, %v2277
    %v2282 = vand.u32 2147483647, %v2221
    %vm2283 = vcmp.eq.f32.partialorder %v2282, 8.507059e+37
    %v2284 = vand.u32 %v2221, 2147483648
    %v2285 = vor.u32 1.1754944e-38, %v2284
    %v2286 = vsel %vm2283, %v2285, %v2281
    %v2287 = vmul.f32 1.0, %v2286
    %v2288 = vrcp.pop %v2222
    %v2289 = vmul.f32 %v2222, %v2288
    %v2290 = vsub.f32 1.0, %v2289
    %v2291 = vmul.f32 %v2288, %v2290
    %v2292 = vadd.f32 %v2288, %v2291
    %vm2293 = vweird.f32 %v2222
    %vm2294 = vweird.f32 %v2288
    %vm2295 = vmor %vm2293, %vm2294
    %v2296 = vsel %vm2295, %v2288, %v2292
    %v2297 = vand.u32 2147483647, %v2222
    %vm2298 = vcmp.eq.f32.partialorder %v2297, 8.507059e+37
    %v2299 = vand.u32 %v2222, 2147483648
    %v2300 = vor.u32 1.1754944e-38, %v2299
    %v2301 = vsel %vm2298, %v2300, %v2296
    %v2302 = vmul.f32 1.0, %v2301
    %v2303 = vrcp.pop %v2223
    %v2304 = vmul.f32 %v2223, %v2303
    %v2305 = vsub.f32 1.0, %v2304
    %v2306 = vmul.f32 %v2303, %v2305
    %v2307 = vadd.f32 %v2303, %v2306
    %vm2308 = vweird.f32 %v2223
    %vm2309 = vweird.f32 %v2303
    %vm2310 = vmor %vm2308, %vm2309
    %v2311 = vsel %vm2310, %v2303, %v2307
    %v2312 = vand.u32 2147483647, %v2223
    %vm2313 = vcmp.eq.f32.partialorder %v2312, 8.507059e+37
    %v2314 = vand.u32 %v2223, 2147483648
    %v2315 = vor.u32 1.1754944e-38, %v2314
    %v2316 = vsel %vm2313, %v2315, %v2311
    %v2317 = vmul.f32 1.0, %v2316
    %v2318 = vrcp.pop %v2224
    %v2319 = vmul.f32 %v2224, %v2318
    %v2320 = vsub.f32 1.0, %v2319
    %v2321 = vmul.f32 %v2318, %v2320
    %v2322 = vadd.f32 %v2318, %v2321
    %vm2323 = vweird.f32 %v2224
    %vm2324 = vweird.f32 %v2318
    %vm2325 = vmor %vm2323, %vm2324
    %v2326 = vsel %vm2325, %v2318, %v2322
    %v2327 = vand.u32 2147483647, %v2224
    %vm2328 = vcmp.eq.f32.partialorder %v2327, 8.507059e+37
    %v2329 = vand.u32 %v2224, 2147483648
    %v2330 = vor.u32 1.1754944e-38, %v2329
    %v2331 = vsel %vm2328, %v2330, %v2326
    %v2332 = vmul.f32 1.0, %v2331
    %v2333 = vrcp.pop %v2225
    %v2334 = vmul.f32 %v2225, %v2333
    %v2335 = vsub.f32 1.0, %v2334
    %v2336 = vmul.f32 %v2333, %v2335
    %v2337 = vadd.f32 %v2333, %v2336
    %vm2338 = vweird.f32 %v2225
    %vm2339 = vweird.f32 %v2333
    %vm2340 = vmor %vm2338, %vm2339
    %v2341 = vsel %vm2340, %v2333, %v2337
    %v2342 = vand.u32 2147483647, %v2225
    %vm2343 = vcmp.eq.f32.partialorder %v2342, 8.507059e+37
    %v2344 = vand.u32 %v2225, 2147483648
    %v2345 = vor.u32 1.1754944e-38, %v2344
    %v2346 = vsel %vm2343, %v2345, %v2341
    %v2347 = vmul.f32 1.0, %v2346
    %v2348 = vrcp.pop %v2226
    %v2349 = vmul.f32 %v2226, %v2348
    %v2350 = vsub.f32 1.0, %v2349
    %v2351 = vmul.f32 %v2348, %v2350
    %v2352 = vadd.f32 %v2348, %v2351
    %vm2353 = vweird.f32 %v2226
    %vm2354 = vweird.f32 %v2348
    %vm2355 = vmor %vm2353, %vm2354
    %v2356 = vsel %vm2355, %v2348, %v2352
    %v2357 = vand.u32 2147483647, %v2226
    %vm2358 = vcmp.eq.f32.partialorder %v2357, 8.507059e+37
    %v2359 = vand.u32 %v2226, 2147483648
    %v2360 = vor.u32 1.1754944e-38, %v2359
    %v2361 = vsel %vm2358, %v2360, %v2356
    %v2362 = vmul.f32 1.0, %v2361
    %v2363 = vrcp.pop %v2227
    %v2364 = vmul.f32 %v2227, %v2363
    %v2365 = vsub.f32 1.0, %v2364
    %v2366 = vmul.f32 %v2363, %v2365
    %v2367 = vadd.f32 %v2363, %v2366
    %vm2368 = vweird.f32 %v2227
    %vm2369 = vweird.f32 %v2363
    %vm2370 = vmor %vm2368, %vm2369
    %v2371 = vsel %vm2370, %v2363, %v2367
    %v2372 = vand.u32 2147483647, %v2227
    %vm2373 = vcmp.eq.f32.partialorder %v2372, 8.507059e+37
    %v2374 = vand.u32 %v2227, 2147483648
    %v2375 = vor.u32 1.1754944e-38, %v2374
    %v2376 = vsel %vm2373, %v2375, %v2371
    %v2377 = vmul.f32 1.0, %v2376
    %v2378 = vrcp.pop %v2228
    %v2379 = vmul.f32 %v2228, %v2378
    %v2380 = vsub.f32 1.0, %v2379
    %v2381 = vmul.f32 %v2378, %v2380
    %v2382 = vadd.f32 %v2378, %v2381
    %vm2383 = vweird.f32 %v2228
    %vm2384 = vweird.f32 %v2378
    %vm2385 = vmor %vm2383, %vm2384
    %v2386 = vsel %vm2385, %v2378, %v2382
    %v2387 = vand.u32 2147483647, %v2228
    %vm2388 = vcmp.eq.f32.partialorder %v2387, 8.507059e+37
    %v2389 = vand.u32 %v2228, 2147483648
    %v2390 = vor.u32 1.1754944e-38, %v2389
    %v2391 = vsel %vm2388, %v2390, %v2386
    %v2392 = vmul.f32 1.0, %v2391
    %v2393 = vrcp.pop %v2229
    %v2394 = vmul.f32 %v2229, %v2393
    %v2395 = vsub.f32 1.0, %v2394
    %v2396 = vmul.f32 %v2393, %v2395
    %v2397 = vadd.f32 %v2393, %v2396
    %vm2398 = vweird.f32 %v2229
    %vm2399 = vweird.f32 %v2393
    %vm2400 = vmor %vm2398, %vm2399
    %v2401 = vsel %vm2400, %v2393, %v2397
    %v2402 = vand.u32 2147483647, %v2229
    %vm2403 = vcmp.eq.f32.partialorder %v2402, 8.507059e+37
    %v2404 = vand.u32 %v2229, 2147483648
    %v2405 = vor.u32 1.1754944e-38, %v2404
    %v2406 = vsel %vm2403, %v2405, %v2401
    %v2407 = vmul.f32 1.0, %v2406
    %v2408 = vrcp.pop %v2230
    %v2409 = vmul.f32 %v2230, %v2408
    %v2410 = vsub.f32 1.0, %v2409
    %v2411 = vmul.f32 %v2408, %v2410
    %v2412 = vadd.f32 %v2408, %v2411
    %vm2413 = vweird.f32 %v2230
    %vm2414 = vweird.f32 %v2408
    %vm2415 = vmor %vm2413, %vm2414
    %v2416 = vsel %vm2415, %v2408, %v2412
    %v2417 = vand.u32 2147483647, %v2230
    %vm2418 = vcmp.eq.f32.partialorder %v2417, 8.507059e+37
    %v2419 = vand.u32 %v2230, 2147483648
    %v2420 = vor.u32 1.1754944e-38, %v2419
    %v2421 = vsel %vm2418, %v2420, %v2416
    %v2422 = vmul.f32 1.0, %v2421
    %v2423 = vrcp.pop %v2231
    %v2424 = vmul.f32 %v2231, %v2423
    %v2425 = vsub.f32 1.0, %v2424
    %v2426 = vmul.f32 %v2423, %v2425
    %v2427 = vadd.f32 %v2423, %v2426
    %vm2428 = vweird.f32 %v2231
    %vm2429 = vweird.f32 %v2423
    %vm2430 = vmor %vm2428, %vm2429
    %v2431 = vsel %vm2430, %v2423, %v2427
    %v2432 = vand.u32 2147483647, %v2231
    %vm2433 = vcmp.eq.f32.partialorder %v2432, 8.507059e+37
    %v2434 = vand.u32 %v2231, 2147483648
    %v2435 = vor.u32 1.1754944e-38, %v2434
    %v2436 = vsel %vm2433, %v2435, %v2431
    %v2437 = vmul.f32 1.0, %v2436
    %v2438 = vrcp.pop %v2232
    %v2439 = vmul.f32 %v2232, %v2438
    %v2440 = vsub.f32 1.0, %v2439
    %v2441 = vmul.f32 %v2438, %v2440
    %v2442 = vadd.f32 %v2438, %v2441
    %vm2443 = vweird.f32 %v2232
    %vm2444 = vweird.f32 %v2438
    %vm2445 = vmor %vm2443, %vm2444
    %v2446 = vsel %vm2445, %v2438, %v2442
    %v2447 = vand.u32 2147483647, %v2232
    %vm2448 = vcmp.eq.f32.partialorder %v2447, 8.507059e+37
    %v2449 = vand.u32 %v2232, 2147483648
    %v2450 = vor.u32 1.1754944e-38, %v2449
    %v2451 = vsel %vm2448, %v2450, %v2446
    %v2452 = vmul.f32 1.0, %v2451
    %v2453 = vrcp.pop %v2233
    %v2454 = vmul.f32 %v2233, %v2453
    %v2455 = vsub.f32 1.0, %v2454
    %v2456 = vmul.f32 %v2453, %v2455
    %v2457 = vadd.f32 %v2453, %v2456
    %vm2458 = vweird.f32 %v2233
    %vm2459 = vweird.f32 %v2453
    %vm2460 = vmor %vm2458, %vm2459
    %v2461 = vsel %vm2460, %v2453, %v2457
    %v2462 = vand.u32 2147483647, %v2233
    %vm2463 = vcmp.eq.f32.partialorder %v2462, 8.507059e+37
    %v2464 = vand.u32 %v2233, 2147483648
    %v2465 = vor.u32 1.1754944e-38, %v2464
    %v2466 = vsel %vm2463, %v2465, %v2461
    %v2467 = vmul.f32 1.0, %v2466
    %v2468 = vrcp.pop %v2234
    %v2469 = vmul.f32 %v2234, %v2468
    %v2470 = vsub.f32 1.0, %v2469
    %v2471 = vmul.f32 %v2468, %v2470
    %v2472 = vadd.f32 %v2468, %v2471
    %vm2473 = vweird.f32 %v2234
    %vm2474 = vweird.f32 %v2468
    %vm2475 = vmor %vm2473, %vm2474
    %v2476 = vsel %vm2475, %v2468, %v2472
    %v2477 = vand.u32 2147483647, %v2234
    %vm2478 = vcmp.eq.f32.partialorder %v2477, 8.507059e+37
    %v2479 = vand.u32 %v2234, 2147483648
    %v2480 = vor.u32 1.1754944e-38, %v2479
    %v2481 = vsel %vm2478, %v2480, %v2476
    %v2482 = vmul.f32 1.0, %v2481
    %v2483 = vrcp.pop %v2235
    %v2484 = vmul.f32 %v2235, %v2483
    %v2485 = vsub.f32 1.0, %v2484
    %v2486 = vmul.f32 %v2483, %v2485
    %v2487 = vadd.f32 %v2483, %v2486
    %vm2488 = vweird.f32 %v2235
    %vm2489 = vweird.f32 %v2483
    %vm2490 = vmor %vm2488, %vm2489
    %v2491 = vsel %vm2490, %v2483, %v2487
    %v2492 = vand.u32 2147483647, %v2235
    %vm2493 = vcmp.eq.f32.partialorder %v2492, 8.507059e+37
    %v2494 = vand.u32 %v2235, 2147483648
    %v2495 = vor.u32 1.1754944e-38, %v2494
    %v2496 = vsel %vm2493, %v2495, %v2491
    %v2497 = vmul.f32 1.0, %v2496
    %v2498 = vrcp.pop %v2236
    %v2499 = vmul.f32 %v2236, %v2498
    %v2500 = vsub.f32 1.0, %v2499
    %v2501 = vmul.f32 %v2498, %v2500
    %v2502 = vadd.f32 %v2498, %v2501
    %vm2503 = vweird.f32 %v2236
    %vm2504 = vweird.f32 %v2498
    %vm2505 = vmor %vm2503, %vm2504
    %v2506 = vsel %vm2505, %v2498, %v2502
    %v2507 = vand.u32 2147483647, %v2236
    %vm2508 = vcmp.eq.f32.partialorder %v2507, 8.507059e+37
    %v2509 = vand.u32 %v2236, 2147483648
    %v2510 = vor.u32 1.1754944e-38, %v2509
    %v2511 = vsel %vm2508, %v2510, %v2506
    %v2512 = vmul.f32 1.0, %v2511
    %v2513 = vrcp.pop %v2237
    %v2514 = vmul.f32 %v2237, %v2513
    %v2515 = vsub.f32 1.0, %v2514
    %v2516 = vmul.f32 %v2513, %v2515
    %v2517 = vadd.f32 %v2513, %v2516
    %vm2518 = vweird.f32 %v2237
    %vm2519 = vweird.f32 %v2513
    %vm2520 = vmor %vm2518, %vm2519
    %v2521 = vsel %vm2520, %v2513, %v2517
    %v2522 = vand.u32 2147483647, %v2237
    %vm2523 = vcmp.eq.f32.partialorder %v2522, 8.507059e+37
    %v2524 = vand.u32 %v2237, 2147483648
    %v2525 = vor.u32 1.1754944e-38, %v2524
    %v2526 = vsel %vm2523, %v2525, %v2521
    %v2527 = vmul.f32 1.0, %v2526
    %v2528 = vrcp.pop %v2238
    %v2529 = vmul.f32 %v2238, %v2528
    %v2530 = vsub.f32 1.0, %v2529
    %v2531 = vmul.f32 %v2528, %v2530
    %v2532 = vadd.f32 %v2528, %v2531
    %vm2533 = vweird.f32 %v2238
    %vm2534 = vweird.f32 %v2528
    %vm2535 = vmor %vm2533, %vm2534
    %v2536 = vsel %vm2535, %v2528, %v2532
    %v2537 = vand.u32 2147483647, %v2238
    %vm2538 = vcmp.eq.f32.partialorder %v2537, 8.507059e+37
    %v2539 = vand.u32 %v2238, 2147483648
    %v2540 = vor.u32 1.1754944e-38, %v2539
    %v2541 = vsel %vm2538, %v2540, %v2536
    %v2542 = vmul.f32 1.0, %v2541
    %v2543 = vrcp.pop %v2239
    %v2544 = vmul.f32 %v2239, %v2543
    %v2545 = vsub.f32 1.0, %v2544
    %v2546 = vmul.f32 %v2543, %v2545
    %v2547 = vadd.f32 %v2543, %v2546
    %vm2548 = vweird.f32 %v2239
    %vm2549 = vweird.f32 %v2543
    %vm2550 = vmor %vm2548, %vm2549
    %v2551 = vsel %vm2550, %v2543, %v2547
    %v2552 = vand.u32 2147483647, %v2239
    %vm2553 = vcmp.eq.f32.partialorder %v2552, 8.507059e+37
    %v2554 = vand.u32 %v2239, 2147483648
    %v2555 = vor.u32 1.1754944e-38, %v2554
    %v2556 = vsel %vm2553, %v2555, %v2551
    %v2557 = vmul.f32 1.0, %v2556
    %v2558 = vrcp.pop %v2240
    %v2559 = vmul.f32 %v2240, %v2558
    %v2560 = vsub.f32 1.0, %v2559
    %v2561 = vmul.f32 %v2558, %v2560
    %v2562 = vadd.f32 %v2558, %v2561
    %vm2563 = vweird.f32 %v2240
    %vm2564 = vweird.f32 %v2558
    %vm2565 = vmor %vm2563, %vm2564
    %v2566 = vsel %vm2565, %v2558, %v2562
    %v2567 = vand.u32 2147483647, %v2240
    %vm2568 = vcmp.eq.f32.partialorder %v2567, 8.507059e+37
    %v2569 = vand.u32 %v2240, 2147483648
    %v2570 = vor.u32 1.1754944e-38, %v2569
    %v2571 = vsel %vm2568, %v2570, %v2566
    %v2572 = vmul.f32 1.0, %v2571
    %v2573 = vrcp.pop %v2241
    %v2574 = vmul.f32 %v2241, %v2573
    %v2575 = vsub.f32 1.0, %v2574
    %v2576 = vmul.f32 %v2573, %v2575
    %v2577 = vadd.f32 %v2573, %v2576
    %vm2578 = vweird.f32 %v2241
    %vm2579 = vweird.f32 %v2573
    %vm2580 = vmor %vm2578, %vm2579
    %v2581 = vsel %vm2580, %v2573, %v2577
    %v2582 = vand.u32 2147483647, %v2241
    %vm2583 = vcmp.eq.f32.partialorder %v2582, 8.507059e+37
    %v2584 = vand.u32 %v2241, 2147483648
    %v2585 = vor.u32 1.1754944e-38, %v2584
    %v2586 = vsel %vm2583, %v2585, %v2581
    %v2587 = vmul.f32 1.0, %v2586
    %v2588 = vrcp.pop %v2242
    %v2589 = vmul.f32 %v2242, %v2588
    %v2590 = vsub.f32 1.0, %v2589
    %v2591 = vmul.f32 %v2588, %v2590
    %v2592 = vadd.f32 %v2588, %v2591
    %vm2593 = vweird.f32 %v2242
    %vm2594 = vweird.f32 %v2588
    %vm2595 = vmor %vm2593, %vm2594
    %v2596 = vsel %vm2595, %v2588, %v2592
    %v2597 = vand.u32 2147483647, %v2242
    %vm2598 = vcmp.eq.f32.partialorder %v2597, 8.507059e+37
    %v2599 = vand.u32 %v2242, 2147483648
    %v2600 = vor.u32 1.1754944e-38, %v2599
    %v2601 = vsel %vm2598, %v2600, %v2596
    %v2602 = vmul.f32 1.0, %v2601
    %v2603 = vmul.f32 %v2076, %v2257
    %v2604 = vmul.f32 %v2079, %v2272
    %v2605 = vmul.f32 %v2082, %v2287
    %v2606 = vmul.f32 %v2085, %v2302
    %v2607 = vmul.f32 %v2088, %v2317
    %v2608 = vmul.f32 %v2091, %v2332
    %v2609 = vmul.f32 %v2094, %v2347
    %v2610 = vmul.f32 %v2097, %v2362
    %v2611 = vmul.f32 %v2100, %v2377
    %v2612 = vmul.f32 %v2103, %v2392
    %v2613 = vmul.f32 %v2106, %v2407
    %v2614 = vmul.f32 %v2109, %v2422
    %v2615 = vmul.f32 %v2112, %v2437
    %v2616 = vmul.f32 %v2115, %v2452
    %v2617 = vmul.f32 %v2118, %v2467
    %v2618 = vmul.f32 %v2121, %v2482
    %v2619 = vmul.f32 %v2124, %v2497
    %v2620 = vmul.f32 %v2127, %v2512
    %v2621 = vmul.f32 %v2130, %v2527
    %v2622 = vmul.f32 %v2133, %v2542
    %v2623 = vmul.f32 %v2136, %v2557
    %v2624 = vmul.f32 %v2139, %v2572
    %v2625 = vmul.f32 %v2142, %v2587
    %v2626 = vmul.f32 %v2145, %v2602
    %2627 = vst.msk [vmem:[%s4] sm:$0xff] %vm77, %v2603
    %2628 = vst.msk [vmem:[%s4 + $0x8] sm:$0xff] %vm77, %v2604
    %2629 = vst.msk [vmem:[%s4 + $0x10] sm:$0xff] %vm77, %v2605
    %2630 = vst.msk [vmem:[%s4 + $0x18] sm:$0xff] %vm77, %v2606
    %2631 = vst.msk [vmem:[%s4 + $0x20] sm:$0xff] %vm77, %v2607
    %2632 = vst.msk [vmem:[%s4 + $0x28] sm:$0xff] %vm77, %v2608
    %2633 = vst.msk [vmem:[%s4 + $0x30] sm:$0xff] %vm77, %v2609
    %2634 = vst.msk [vmem:[%s4 + $0x38] sm:$0xff] %vm77, %v2610
    %2635 = vst.msk [vmem:[%s4 + $0x40] sm:$0xff] %vm77, %v2611
    %2636 = vst.msk [vmem:[%s4 + $0x48] sm:$0xff] %vm77, %v2612
    %2637 = vst.msk [vmem:[%s4 + $0x50] sm:$0xff] %vm77, %v2613
    %2638 = vst.msk [vmem:[%s4 + $0x58] sm:$0xff] %vm77, %v2614
    %2639 = vst.msk [vmem:[%s4 + $0x60] sm:$0xff] %vm77, %v2615
    %2640 = vst.msk [vmem:[%s4 + $0x68] sm:$0xff] %vm77, %v2616
    %2641 = vst.msk [vmem:[%s4 + $0x70] sm:$0xff] %vm77, %v2617
    %2642 = vst.msk [vmem:[%s4 + $0x78] sm:$0xff] %vm77, %v2618
    %2643 = vst.msk [vmem:[%s4 + $0x80] sm:$0xff] %vm77, %v2619
    %2644 = vst.msk [vmem:[%s4 + $0x88] sm:$0xff] %vm77, %v2620
    %2645 = vst.msk [vmem:[%s4 + $0x90] sm:$0xff] %vm77, %v2621
    %2646 = vst.msk [vmem:[%s4 + $0x98] sm:$0xff] %vm77, %v2622
    %2647 = vst.msk [vmem:[%s4 + $0xa0] sm:$0xff] %vm77, %v2623
    %2648 = vst.msk [vmem:[%s4 + $0xa8] sm:$0xff] %vm77, %v2624
    %2649 = vst.msk [vmem:[%s4 + $0xb0] sm:$0xff] %vm77, %v2625
    %2650 = vst.msk [vmem:[%s4 + $0xb8] sm:$0xff] %vm77, %v2626
    %2651 = vxpose.xlu0.b32.start [1/16] %v426, 128
    %2652 = vxpose.xlu0.b32.cont [2/16] %v427, 128
    %2653 = vxpose.xlu0.b32.cont [3/16] %v428, 128
    %2654 = vxpose.xlu0.b32.cont [4/16] %v429, 128
    %2655 = vxpose.xlu0.b32.cont [5/16] %v430, 128
    %2656 = vxpose.xlu0.b32.cont [6/16] %v431, 128
    %2657 = vxpose.xlu0.b32.cont [7/16] %v432, 128
    %2658 = vxpose.xlu0.b32.cont [8/16] %v433, 128
    %2659 = vxpose.xlu0.b32.cont [9/16] %v434, 128
    %2660 = vxpose.xlu0.b32.cont [10/16] %v435, 128
    %2661 = vxpose.xlu0.b32.cont [11/16] %v436, 128
    %2662 = vxpose.xlu0.b32.cont [12/16] %v437, 128
    %2663 = vxpose.xlu0.b32.cont [13/16] %v438, 128
    %2664 = vxpose.xlu0.b32.cont [14/16] %v439, 128
    %2665 = vxpose.xlu0.b32.cont [15/16] %v440, 128
    %2666 = vxpose.xlu0.b32.end [16/16] %v441, 128
    %v2667 = vpop.trf.xlu0
    %v2668 = vpop.trf.xlu0
    %v2669 = vpop.trf.xlu0
    %v2670 = vpop.trf.xlu0
    %v2671 = vpop.trf.xlu0
    %v2672 = vpop.trf.xlu0
    %v2673 = vpop.trf.xlu0
    %v2674 = vpop.trf.xlu0
    %v2675 = vpop.trf.xlu0
    %v2676 = vpop.trf.xlu0
    %v2677 = vpop.trf.xlu0
    %v2678 = vpop.trf.xlu0
    %v2679 = vpop.trf.xlu0
    %v2680 = vpop.trf.xlu0
    %v2681 = vpop.trf.xlu0
    %v2682 = vpop.trf.xlu0
    %2683 = vxpose.xlu0.b32.start [1/16] %v442, 128
    %2684 = vxpose.xlu0.b32.cont [2/16] %v443, 128
    %2685 = vxpose.xlu0.b32.cont [3/16] %v444, 128
    %2686 = vxpose.xlu0.b32.cont [4/16] %v445, 128
    %2687 = vxpose.xlu0.b32.cont [5/16] %v446, 128
    %2688 = vxpose.xlu0.b32.cont [6/16] %v447, 128
    %2689 = vxpose.xlu0.b32.cont [7/16] %v448, 128
    %2690 = vxpose.xlu0.b32.cont [8/16] %v449, 128
    %2691 = vxpose.xlu0.b32.cont [9/16] 0.0, 128
    %2692 = vxpose.xlu0.b32.cont [10/16] 0.0, 128
    %2693 = vxpose.xlu0.b32.cont [11/16] 0.0, 128
    %2694 = vxpose.xlu0.b32.cont [12/16] 0.0, 128
    %2695 = vxpose.xlu0.b32.cont [13/16] 0.0, 128
    %2696 = vxpose.xlu0.b32.cont [14/16] 0.0, 128
    %2697 = vxpose.xlu0.b32.cont [15/16] 0.0, 128
    %2698 = vxpose.xlu0.b32.end [16/16] 0.0, 128
    %v2699 = vpop.trf.xlu0
    %v2700 = vpop.trf.xlu0
    %v2701 = vpop.trf.xlu0
    %v2702 = vpop.trf.xlu0
    %v2703 = vpop.trf.xlu0
    %v2704 = vpop.trf.xlu0
    %v2705 = vpop.trf.xlu0
    %v2706 = vpop.trf.xlu0
    %v2707 = vpop.trf.xlu0
    %v2708 = vpop.trf.xlu0
    %v2709 = vpop.trf.xlu0
    %v2710 = vpop.trf.xlu0
    %v2711 = vpop.trf.xlu0
    %v2712 = vpop.trf.xlu0
    %v2713 = vpop.trf.xlu0
    %v2714 = vpop.trf.xlu0
    %vm2715 = vcmask 523264
    %v2717 = vsel %vm2715, %v2699, 0
    %v2720 = vsel %vm2715, %v2700, 0
    %v2723 = vsel %vm2715, %v2701, 0
    %v2726 = vsel %vm2715, %v2702, 0
    %v2729 = vsel %vm2715, %v2703, 0
    %v2732 = vsel %vm2715, %v2704, 0
    %v2735 = vsel %vm2715, %v2705, 0
    %v2738 = vsel %vm2715, %v2706, 0
    %v2740 = vand.u32 %v2618, 4294901760
    %2741 = vmatpush.msra.mxu0 %v2740
    %v2742 = vand.u32 %v2617, 4294901760
    %2743 = vmatpush.msra.mxu0 %v2742
    %v2744 = vand.u32 %v2616, 4294901760
    %2745 = vmatpush.msra.mxu0 %v2744
    %v2746 = vand.u32 %v2615, 4294901760
    %2747 = vmatpush.msra.mxu0 %v2746
    %v2748 = vand.u32 %v2614, 4294901760
    %2749 = vmatpush.msra.mxu0 %v2748
    %v2750 = vand.u32 %v2613, 4294901760
    %2751 = vmatpush.msra.mxu0 %v2750
    %v2752 = vand.u32 %v2612, 4294901760
    %2753 = vmatpush.msra.mxu0 %v2752
    %v2754 = vand.u32 %v2611, 4294901760
    %2755 = vmatpush.msra.mxu0 %v2754
    %v2756 = vand.u32 %v2610, 4294901760
    %2757 = vmatpush.msra.mxu0 %v2756
    %v2758 = vand.u32 %v2609, 4294901760
    %2759 = vmatpush.msra.mxu0 %v2758
    %v2760 = vand.u32 %v2608, 4294901760
    %2761 = vmatpush.msra.mxu0 %v2760
    %v2762 = vand.u32 %v2607, 4294901760
    %2763 = vmatpush.msra.mxu0 %v2762
    %v2764 = vand.u32 %v2606, 4294901760
    %2765 = vmatpush.msra.mxu0 %v2764
    %v2766 = vand.u32 %v2605, 4294901760
    %2767 = vmatpush.msra.mxu0 %v2766
    %v2768 = vand.u32 %v2604, 4294901760
    %2769 = vmatpush.msra.mxu0 %v2768
    %v2770 = vand.u32 %v2603, 4294901760
    %2771 = vmatpush.msra.mxu0 %v2770
    %v2772 = vand.u32 %v2667, 4294901760
    %v2773 = vsub.f32 %v2667, %v2772
    %v2774 = vand.u32 %v2773, 4294901760
    %v2775 = vsub.f32 %v2773, %v2774
    %v2776 = vand.u32 %v2775, 4294901760
    %2777 = vmatmul.f32.gmra.mxu0 %v2776
    %v2778 = vpop.f32.mrf.mxu0
    %v2779 = vadd.f32 0.0, %v2778
    %v2780 = vand.u32 %v2668, 4294901760
    %v2781 = vsub.f32 %v2668, %v2780
    %v2782 = vand.u32 %v2781, 4294901760
    %v2783 = vsub.f32 %v2781, %v2782
    %v2784 = vand.u32 %v2783, 4294901760
    %2785 = vmatmul.f32.gmra.mxu0 %v2784
    %v2786 = vpop.f32.mrf.mxu0
    %v2787 = vadd.f32 0.0, %v2786
    %v2788 = vand.u32 %v2669, 4294901760
    %v2789 = vsub.f32 %v2669, %v2788
    %v2790 = vand.u32 %v2789, 4294901760
    %v2791 = vsub.f32 %v2789, %v2790
    %v2792 = vand.u32 %v2791, 4294901760
    %2793 = vmatmul.f32.gmra.mxu0 %v2792
    %v2794 = vpop.f32.mrf.mxu0
    %v2795 = vadd.f32 0.0, %v2794
    %v2796 = vand.u32 %v2670, 4294901760
    %v2797 = vsub.f32 %v2670, %v2796
    %v2798 = vand.u32 %v2797, 4294901760
    %v2799 = vsub.f32 %v2797, %v2798
    %v2800 = vand.u32 %v2799, 4294901760
    %2801 = vmatmul.f32.gmra.mxu0 %v2800
    %v2802 = vpop.f32.mrf.mxu0
    %v2803 = vadd.f32 0.0, %v2802
    %v2804 = vand.u32 %v2671, 4294901760
    %v2805 = vsub.f32 %v2671, %v2804
    %v2806 = vand.u32 %v2805, 4294901760
    %v2807 = vsub.f32 %v2805, %v2806
    %v2808 = vand.u32 %v2807, 4294901760
    %2809 = vmatmul.f32.gmra.mxu0 %v2808
    %v2810 = vpop.f32.mrf.mxu0
    %v2811 = vadd.f32 0.0, %v2810
    %v2812 = vand.u32 %v2672, 4294901760
    %v2813 = vsub.f32 %v2672, %v2812
    %v2814 = vand.u32 %v2813, 4294901760
    %v2815 = vsub.f32 %v2813, %v2814
    %v2816 = vand.u32 %v2815, 4294901760
    %2817 = vmatmul.f32.gmra.mxu0 %v2816
    %v2818 = vpop.f32.mrf.mxu0
    %v2819 = vadd.f32 0.0, %v2818
    %v2820 = vand.u32 %v2673, 4294901760
    %v2821 = vsub.f32 %v2673, %v2820
    %v2822 = vand.u32 %v2821, 4294901760
    %v2823 = vsub.f32 %v2821, %v2822
    %v2824 = vand.u32 %v2823, 4294901760
    %2825 = vmatmul.f32.gmra.mxu0 %v2824
    %v2826 = vpop.f32.mrf.mxu0
    %v2827 = vadd.f32 0.0, %v2826
    %v2828 = vand.u32 %v2674, 4294901760
    %v2829 = vsub.f32 %v2674, %v2828
    %v2830 = vand.u32 %v2829, 4294901760
    %v2831 = vsub.f32 %v2829, %v2830
    %v2832 = vand.u32 %v2831, 4294901760
    %2833 = vmatmul.f32.gmra.mxu0 %v2832
    %v2834 = vpop.f32.mrf.mxu0
    %v2835 = vadd.f32 0.0, %v2834
    %2836 = vdwg.mxu0
    %v2837 = vand.u32 %v2618, 4294901760
    %v2838 = vsub.f32 %v2618, %v2837
    %v2839 = vand.u32 %v2838, 4294901760
    %v2840 = vsub.f32 %v2838, %v2839
    %v2841 = vand.u32 %v2840, 4294901760
    %2842 = vmatpush.msra.mxu0 %v2841
    %v2843 = vand.u32 %v2617, 4294901760
    %v2844 = vsub.f32 %v2617, %v2843
    %v2845 = vand.u32 %v2844, 4294901760
    %v2846 = vsub.f32 %v2844, %v2845
    %v2847 = vand.u32 %v2846, 4294901760
    %2848 = vmatpush.msra.mxu0 %v2847
    %v2849 = vand.u32 %v2616, 4294901760
    %v2850 = vsub.f32 %v2616, %v2849
    %v2851 = vand.u32 %v2850, 4294901760
    %v2852 = vsub.f32 %v2850, %v2851
    %v2853 = vand.u32 %v2852, 4294901760
    %2854 = vmatpush.msra.mxu0 %v2853
    %v2855 = vand.u32 %v2615, 4294901760
    %v2856 = vsub.f32 %v2615, %v2855
    %v2857 = vand.u32 %v2856, 4294901760
    %v2858 = vsub.f32 %v2856, %v2857
    %v2859 = vand.u32 %v2858, 4294901760
    %2860 = vmatpush.msra.mxu0 %v2859
    %v2861 = vand.u32 %v2614, 4294901760
    %v2862 = vsub.f32 %v2614, %v2861
    %v2863 = vand.u32 %v2862, 4294901760
    %v2864 = vsub.f32 %v2862, %v2863
    %v2865 = vand.u32 %v2864, 4294901760
    %2866 = vmatpush.msra.mxu0 %v2865
    %v2867 = vand.u32 %v2613, 4294901760
    %v2868 = vsub.f32 %v2613, %v2867
    %v2869 = vand.u32 %v2868, 4294901760
    %v2870 = vsub.f32 %v2868, %v2869
    %v2871 = vand.u32 %v2870, 4294901760
    %2872 = vmatpush.msra.mxu0 %v2871
    %v2873 = vand.u32 %v2612, 4294901760
    %v2874 = vsub.f32 %v2612, %v2873
    %v2875 = vand.u32 %v2874, 4294901760
    %v2876 = vsub.f32 %v2874, %v2875
    %v2877 = vand.u32 %v2876, 4294901760
    %2878 = vmatpush.msra.mxu0 %v2877
    %v2879 = vand.u32 %v2611, 4294901760
    %v2880 = vsub.f32 %v2611, %v2879
    %v2881 = vand.u32 %v2880, 4294901760
    %v2882 = vsub.f32 %v2880, %v2881
    %v2883 = vand.u32 %v2882, 4294901760
    %2884 = vmatpush.msra.mxu0 %v2883
    %v2885 = vand.u32 %v2610, 4294901760
    %v2886 = vsub.f32 %v2610, %v2885
    %v2887 = vand.u32 %v2886, 4294901760
    %v2888 = vsub.f32 %v2886, %v2887
    %v2889 = vand.u32 %v2888, 4294901760
    %2890 = vmatpush.msra.mxu0 %v2889
    %v2891 = vand.u32 %v2609, 4294901760
    %v2892 = vsub.f32 %v2609, %v2891
    %v2893 = vand.u32 %v2892, 4294901760
    %v2894 = vsub.f32 %v2892, %v2893
    %v2895 = vand.u32 %v2894, 4294901760
    %2896 = vmatpush.msra.mxu0 %v2895
    %v2897 = vand.u32 %v2608, 4294901760
    %v2898 = vsub.f32 %v2608, %v2897
    %v2899 = vand.u32 %v2898, 4294901760
    %v2900 = vsub.f32 %v2898, %v2899
    %v2901 = vand.u32 %v2900, 4294901760
    %2902 = vmatpush.msra.mxu0 %v2901
    %v2903 = vand.u32 %v2607, 4294901760
    %v2904 = vsub.f32 %v2607, %v2903
    %v2905 = vand.u32 %v2904, 4294901760
    %v2906 = vsub.f32 %v2904, %v2905
    %v2907 = vand.u32 %v2906, 4294901760
    %2908 = vmatpush.msra.mxu0 %v2907
    %v2909 = vand.u32 %v2606, 4294901760
    %v2910 = vsub.f32 %v2606, %v2909
    %v2911 = vand.u32 %v2910, 4294901760
    %v2912 = vsub.f32 %v2910, %v2911
    %v2913 = vand.u32 %v2912, 4294901760
    %2914 = vmatpush.msra.mxu0 %v2913
    %v2915 = vand.u32 %v2605, 4294901760
    %v2916 = vsub.f32 %v2605, %v2915
    %v2917 = vand.u32 %v2916, 4294901760
    %v2918 = vsub.f32 %v2916, %v2917
    %v2919 = vand.u32 %v2918, 4294901760
    %2920 = vmatpush.msra.mxu0 %v2919
    %v2921 = vand.u32 %v2604, 4294901760
    %v2922 = vsub.f32 %v2604, %v2921
    %v2923 = vand.u32 %v2922, 4294901760
    %v2924 = vsub.f32 %v2922, %v2923
    %v2925 = vand.u32 %v2924, 4294901760
    %2926 = vmatpush.msra.mxu0 %v2925
    %v2927 = vand.u32 %v2603, 4294901760
    %v2928 = vsub.f32 %v2603, %v2927
    %v2929 = vand.u32 %v2928, 4294901760
    %v2930 = vsub.f32 %v2928, %v2929
    %v2931 = vand.u32 %v2930, 4294901760
    %2932 = vmatpush.msra.mxu0 %v2931
    %v2933 = vand.u32 %v2667, 4294901760
    %2934 = vmatmul.f32.gmra.mxu0 %v2933
    %v2935 = vpop.f32.mrf.mxu0
    %v2936 = vadd.f32 %v2779, %v2935
    %v2937 = vand.u32 %v2668, 4294901760
    %2938 = vmatmul.f32.gmra.mxu0 %v2937
    %v2939 = vpop.f32.mrf.mxu0
    %v2940 = vadd.f32 %v2787, %v2939
    %v2941 = vand.u32 %v2669, 4294901760
    %2942 = vmatmul.f32.gmra.mxu0 %v2941
    %v2943 = vpop.f32.mrf.mxu0
    %v2944 = vadd.f32 %v2795, %v2943
    %v2945 = vand.u32 %v2670, 4294901760
    %2946 = vmatmul.f32.gmra.mxu0 %v2945
    %v2947 = vpop.f32.mrf.mxu0
    %v2948 = vadd.f32 %v2803, %v2947
    %v2949 = vand.u32 %v2671, 4294901760
    %2950 = vmatmul.f32.gmra.mxu0 %v2949
    %v2951 = vpop.f32.mrf.mxu0
    %v2952 = vadd.f32 %v2811, %v2951
    %v2953 = vand.u32 %v2672, 4294901760
    %2954 = vmatmul.f32.gmra.mxu0 %v2953
    %v2955 = vpop.f32.mrf.mxu0
    %v2956 = vadd.f32 %v2819, %v2955
    %v2957 = vand.u32 %v2673, 4294901760
    %2958 = vmatmul.f32.gmra.mxu0 %v2957
    %v2959 = vpop.f32.mrf.mxu0
    %v2960 = vadd.f32 %v2827, %v2959
    %v2961 = vand.u32 %v2674, 4294901760
    %2962 = vmatmul.f32.gmra.mxu0 %v2961
    %v2963 = vpop.f32.mrf.mxu0
    %v2964 = vadd.f32 %v2835, %v2963
    %2965 = vdwg.mxu0
    %v2966 = vand.u32 %v2618, 4294901760
    %v2967 = vsub.f32 %v2618, %v2966
    %2968 = vmatpush.msra.mxu0 %v2967
    %v2969 = vand.u32 %v2617, 4294901760
    %v2970 = vsub.f32 %v2617, %v2969
    %2971 = vmatpush.msra.mxu0 %v2970
    %v2972 = vand.u32 %v2616, 4294901760
    %v2973 = vsub.f32 %v2616, %v2972
    %2974 = vmatpush.msra.mxu0 %v2973
    %v2975 = vand.u32 %v2615, 4294901760
    %v2976 = vsub.f32 %v2615, %v2975
    %2977 = vmatpush.msra.mxu0 %v2976
    %v2978 = vand.u32 %v2614, 4294901760
    %v2979 = vsub.f32 %v2614, %v2978
    %2980 = vmatpush.msra.mxu0 %v2979
    %v2981 = vand.u32 %v2613, 4294901760
    %v2982 = vsub.f32 %v2613, %v2981
    %2983 = vmatpush.msra.mxu0 %v2982
    %v2984 = vand.u32 %v2612, 4294901760
    %v2985 = vsub.f32 %v2612, %v2984
    %2986 = vmatpush.msra.mxu0 %v2985
    %v2987 = vand.u32 %v2611, 4294901760
    %v2988 = vsub.f32 %v2611, %v2987
    %2989 = vmatpush.msra.mxu0 %v2988
    %v2990 = vand.u32 %v2610, 4294901760
    %v2991 = vsub.f32 %v2610, %v2990
    %2992 = vmatpush.msra.mxu0 %v2991
    %v2993 = vand.u32 %v2609, 4294901760
    %v2994 = vsub.f32 %v2609, %v2993
    %2995 = vmatpush.msra.mxu0 %v2994
    %v2996 = vand.u32 %v2608, 4294901760
    %v2997 = vsub.f32 %v2608, %v2996
    %2998 = vmatpush.msra.mxu0 %v2997
    %v2999 = vand.u32 %v2607, 4294901760
    %v3000 = vsub.f32 %v2607, %v2999
    %3001 = vmatpush.msra.mxu0 %v3000
    %v3002 = vand.u32 %v2606, 4294901760
    %v3003 = vsub.f32 %v2606, %v3002
    %3004 = vmatpush.msra.mxu0 %v3003
    %v3005 = vand.u32 %v2605, 4294901760
    %v3006 = vsub.f32 %v2605, %v3005
    %3007 = vmatpush.msra.mxu0 %v3006
    %v3008 = vand.u32 %v2604, 4294901760
    %v3009 = vsub.f32 %v2604, %v3008
    %3010 = vmatpush.msra.mxu0 %v3009
    %v3011 = vand.u32 %v2603, 4294901760
    %v3012 = vsub.f32 %v2603, %v3011
    %3013 = vmatpush.msra.mxu0 %v3012
    %v3014 = vand.u32 %v2667, 4294901760
    %v3015 = vsub.f32 %v2667, %v3014
    %3016 = vmatmul.f32.gmra.mxu0 %v3015
    %v3017 = vpop.f32.mrf.mxu0
    %v3018 = vadd.f32 %v2936, %v3017
    %v3019 = vand.u32 %v2668, 4294901760
    %v3020 = vsub.f32 %v2668, %v3019
    %3021 = vmatmul.f32.gmra.mxu0 %v3020
    %v3022 = vpop.f32.mrf.mxu0
    %v3023 = vadd.f32 %v2940, %v3022
    %v3024 = vand.u32 %v2669, 4294901760
    %v3025 = vsub.f32 %v2669, %v3024
    %3026 = vmatmul.f32.gmra.mxu0 %v3025
    %v3027 = vpop.f32.mrf.mxu0
    %v3028 = vadd.f32 %v2944, %v3027
    %v3029 = vand.u32 %v2670, 4294901760
    %v3030 = vsub.f32 %v2670, %v3029
    %3031 = vmatmul.f32.gmra.mxu0 %v3030
    %v3032 = vpop.f32.mrf.mxu0
    %v3033 = vadd.f32 %v2948, %v3032
    %v3034 = vand.u32 %v2671, 4294901760
    %v3035 = vsub.f32 %v2671, %v3034
    %3036 = vmatmul.f32.gmra.mxu0 %v3035
    %v3037 = vpop.f32.mrf.mxu0
    %v3038 = vadd.f32 %v2952, %v3037
    %v3039 = vand.u32 %v2672, 4294901760
    %v3040 = vsub.f32 %v2672, %v3039
    %3041 = vmatmul.f32.gmra.mxu0 %v3040
    %v3042 = vpop.f32.mrf.mxu0
    %v3043 = vadd.f32 %v2956, %v3042
    %v3044 = vand.u32 %v2673, 4294901760
    %v3045 = vsub.f32 %v2673, %v3044
    %3046 = vmatmul.f32.gmra.mxu0 %v3045
    %v3047 = vpop.f32.mrf.mxu0
    %v3048 = vadd.f32 %v2960, %v3047
    %v3049 = vand.u32 %v2674, 4294901760
    %v3050 = vsub.f32 %v2674, %v3049
    %3051 = vmatmul.f32.gmra.mxu0 %v3050
    %v3052 = vpop.f32.mrf.mxu0
    %v3053 = vadd.f32 %v2964, %v3052
    %3054 = vdwg.mxu0
    %v3055 = vand.u32 %v2618, 4294901760
    %3056 = vmatpush.msra.mxu0 %v3055
    %v3057 = vand.u32 %v2617, 4294901760
    %3058 = vmatpush.msra.mxu0 %v3057
    %v3059 = vand.u32 %v2616, 4294901760
    %3060 = vmatpush.msra.mxu0 %v3059
    %v3061 = vand.u32 %v2615, 4294901760
    %3062 = vmatpush.msra.mxu0 %v3061
    %v3063 = vand.u32 %v2614, 4294901760
    %3064 = vmatpush.msra.mxu0 %v3063
    %v3065 = vand.u32 %v2613, 4294901760
    %3066 = vmatpush.msra.mxu0 %v3065
    %v3067 = vand.u32 %v2612, 4294901760
    %3068 = vmatpush.msra.mxu0 %v3067
    %v3069 = vand.u32 %v2611, 4294901760
    %3070 = vmatpush.msra.mxu0 %v3069
    %v3071 = vand.u32 %v2610, 4294901760
    %3072 = vmatpush.msra.mxu0 %v3071
    %v3073 = vand.u32 %v2609, 4294901760
    %3074 = vmatpush.msra.mxu0 %v3073
    %v3075 = vand.u32 %v2608, 4294901760
    %3076 = vmatpush.msra.mxu0 %v3075
    %v3077 = vand.u32 %v2607, 4294901760
    %3078 = vmatpush.msra.mxu0 %v3077
    %v3079 = vand.u32 %v2606, 4294901760
    %3080 = vmatpush.msra.mxu0 %v3079
    %v3081 = vand.u32 %v2605, 4294901760
    %3082 = vmatpush.msra.mxu0 %v3081
    %v3083 = vand.u32 %v2604, 4294901760
    %3084 = vmatpush.msra.mxu0 %v3083
    %v3085 = vand.u32 %v2603, 4294901760
    %3086 = vmatpush.msra.mxu0 %v3085
    %v3087 = vand.u32 %v2667, 4294901760
    %v3088 = vsub.f32 %v2667, %v3087
    %v3089 = vand.u32 %v3088, 4294901760
    %3090 = vmatmul.f32.gmra.mxu0 %v3089
    %v3091 = vpop.f32.mrf.mxu0
    %v3092 = vadd.f32 %v3018, %v3091
    %v3093 = vand.u32 %v2668, 4294901760
    %v3094 = vsub.f32 %v2668, %v3093
    %v3095 = vand.u32 %v3094, 4294901760
    %3096 = vmatmul.f32.gmra.mxu0 %v3095
    %v3097 = vpop.f32.mrf.mxu0
    %v3098 = vadd.f32 %v3023, %v3097
    %v3099 = vand.u32 %v2669, 4294901760
    %v3100 = vsub.f32 %v2669, %v3099
    %v3101 = vand.u32 %v3100, 4294901760
    %3102 = vmatmul.f32.gmra.mxu0 %v3101
    %v3103 = vpop.f32.mrf.mxu0
    %v3104 = vadd.f32 %v3028, %v3103
    %v3105 = vand.u32 %v2670, 4294901760
    %v3106 = vsub.f32 %v2670, %v3105
    %v3107 = vand.u32 %v3106, 4294901760
    %3108 = vmatmul.f32.gmra.mxu0 %v3107
    %v3109 = vpop.f32.mrf.mxu0
    %v3110 = vadd.f32 %v3033, %v3109
    %v3111 = vand.u32 %v2671, 4294901760
    %v3112 = vsub.f32 %v2671, %v3111
    %v3113 = vand.u32 %v3112, 4294901760
    %3114 = vmatmul.f32.gmra.mxu0 %v3113
    %v3115 = vpop.f32.mrf.mxu0
    %v3116 = vadd.f32 %v3038, %v3115
    %v3117 = vand.u32 %v2672, 4294901760
    %v3118 = vsub.f32 %v2672, %v3117
    %v3119 = vand.u32 %v3118, 4294901760
    %3120 = vmatmul.f32.gmra.mxu0 %v3119
    %v3121 = vpop.f32.mrf.mxu0
    %v3122 = vadd.f32 %v3043, %v3121
    %v3123 = vand.u32 %v2673, 4294901760
    %v3124 = vsub.f32 %v2673, %v3123
    %v3125 = vand.u32 %v3124, 4294901760
    %3126 = vmatmul.f32.gmra.mxu0 %v3125
    %v3127 = vpop.f32.mrf.mxu0
    %v3128 = vadd.f32 %v3048, %v3127
    %v3129 = vand.u32 %v2674, 4294901760
    %v3130 = vsub.f32 %v2674, %v3129
    %v3131 = vand.u32 %v3130, 4294901760
    %3132 = vmatmul.f32.gmra.mxu0 %v3131
    %v3133 = vpop.f32.mrf.mxu0
    %v3134 = vadd.f32 %v3053, %v3133
    %3135 = vdwg.mxu0
    %v3136 = vand.u32 %v2618, 4294901760
    %v3137 = vsub.f32 %v2618, %v3136
    %v3138 = vand.u32 %v3137, 4294901760
    %3139 = vmatpush.msra.mxu0 %v3138
    %v3140 = vand.u32 %v2617, 4294901760
    %v3141 = vsub.f32 %v2617, %v3140
    %v3142 = vand.u32 %v3141, 4294901760
    %3143 = vmatpush.msra.mxu0 %v3142
    %v3144 = vand.u32 %v2616, 4294901760
    %v3145 = vsub.f32 %v2616, %v3144
    %v3146 = vand.u32 %v3145, 4294901760
    %3147 = vmatpush.msra.mxu0 %v3146
    %v3148 = vand.u32 %v2615, 4294901760
    %v3149 = vsub.f32 %v2615, %v3148
    %v3150 = vand.u32 %v3149, 4294901760
    %3151 = vmatpush.msra.mxu0 %v3150
    %v3152 = vand.u32 %v2614, 4294901760
    %v3153 = vsub.f32 %v2614, %v3152
    %v3154 = vand.u32 %v3153, 4294901760
    %3155 = vmatpush.msra.mxu0 %v3154
    %v3156 = vand.u32 %v2613, 4294901760
    %v3157 = vsub.f32 %v2613, %v3156
    %v3158 = vand.u32 %v3157, 4294901760
    %3159 = vmatpush.msra.mxu0 %v3158
    %v3160 = vand.u32 %v2612, 4294901760
    %v3161 = vsub.f32 %v2612, %v3160
    %v3162 = vand.u32 %v3161, 4294901760
    %3163 = vmatpush.msra.mxu0 %v3162
    %v3164 = vand.u32 %v2611, 4294901760
    %v3165 = vsub.f32 %v2611, %v3164
    %v3166 = vand.u32 %v3165, 4294901760
    %3167 = vmatpush.msra.mxu0 %v3166
    %v3168 = vand.u32 %v2610, 4294901760
    %v3169 = vsub.f32 %v2610, %v3168
    %v3170 = vand.u32 %v3169, 4294901760
    %3171 = vmatpush.msra.mxu0 %v3170
    %v3172 = vand.u32 %v2609, 4294901760
    %v3173 = vsub.f32 %v2609, %v3172
    %v3174 = vand.u32 %v3173, 4294901760
    %3175 = vmatpush.msra.mxu0 %v3174
    %v3176 = vand.u32 %v2608, 4294901760
    %v3177 = vsub.f32 %v2608, %v3176
    %v3178 = vand.u32 %v3177, 4294901760
    %3179 = vmatpush.msra.mxu0 %v3178
    %v3180 = vand.u32 %v2607, 4294901760
    %v3181 = vsub.f32 %v2607, %v3180
    %v3182 = vand.u32 %v3181, 4294901760
    %3183 = vmatpush.msra.mxu0 %v3182
    %v3184 = vand.u32 %v2606, 4294901760
    %v3185 = vsub.f32 %v2606, %v3184
    %v3186 = vand.u32 %v3185, 4294901760
    %3187 = vmatpush.msra.mxu0 %v3186
    %v3188 = vand.u32 %v2605, 4294901760
    %v3189 = vsub.f32 %v2605, %v3188
    %v3190 = vand.u32 %v3189, 4294901760
    %3191 = vmatpush.msra.mxu0 %v3190
    %v3192 = vand.u32 %v2604, 4294901760
    %v3193 = vsub.f32 %v2604, %v3192
    %v3194 = vand.u32 %v3193, 4294901760
    %3195 = vmatpush.msra.mxu0 %v3194
    %v3196 = vand.u32 %v2603, 4294901760
    %v3197 = vsub.f32 %v2603, %v3196
    %v3198 = vand.u32 %v3197, 4294901760
    %3199 = vmatpush.msra.mxu0 %v3198
    %v3200 = vand.u32 %v2667, 4294901760
    %3201 = vmatmul.f32.gmra.mxu0 %v3200
    %v3202 = vpop.f32.mrf.mxu0
    %v3203 = vadd.f32 %v3092, %v3202
    %v3204 = vand.u32 %v2668, 4294901760
    %3205 = vmatmul.f32.gmra.mxu0 %v3204
    %v3206 = vpop.f32.mrf.mxu0
    %v3207 = vadd.f32 %v3098, %v3206
    %v3208 = vand.u32 %v2669, 4294901760
    %3209 = vmatmul.f32.gmra.mxu0 %v3208
    %v3210 = vpop.f32.mrf.mxu0
    %v3211 = vadd.f32 %v3104, %v3210
    %v3212 = vand.u32 %v2670, 4294901760
    %3213 = vmatmul.f32.gmra.mxu0 %v3212
    %v3214 = vpop.f32.mrf.mxu0
    %v3215 = vadd.f32 %v3110, %v3214
    %v3216 = vand.u32 %v2671, 4294901760
    %3217 = vmatmul.f32.gmra.mxu0 %v3216
    %v3218 = vpop.f32.mrf.mxu0
    %v3219 = vadd.f32 %v3116, %v3218
    %v3220 = vand.u32 %v2672, 4294901760
    %3221 = vmatmul.f32.gmra.mxu0 %v3220
    %v3222 = vpop.f32.mrf.mxu0
    %v3223 = vadd.f32 %v3122, %v3222
    %v3224 = vand.u32 %v2673, 4294901760
    %3225 = vmatmul.f32.gmra.mxu0 %v3224
    %v3226 = vpop.f32.mrf.mxu0
    %v3227 = vadd.f32 %v3128, %v3226
    %v3228 = vand.u32 %v2674, 4294901760
    %3229 = vmatmul.f32.gmra.mxu0 %v3228
    %v3230 = vpop.f32.mrf.mxu0
    %v3231 = vadd.f32 %v3134, %v3230
    %3232 = vdwg.mxu0
    %v3233 = vand.u32 %v2618, 4294901760
    %3234 = vmatpush.msra.mxu0 %v3233
    %v3235 = vand.u32 %v2617, 4294901760
    %3236 = vmatpush.msra.mxu0 %v3235
    %v3237 = vand.u32 %v2616, 4294901760
    %3238 = vmatpush.msra.mxu0 %v3237
    %v3239 = vand.u32 %v2615, 4294901760
    %3240 = vmatpush.msra.mxu0 %v3239
    %v3241 = vand.u32 %v2614, 4294901760
    %3242 = vmatpush.msra.mxu0 %v3241
    %v3243 = vand.u32 %v2613, 4294901760
    %3244 = vmatpush.msra.mxu0 %v3243
    %v3245 = vand.u32 %v2612, 4294901760
    %3246 = vmatpush.msra.mxu0 %v3245
    %v3247 = vand.u32 %v2611, 4294901760
    %3248 = vmatpush.msra.mxu0 %v3247
    %v3249 = vand.u32 %v2610, 4294901760
    %3250 = vmatpush.msra.mxu0 %v3249
    %v3251 = vand.u32 %v2609, 4294901760
    %3252 = vmatpush.msra.mxu0 %v3251
    %v3253 = vand.u32 %v2608, 4294901760
    %3254 = vmatpush.msra.mxu0 %v3253
    %v3255 = vand.u32 %v2607, 4294901760
    %3256 = vmatpush.msra.mxu0 %v3255
    %v3257 = vand.u32 %v2606, 4294901760
    %3258 = vmatpush.msra.mxu0 %v3257
    %v3259 = vand.u32 %v2605, 4294901760
    %3260 = vmatpush.msra.mxu0 %v3259
    %v3261 = vand.u32 %v2604, 4294901760
    %3262 = vmatpush.msra.mxu0 %v3261
    %v3263 = vand.u32 %v2603, 4294901760
    %3264 = vmatpush.msra.mxu0 %v3263
    %v3265 = vand.u32 %v2667, 4294901760
    %3266 = vmatmul.f32.gmra.mxu0 %v3265
    %v3267 = vpop.f32.mrf.mxu0
    %v3268 = vadd.f32 %v3203, %v3267
    %v3269 = vand.u32 %v2668, 4294901760
    %3270 = vmatmul.f32.gmra.mxu0 %v3269
    %v3271 = vpop.f32.mrf.mxu0
    %v3272 = vadd.f32 %v3207, %v3271
    %v3273 = vand.u32 %v2669, 4294901760
    %3274 = vmatmul.f32.gmra.mxu0 %v3273
    %v3275 = vpop.f32.mrf.mxu0
    %v3276 = vadd.f32 %v3211, %v3275
    %v3277 = vand.u32 %v2670, 4294901760
    %3278 = vmatmul.f32.gmra.mxu0 %v3277
    %v3279 = vpop.f32.mrf.mxu0
    %v3280 = vadd.f32 %v3215, %v3279
    %v3281 = vand.u32 %v2671, 4294901760
    %3282 = vmatmul.f32.gmra.mxu0 %v3281
    %v3283 = vpop.f32.mrf.mxu0
    %v3284 = vadd.f32 %v3219, %v3283
    %v3285 = vand.u32 %v2672, 4294901760
    %3286 = vmatmul.f32.gmra.mxu0 %v3285
    %v3287 = vpop.f32.mrf.mxu0
    %v3288 = vadd.f32 %v3223, %v3287
    %v3289 = vand.u32 %v2673, 4294901760
    %3290 = vmatmul.f32.gmra.mxu0 %v3289
    %v3291 = vpop.f32.mrf.mxu0
    %v3292 = vadd.f32 %v3227, %v3291
    %v3293 = vand.u32 %v2674, 4294901760
    %3294 = vmatmul.f32.gmra.mxu0 %v3293
    %v3295 = vpop.f32.mrf.mxu0
    %v3296 = vadd.f32 %v3231, %v3295
    %3297 = vdwg.mxu0
    %3298 = vmatpush.msra.mxu0 0.0
    %3299 = vmatpush.msra.mxu0 0.0
    %3300 = vmatpush.msra.mxu0 0.0
    %3301 = vmatpush.msra.mxu0 0.0
    %3302 = vmatpush.msra.mxu0 0.0
    %3303 = vmatpush.msra.mxu0 0.0
    %3304 = vmatpush.msra.mxu0 0.0
    %3305 = vmatpush.msra.mxu0 0.0
    %v3306 = vand.u32 %v2626, 4294901760
    %3307 = vmatpush.msra.mxu0 %v3306
    %v3308 = vand.u32 %v2625, 4294901760
    %3309 = vmatpush.msra.mxu0 %v3308
    %v3310 = vand.u32 %v2624, 4294901760
    %3311 = vmatpush.msra.mxu0 %v3310
    %v3312 = vand.u32 %v2623, 4294901760
    %3313 = vmatpush.msra.mxu0 %v3312
    %v3314 = vand.u32 %v2622, 4294901760
    %3315 = vmatpush.msra.mxu0 %v3314
    %v3316 = vand.u32 %v2621, 4294901760
    %3317 = vmatpush.msra.mxu0 %v3316
    %v3318 = vand.u32 %v2620, 4294901760
    %3319 = vmatpush.msra.mxu0 %v3318
    %v3320 = vand.u32 %v2619, 4294901760
    %3321 = vmatpush.msra.mxu0 %v3320
    %v3322 = vand.u32 %v2717, 4294901760
    %v3323 = vsub.f32 %v2717, %v3322
    %v3324 = vand.u32 %v3323, 4294901760
    %v3325 = vsub.f32 %v3323, %v3324
    %v3326 = vand.u32 %v3325, 4294901760
    %3327 = vmatmul.f32.gmra.mxu0 %v3326
    %v3328 = vpop.f32.mrf.mxu0
    %v3329 = vadd.f32 %v3268, %v3328
    %v3330 = vand.u32 %v2720, 4294901760
    %v3331 = vsub.f32 %v2720, %v3330
    %v3332 = vand.u32 %v3331, 4294901760
    %v3333 = vsub.f32 %v3331, %v3332
    %v3334 = vand.u32 %v3333, 4294901760
    %3335 = vmatmul.f32.gmra.mxu0 %v3334
    %v3336 = vpop.f32.mrf.mxu0
    %v3337 = vadd.f32 %v3272, %v3336
    %v3338 = vand.u32 %v2723, 4294901760
    %v3339 = vsub.f32 %v2723, %v3338
    %v3340 = vand.u32 %v3339, 4294901760
    %v3341 = vsub.f32 %v3339, %v3340
    %v3342 = vand.u32 %v3341, 4294901760
    %3343 = vmatmul.f32.gmra.mxu0 %v3342
    %v3344 = vpop.f32.mrf.mxu0
    %v3345 = vadd.f32 %v3276, %v3344
    %v3346 = vand.u32 %v2726, 4294901760
    %v3347 = vsub.f32 %v2726, %v3346
    %v3348 = vand.u32 %v3347, 4294901760
    %v3349 = vsub.f32 %v3347, %v3348
    %v3350 = vand.u32 %v3349, 4294901760
    %3351 = vmatmul.f32.gmra.mxu0 %v3350
    %v3352 = vpop.f32.mrf.mxu0
    %v3353 = vadd.f32 %v3280, %v3352
    %v3354 = vand.u32 %v2729, 4294901760
    %v3355 = vsub.f32 %v2729, %v3354
    %v3356 = vand.u32 %v3355, 4294901760
    %v3357 = vsub.f32 %v3355, %v3356
    %v3358 = vand.u32 %v3357, 4294901760
    %3359 = vmatmul.f32.gmra.mxu0 %v3358
    %v3360 = vpop.f32.mrf.mxu0
    %v3361 = vadd.f32 %v3284, %v3360
    %v3362 = vand.u32 %v2732, 4294901760
    %v3363 = vsub.f32 %v2732, %v3362
    %v3364 = vand.u32 %v3363, 4294901760
    %v3365 = vsub.f32 %v3363, %v3364
    %v3366 = vand.u32 %v3365, 4294901760
    %3367 = vmatmul.f32.gmra.mxu0 %v3366
    %v3368 = vpop.f32.mrf.mxu0
    %v3369 = vadd.f32 %v3288, %v3368
    %v3370 = vand.u32 %v2735, 4294901760
    %v3371 = vsub.f32 %v2735, %v3370
    %v3372 = vand.u32 %v3371, 4294901760
    %v3373 = vsub.f32 %v3371, %v3372
    %v3374 = vand.u32 %v3373, 4294901760
    %3375 = vmatmul.f32.gmra.mxu0 %v3374
    %v3376 = vpop.f32.mrf.mxu0
    %v3377 = vadd.f32 %v3292, %v3376
    %v3378 = vand.u32 %v2738, 4294901760
    %v3379 = vsub.f32 %v2738, %v3378
    %v3380 = vand.u32 %v3379, 4294901760
    %v3381 = vsub.f32 %v3379, %v3380
    %v3382 = vand.u32 %v3381, 4294901760
    %3383 = vmatmul.f32.gmra.mxu0 %v3382
    %v3384 = vpop.f32.mrf.mxu0
    %v3385 = vadd.f32 %v3296, %v3384
    %3386 = vdwg.mxu0
    %3387 = vmatpush.msra.mxu0 0.0
    %3388 = vmatpush.msra.mxu0 0.0
    %3389 = vmatpush.msra.mxu0 0.0
    %3390 = vmatpush.msra.mxu0 0.0
    %3391 = vmatpush.msra.mxu0 0.0
    %3392 = vmatpush.msra.mxu0 0.0
    %3393 = vmatpush.msra.mxu0 0.0
    %3394 = vmatpush.msra.mxu0 0.0
    %v3395 = vand.u32 %v2626, 4294901760
    %v3396 = vsub.f32 %v2626, %v3395
    %v3397 = vand.u32 %v3396, 4294901760
    %v3398 = vsub.f32 %v3396, %v3397
    %v3399 = vand.u32 %v3398, 4294901760
    %3400 = vmatpush.msra.mxu0 %v3399
    %v3401 = vand.u32 %v2625, 4294901760
    %v3402 = vsub.f32 %v2625, %v3401
    %v3403 = vand.u32 %v3402, 4294901760
    %v3404 = vsub.f32 %v3402, %v3403
    %v3405 = vand.u32 %v3404, 4294901760
    %3406 = vmatpush.msra.mxu0 %v3405
    %v3407 = vand.u32 %v2624, 4294901760
    %v3408 = vsub.f32 %v2624, %v3407
    %v3409 = vand.u32 %v3408, 4294901760
    %v3410 = vsub.f32 %v3408, %v3409
    %v3411 = vand.u32 %v3410, 4294901760
    %3412 = vmatpush.msra.mxu0 %v3411
    %v3413 = vand.u32 %v2623, 4294901760
    %v3414 = vsub.f32 %v2623, %v3413
    %v3415 = vand.u32 %v3414, 4294901760
    %v3416 = vsub.f32 %v3414, %v3415
    %v3417 = vand.u32 %v3416, 4294901760
    %3418 = vmatpush.msra.mxu0 %v3417
    %v3419 = vand.u32 %v2622, 4294901760
    %v3420 = vsub.f32 %v2622, %v3419
    %v3421 = vand.u32 %v3420, 4294901760
    %v3422 = vsub.f32 %v3420, %v3421
    %v3423 = vand.u32 %v3422, 4294901760
    %3424 = vmatpush.msra.mxu0 %v3423
    %v3425 = vand.u32 %v2621, 4294901760
    %v3426 = vsub.f32 %v2621, %v3425
    %v3427 = vand.u32 %v3426, 4294901760
    %v3428 = vsub.f32 %v3426, %v3427
    %v3429 = vand.u32 %v3428, 4294901760
    %3430 = vmatpush.msra.mxu0 %v3429
    %v3431 = vand.u32 %v2620, 4294901760
    %v3432 = vsub.f32 %v2620, %v3431
    %v3433 = vand.u32 %v3432, 4294901760
    %v3434 = vsub.f32 %v3432, %v3433
    %v3435 = vand.u32 %v3434, 4294901760
    %3436 = vmatpush.msra.mxu0 %v3435
    %v3437 = vand.u32 %v2619, 4294901760
    %v3438 = vsub.f32 %v2619, %v3437
    %v3439 = vand.u32 %v3438, 4294901760
    %v3440 = vsub.f32 %v3438, %v3439
    %v3441 = vand.u32 %v3440, 4294901760
    %3442 = vmatpush.msra.mxu0 %v3441
    %v3443 = vand.u32 %v2717, 4294901760
    %3444 = vmatmul.f32.gmra.mxu0 %v3443
    %v3445 = vpop.f32.mrf.mxu0
    %v3446 = vadd.f32 %v3329, %v3445
    %v3447 = vand.u32 %v2720, 4294901760
    %3448 = vmatmul.f32.gmra.mxu0 %v3447
    %v3449 = vpop.f32.mrf.mxu0
    %v3450 = vadd.f32 %v3337, %v3449
    %v3451 = vand.u32 %v2723, 4294901760
    %3452 = vmatmul.f32.gmra.mxu0 %v3451
    %v3453 = vpop.f32.mrf.mxu0
    %v3454 = vadd.f32 %v3345, %v3453
    %v3455 = vand.u32 %v2726, 4294901760
    %3456 = vmatmul.f32.gmra.mxu0 %v3455
    %v3457 = vpop.f32.mrf.mxu0
    %v3458 = vadd.f32 %v3353, %v3457
    %v3459 = vand.u32 %v2729, 4294901760
    %3460 = vmatmul.f32.gmra.mxu0 %v3459
    %v3461 = vpop.f32.mrf.mxu0
    %v3462 = vadd.f32 %v3361, %v3461
    %v3463 = vand.u32 %v2732, 4294901760
    %3464 = vmatmul.f32.gmra.mxu0 %v3463
    %v3465 = vpop.f32.mrf.mxu0
    %v3466 = vadd.f32 %v3369, %v3465
    %v3467 = vand.u32 %v2735, 4294901760
    %3468 = vmatmul.f32.gmra.mxu0 %v3467
    %v3469 = vpop.f32.mrf.mxu0
    %v3470 = vadd.f32 %v3377, %v3469
    %v3471 = vand.u32 %v2738, 4294901760
    %3472 = vmatmul.f32.gmra.mxu0 %v3471
    %v3473 = vpop.f32.mrf.mxu0
    %v3474 = vadd.f32 %v3385, %v3473
    %3475 = vdwg.mxu0
    %3476 = vmatpush.msra.mxu0 0.0
    %3477 = vmatpush.msra.mxu0 0.0
    %3478 = vmatpush.msra.mxu0 0.0
    %3479 = vmatpush.msra.mxu0 0.0
    %3480 = vmatpush.msra.mxu0 0.0
    %3481 = vmatpush.msra.mxu0 0.0
    %3482 = vmatpush.msra.mxu0 0.0
    %3483 = vmatpush.msra.mxu0 0.0
    %v3484 = vand.u32 %v2626, 4294901760
    %v3485 = vsub.f32 %v2626, %v3484
    %3486 = vmatpush.msra.mxu0 %v3485
    %v3487 = vand.u32 %v2625, 4294901760
    %v3488 = vsub.f32 %v2625, %v3487
    %3489 = vmatpush.msra.mxu0 %v3488
    %v3490 = vand.u32 %v2624, 4294901760
    %v3491 = vsub.f32 %v2624, %v3490
    %3492 = vmatpush.msra.mxu0 %v3491
    %v3493 = vand.u32 %v2623, 4294901760
    %v3494 = vsub.f32 %v2623, %v3493
    %3495 = vmatpush.msra.mxu0 %v3494
    %v3496 = vand.u32 %v2622, 4294901760
    %v3497 = vsub.f32 %v2622, %v3496
    %3498 = vmatpush.msra.mxu0 %v3497
    %v3499 = vand.u32 %v2621, 4294901760
    %v3500 = vsub.f32 %v2621, %v3499
    %3501 = vmatpush.msra.mxu0 %v3500
    %v3502 = vand.u32 %v2620, 4294901760
    %v3503 = vsub.f32 %v2620, %v3502
    %3504 = vmatpush.msra.mxu0 %v3503
    %v3505 = vand.u32 %v2619, 4294901760
    %v3506 = vsub.f32 %v2619, %v3505
    %3507 = vmatpush.msra.mxu0 %v3506
    %v3508 = vand.u32 %v2717, 4294901760
    %v3509 = vsub.f32 %v2717, %v3508
    %3510 = vmatmul.f32.gmra.mxu0 %v3509
    %v3511 = vpop.f32.mrf.mxu0
    %v3512 = vadd.f32 %v3446, %v3511
    %v3513 = vand.u32 %v2720, 4294901760
    %v3514 = vsub.f32 %v2720, %v3513
    %3515 = vmatmul.f32.gmra.mxu0 %v3514
    %v3516 = vpop.f32.mrf.mxu0
    %v3517 = vadd.f32 %v3450, %v3516
    %v3518 = vand.u32 %v2723, 4294901760
    %v3519 = vsub.f32 %v2723, %v3518
    %3520 = vmatmul.f32.gmra.mxu0 %v3519
    %v3521 = vpop.f32.mrf.mxu0
    %v3522 = vadd.f32 %v3454, %v3521
    %v3523 = vand.u32 %v2726, 4294901760
    %v3524 = vsub.f32 %v2726, %v3523
    %3525 = vmatmul.f32.gmra.mxu0 %v3524
    %v3526 = vpop.f32.mrf.mxu0
    %v3527 = vadd.f32 %v3458, %v3526
    %v3528 = vand.u32 %v2729, 4294901760
    %v3529 = vsub.f32 %v2729, %v3528
    %3530 = vmatmul.f32.gmra.mxu0 %v3529
    %v3531 = vpop.f32.mrf.mxu0
    %v3532 = vadd.f32 %v3462, %v3531
    %v3533 = vand.u32 %v2732, 4294901760
    %v3534 = vsub.f32 %v2732, %v3533
    %3535 = vmatmul.f32.gmra.mxu0 %v3534
    %v3536 = vpop.f32.mrf.mxu0
    %v3537 = vadd.f32 %v3466, %v3536
    %v3538 = vand.u32 %v2735, 4294901760
    %v3539 = vsub.f32 %v2735, %v3538
    %3540 = vmatmul.f32.gmra.mxu0 %v3539
    %v3541 = vpop.f32.mrf.mxu0
    %v3542 = vadd.f32 %v3470, %v3541
    %v3543 = vand.u32 %v2738, 4294901760
    %v3544 = vsub.f32 %v2738, %v3543
    %3545 = vmatmul.f32.gmra.mxu0 %v3544
    %v3546 = vpop.f32.mrf.mxu0
    %v3547 = vadd.f32 %v3474, %v3546
    %3548 = vdwg.mxu0
    %3549 = vmatpush.msra.mxu0 0.0
    %3550 = vmatpush.msra.mxu0 0.0
    %3551 = vmatpush.msra.mxu0 0.0
    %3552 = vmatpush.msra.mxu0 0.0
    %3553 = vmatpush.msra.mxu0 0.0
    %3554 = vmatpush.msra.mxu0 0.0
    %3555 = vmatpush.msra.mxu0 0.0
    %3556 = vmatpush.msra.mxu0 0.0
    %v3557 = vand.u32 %v2626, 4294901760
    %3558 = vmatpush.msra.mxu0 %v3557
    %v3559 = vand.u32 %v2625, 4294901760
    %3560 = vmatpush.msra.mxu0 %v3559
    %v3561 = vand.u32 %v2624, 4294901760
    %3562 = vmatpush.msra.mxu0 %v3561
    %v3563 = vand.u32 %v2623, 4294901760
    %3564 = vmatpush.msra.mxu0 %v3563
    %v3565 = vand.u32 %v2622, 4294901760
    %3566 = vmatpush.msra.mxu0 %v3565
    %v3567 = vand.u32 %v2621, 4294901760
    %3568 = vmatpush.msra.mxu0 %v3567
    %v3569 = vand.u32 %v2620, 4294901760
    %3570 = vmatpush.msra.mxu0 %v3569
    %v3571 = vand.u32 %v2619, 4294901760
    %3572 = vmatpush.msra.mxu0 %v3571
    %v3573 = vand.u32 %v2717, 4294901760
    %v3574 = vsub.f32 %v2717, %v3573
    %v3575 = vand.u32 %v3574, 4294901760
    %3576 = vmatmul.f32.gmra.mxu0 %v3575
    %v3577 = vpop.f32.mrf.mxu0
    %v3578 = vadd.f32 %v3512, %v3577
    %v3579 = vand.u32 %v2720, 4294901760
    %v3580 = vsub.f32 %v2720, %v3579
    %v3581 = vand.u32 %v3580, 4294901760
    %3582 = vmatmul.f32.gmra.mxu0 %v3581
    %v3583 = vpop.f32.mrf.mxu0
    %v3584 = vadd.f32 %v3517, %v3583
    %v3585 = vand.u32 %v2723, 4294901760
    %v3586 = vsub.f32 %v2723, %v3585
    %v3587 = vand.u32 %v3586, 4294901760
    %3588 = vmatmul.f32.gmra.mxu0 %v3587
    %v3589 = vpop.f32.mrf.mxu0
    %v3590 = vadd.f32 %v3522, %v3589
    %v3591 = vand.u32 %v2726, 4294901760
    %v3592 = vsub.f32 %v2726, %v3591
    %v3593 = vand.u32 %v3592, 4294901760
    %3594 = vmatmul.f32.gmra.mxu0 %v3593
    %v3595 = vpop.f32.mrf.mxu0
    %v3596 = vadd.f32 %v3527, %v3595
    %v3597 = vand.u32 %v2729, 4294901760
    %v3598 = vsub.f32 %v2729, %v3597
    %v3599 = vand.u32 %v3598, 4294901760
    %3600 = vmatmul.f32.gmra.mxu0 %v3599
    %v3601 = vpop.f32.mrf.mxu0
    %v3602 = vadd.f32 %v3532, %v3601
    %v3603 = vand.u32 %v2732, 4294901760
    %v3604 = vsub.f32 %v2732, %v3603
    %v3605 = vand.u32 %v3604, 4294901760
    %3606 = vmatmul.f32.gmra.mxu0 %v3605
    %v3607 = vpop.f32.mrf.mxu0
    %v3608 = vadd.f32 %v3537, %v3607
    %v3609 = vand.u32 %v2735, 4294901760
    %v3610 = vsub.f32 %v2735, %v3609
    %v3611 = vand.u32 %v3610, 4294901760
    %3612 = vmatmul.f32.gmra.mxu0 %v3611
    %v3613 = vpop.f32.mrf.mxu0
    %v3614 = vadd.f32 %v3542, %v3613
    %v3615 = vand.u32 %v2738, 4294901760
    %v3616 = vsub.f32 %v2738, %v3615
    %v3617 = vand.u32 %v3616, 4294901760
    %3618 = vmatmul.f32.gmra.mxu0 %v3617
    %v3619 = vpop.f32.mrf.mxu0
    %v3620 = vadd.f32 %v3547, %v3619
    %3621 = vdwg.mxu0
    %3622 = vmatpush.msra.mxu0 0.0
    %3623 = vmatpush.msra.mxu0 0.0
    %3624 = vmatpush.msra.mxu0 0.0
    %3625 = vmatpush.msra.mxu0 0.0
    %3626 = vmatpush.msra.mxu0 0.0
    %3627 = vmatpush.msra.mxu0 0.0
    %3628 = vmatpush.msra.mxu0 0.0
    %3629 = vmatpush.msra.mxu0 0.0
    %v3630 = vand.u32 %v2626, 4294901760
    %v3631 = vsub.f32 %v2626, %v3630
    %v3632 = vand.u32 %v3631, 4294901760
    %3633 = vmatpush.msra.mxu0 %v3632
    %v3634 = vand.u32 %v2625, 4294901760
    %v3635 = vsub.f32 %v2625, %v3634
    %v3636 = vand.u32 %v3635, 4294901760
    %3637 = vmatpush.msra.mxu0 %v3636
    %v3638 = vand.u32 %v2624, 4294901760
    %v3639 = vsub.f32 %v2624, %v3638
    %v3640 = vand.u32 %v3639, 4294901760
    %3641 = vmatpush.msra.mxu0 %v3640
    %v3642 = vand.u32 %v2623, 4294901760
    %v3643 = vsub.f32 %v2623, %v3642
    %v3644 = vand.u32 %v3643, 4294901760
    %3645 = vmatpush.msra.mxu0 %v3644
    %v3646 = vand.u32 %v2622, 4294901760
    %v3647 = vsub.f32 %v2622, %v3646
    %v3648 = vand.u32 %v3647, 4294901760
    %3649 = vmatpush.msra.mxu0 %v3648
    %v3650 = vand.u32 %v2621, 4294901760
    %v3651 = vsub.f32 %v2621, %v3650
    %v3652 = vand.u32 %v3651, 4294901760
    %3653 = vmatpush.msra.mxu0 %v3652
    %v3654 = vand.u32 %v2620, 4294901760
    %v3655 = vsub.f32 %v2620, %v3654
    %v3656 = vand.u32 %v3655, 4294901760
    %3657 = vmatpush.msra.mxu0 %v3656
    %v3658 = vand.u32 %v2619, 4294901760
    %v3659 = vsub.f32 %v2619, %v3658
    %v3660 = vand.u32 %v3659, 4294901760
    %3661 = vmatpush.msra.mxu0 %v3660
    %v3662 = vand.u32 %v2717, 4294901760
    %3663 = vmatmul.f32.gmra.mxu0 %v3662
    %v3664 = vpop.f32.mrf.mxu0
    %v3665 = vadd.f32 %v3578, %v3664
    %v3666 = vand.u32 %v2720, 4294901760
    %3667 = vmatmul.f32.gmra.mxu0 %v3666
    %v3668 = vpop.f32.mrf.mxu0
    %v3669 = vadd.f32 %v3584, %v3668
    %v3670 = vand.u32 %v2723, 4294901760
    %3671 = vmatmul.f32.gmra.mxu0 %v3670
    %v3672 = vpop.f32.mrf.mxu0
    %v3673 = vadd.f32 %v3590, %v3672
    %v3674 = vand.u32 %v2726, 4294901760
    %3675 = vmatmul.f32.gmra.mxu0 %v3674
    %v3676 = vpop.f32.mrf.mxu0
    %v3677 = vadd.f32 %v3596, %v3676
    %v3678 = vand.u32 %v2729, 4294901760
    %3679 = vmatmul.f32.gmra.mxu0 %v3678
    %v3680 = vpop.f32.mrf.mxu0
    %v3681 = vadd.f32 %v3602, %v3680
    %v3682 = vand.u32 %v2732, 4294901760
    %3683 = vmatmul.f32.gmra.mxu0 %v3682
    %v3684 = vpop.f32.mrf.mxu0
    %v3685 = vadd.f32 %v3608, %v3684
    %v3686 = vand.u32 %v2735, 4294901760
    %3687 = vmatmul.f32.gmra.mxu0 %v3686
    %v3688 = vpop.f32.mrf.mxu0
    %v3689 = vadd.f32 %v3614, %v3688
    %v3690 = vand.u32 %v2738, 4294901760
    %3691 = vmatmul.f32.gmra.mxu0 %v3690
    %v3692 = vpop.f32.mrf.mxu0
    %v3693 = vadd.f32 %v3620, %v3692
    %3694 = vdwg.mxu0
    %3695 = vmatpush.msra.mxu0 0.0
    %3696 = vmatpush.msra.mxu0 0.0
    %3697 = vmatpush.msra.mxu0 0.0
    %3698 = vmatpush.msra.mxu0 0.0
    %3699 = vmatpush.msra.mxu0 0.0
    %3700 = vmatpush.msra.mxu0 0.0
    %3701 = vmatpush.msra.mxu0 0.0
    %3702 = vmatpush.msra.mxu0 0.0
    %v3703 = vand.u32 %v2626, 4294901760
    %3704 = vmatpush.msra.mxu0 %v3703
    %v3705 = vand.u32 %v2625, 4294901760
    %3706 = vmatpush.msra.mxu0 %v3705
    %v3707 = vand.u32 %v2624, 4294901760
    %3708 = vmatpush.msra.mxu0 %v3707
    %v3709 = vand.u32 %v2623, 4294901760
    %3710 = vmatpush.msra.mxu0 %v3709
    %v3711 = vand.u32 %v2622, 4294901760
    %3712 = vmatpush.msra.mxu0 %v3711
    %v3713 = vand.u32 %v2621, 4294901760
    %3714 = vmatpush.msra.mxu0 %v3713
    %v3715 = vand.u32 %v2620, 4294901760
    %3716 = vmatpush.msra.mxu0 %v3715
    %v3717 = vand.u32 %v2619, 4294901760
    %3718 = vmatpush.msra.mxu0 %v3717
    %v3719 = vand.u32 %v2717, 4294901760
    %3720 = vmatmul.f32.gmra.mxu0 %v3719
    %v3721 = vpop.f32.mrf.mxu0
    %v3722 = vadd.f32 %v3665, %v3721
    %v3723 = vand.u32 %v2720, 4294901760
    %3724 = vmatmul.f32.gmra.mxu0 %v3723
    %v3725 = vpop.f32.mrf.mxu0
    %v3726 = vadd.f32 %v3669, %v3725
    %v3727 = vand.u32 %v2723, 4294901760
    %3728 = vmatmul.f32.gmra.mxu0 %v3727
    %v3729 = vpop.f32.mrf.mxu0
    %v3730 = vadd.f32 %v3673, %v3729
    %v3731 = vand.u32 %v2726, 4294901760
    %3732 = vmatmul.f32.gmra.mxu0 %v3731
    %v3733 = vpop.f32.mrf.mxu0
    %v3734 = vadd.f32 %v3677, %v3733
    %v3735 = vand.u32 %v2729, 4294901760
    %3736 = vmatmul.f32.gmra.mxu0 %v3735
    %v3737 = vpop.f32.mrf.mxu0
    %v3738 = vadd.f32 %v3681, %v3737
    %v3739 = vand.u32 %v2732, 4294901760
    %3740 = vmatmul.f32.gmra.mxu0 %v3739
    %v3741 = vpop.f32.mrf.mxu0
    %v3742 = vadd.f32 %v3685, %v3741
    %v3743 = vand.u32 %v2735, 4294901760
    %3744 = vmatmul.f32.gmra.mxu0 %v3743
    %v3745 = vpop.f32.mrf.mxu0
    %v3746 = vadd.f32 %v3689, %v3745
    %v3747 = vand.u32 %v2738, 4294901760
    %3748 = vmatmul.f32.gmra.mxu0 %v3747
    %v3749 = vpop.f32.mrf.mxu0
    %v3750 = vadd.f32 %v3693, %v3749
    %3751 = vdwg.mxu0
    %v3752 = vmul.f32 %v3722, 0.25
    %v3753 = vmul.f32 %v3726, 0.25
    %v3754 = vmul.f32 %v3730, 0.25
    %v3755 = vmul.f32 %v3734, 0.25
    %v3756 = vmul.f32 %v3738, 0.25
    %v3757 = vmul.f32 %v3742, 0.25
    %v3758 = vmul.f32 %v3746, 0.25
    %v3759 = vmul.f32 %v3750, 0.25
    %3768 = vrot.lane.b32.xlu0 %v3752, 32
    %v3769 = vpop.permute.xlu0 %3768
    %3770 = vrot.lane.b32.xlu0 %v3753, 32
    %v3771 = vpop.permute.xlu0 %3770
    %3772 = vrot.lane.b32.xlu0 %v3754, 32
    %v3773 = vpop.permute.xlu0 %3772
    %3774 = vrot.lane.b32.xlu0 %v3755, 32
    %v3775 = vpop.permute.xlu0 %3774
    %3776 = vrot.lane.b32.xlu0 %v3756, 32
    %v3777 = vpop.permute.xlu0 %3776
    %3778 = vrot.lane.b32.xlu0 %v3757, 32
    %v3779 = vpop.permute.xlu0 %3778
    %3780 = vrot.lane.b32.xlu0 %v3758, 32
    %v3781 = vpop.permute.xlu0 %3780
    %3782 = vrot.lane.b32.xlu0 %v3759, 32
    %v3783 = vpop.permute.xlu0 %3782
    %v3792 = vsel %vm77, %v17, %v3769
    %v3793 = vsel %vm77, %v18, %v3771
    %v3794 = vsel %vm77, %v19, %v3773
    %v3795 = vsel %vm77, %v20, %v3775
    %v3796 = vsel %vm77, %v21, %v3777
    %v3797 = vsel %vm77, %v22, %v3779
    %v3798 = vsel %vm77, %v23, %v3781
    %v3799 = vsel %vm77, %v24, %v3783
    %v3800 = vperm.slane %v75, 0
    %v3802 = vsel %vm2715, %v3792, 0
    %v3805 = vsel %vm2715, %v3793, 0
    %v3808 = vsel %vm2715, %v3794, 0
    %v3811 = vsel %vm2715, %v3795, 0
    %v3814 = vsel %vm2715, %v3796, 0
    %v3817 = vsel %vm2715, %v3797, 0
    %v3820 = vsel %vm2715, %v3798, 0
    %v3823 = vsel %vm2715, %v3799, 0
    %3825 = vmatpush.msra.mxu0 0.0
    %3826 = vmatpush.msra.mxu0 0.0
    %3827 = vmatpush.msra.mxu0 0.0
    %3828 = vmatpush.msra.mxu0 0.0
    %3829 = vmatpush.msra.mxu0 0.0
    %3830 = vmatpush.msra.mxu0 0.0
    %3831 = vmatpush.msra.mxu0 0.0
    %3832 = vmatpush.msra.mxu0 0.0
    %3833 = vmatpush.msra.mxu0 %v68
    %3834 = vmatpush.msra.mxu0 %v67
    %3835 = vmatpush.msra.mxu0 %v66
    %3836 = vmatpush.msra.mxu0 %v65
    %3837 = vmatpush.msra.mxu0 %v64
    %3838 = vmatpush.msra.mxu0 %v63
    %3839 = vmatpush.msra.mxu0 %v62
    %3840 = vmatpush.msra.mxu0 %v61
    %3841 = vmatmul.f32.gmra.mxu0 %v3802
    %v3842 = vpop.f32.mrf.mxu0
    %v3843 = vadd.f32 %v3800, %v3842
    %3844 = vmatmul.f32.gmra.mxu0 %v3805
    %v3845 = vpop.f32.mrf.mxu0
    %v3846 = vadd.f32 %v3800, %v3845
    %3847 = vmatmul.f32.gmra.mxu0 %v3808
    %v3848 = vpop.f32.mrf.mxu0
    %v3849 = vadd.f32 %v3800, %v3848
    %3850 = vmatmul.f32.gmra.mxu0 %v3811
    %v3851 = vpop.f32.mrf.mxu0
    %v3852 = vadd.f32 %v3800, %v3851
    %3853 = vmatmul.f32.gmra.mxu0 %v3814
    %v3854 = vpop.f32.mrf.mxu0
    %v3855 = vadd.f32 %v3800, %v3854
    %3856 = vmatmul.f32.gmra.mxu0 %v3817
    %v3857 = vpop.f32.mrf.mxu0
    %v3858 = vadd.f32 %v3800, %v3857
    %3859 = vmatmul.f32.gmra.mxu0 %v3820
    %v3860 = vpop.f32.mrf.mxu0
    %v3861 = vadd.f32 %v3800, %v3860
    %3862 = vmatmul.f32.gmra.mxu0 %v3823
    %v3863 = vpop.f32.mrf.mxu0
    %v3864 = vadd.f32 %v3800, %v3863
    %3865 = vdwg.mxu0
    %v3866 = vxor.u32 %v3843, 2147483648
    %v3867 = vxor.u32 %v3846, 2147483648
    %v3868 = vxor.u32 %v3849, 2147483648
    %v3869 = vxor.u32 %v3852, 2147483648
    %v3870 = vxor.u32 %v3855, 2147483648
    %v3871 = vxor.u32 %v3858, 2147483648
    %v3872 = vxor.u32 %v3861, 2147483648
    %v3873 = vxor.u32 %v3864, 2147483648
    %v3874 = vmul.f32 %v3866, 1.442695
    %v3875 = vpow.pop %v3874
    %v3876 = vmul.f32 %v3867, 1.442695
    %v3877 = vpow.pop %v3876
    %v3878 = vmul.f32 %v3868, 1.442695
    %v3879 = vpow.pop %v3878
    %v3880 = vmul.f32 %v3869, 1.442695
    %v3881 = vpow.pop %v3880
    %v3882 = vmul.f32 %v3870, 1.442695
    %v3883 = vpow.pop %v3882
    %v3884 = vmul.f32 %v3871, 1.442695
    %v3885 = vpow.pop %v3884
    %v3886 = vmul.f32 %v3872, 1.442695
    %v3887 = vpow.pop %v3886
    %v3888 = vmul.f32 %v3873, 1.442695
    %v3889 = vpow.pop %v3888
    %v3890 = vadd.f32 %v3875, 1.0
    %v3891 = vadd.f32 %v3877, 1.0
    %v3892 = vadd.f32 %v3879, 1.0
    %v3893 = vadd.f32 %v3881, 1.0
    %v3894 = vadd.f32 %v3883, 1.0
    %v3895 = vadd.f32 %v3885, 1.0
    %v3896 = vadd.f32 %v3887, 1.0
    %v3897 = vadd.f32 %v3889, 1.0
    %v3898 = vrcp.pop %v3890
    %v3899 = vmul.f32 %v3890, %v3898
    %v3900 = vsub.f32 1.0, %v3899
    %v3901 = vmul.f32 %v3898, %v3900
    %v3902 = vadd.f32 %v3898, %v3901
    %vm3903 = vweird.f32 %v3890
    %vm3904 = vweird.f32 %v3898
    %vm3905 = vmor %vm3903, %vm3904
    %v3906 = vsel %vm3905, %v3898, %v3902
    %v3907 = vand.u32 2147483647, %v3890
    %vm3908 = vcmp.eq.f32.partialorder %v3907, 8.507059e+37
    %v3909 = vand.u32 %v3890, 2147483648
    %v3910 = vor.u32 1.1754944e-38, %v3909
    %v3911 = vsel %vm3908, %v3910, %v3906
    %v3912 = vmul.f32 1.0, %v3911
    %v3913 = vrcp.pop %v3891
    %v3914 = vmul.f32 %v3891, %v3913
    %v3915 = vsub.f32 1.0, %v3914
    %v3916 = vmul.f32 %v3913, %v3915
    %v3917 = vadd.f32 %v3913, %v3916
    %vm3918 = vweird.f32 %v3891
    %vm3919 = vweird.f32 %v3913
    %vm3920 = vmor %vm3918, %vm3919
    %v3921 = vsel %vm3920, %v3913, %v3917
    %v3922 = vand.u32 2147483647, %v3891
    %vm3923 = vcmp.eq.f32.partialorder %v3922, 8.507059e+37
    %v3924 = vand.u32 %v3891, 2147483648
    %v3925 = vor.u32 1.1754944e-38, %v3924
    %v3926 = vsel %vm3923, %v3925, %v3921
    %v3927 = vmul.f32 1.0, %v3926
    %v3928 = vrcp.pop %v3892
    %v3929 = vmul.f32 %v3892, %v3928
    %v3930 = vsub.f32 1.0, %v3929
    %v3931 = vmul.f32 %v3928, %v3930
    %v3932 = vadd.f32 %v3928, %v3931
    %vm3933 = vweird.f32 %v3892
    %vm3934 = vweird.f32 %v3928
    %vm3935 = vmor %vm3933, %vm3934
    %v3936 = vsel %vm3935, %v3928, %v3932
    %v3937 = vand.u32 2147483647, %v3892
    %vm3938 = vcmp.eq.f32.partialorder %v3937, 8.507059e+37
    %v3939 = vand.u32 %v3892, 2147483648
    %v3940 = vor.u32 1.1754944e-38, %v3939
    %v3941 = vsel %vm3938, %v3940, %v3936
    %v3942 = vmul.f32 1.0, %v3941
    %v3943 = vrcp.pop %v3893
    %v3944 = vmul.f32 %v3893, %v3943
    %v3945 = vsub.f32 1.0, %v3944
    %v3946 = vmul.f32 %v3943, %v3945
    %v3947 = vadd.f32 %v3943, %v3946
    %vm3948 = vweird.f32 %v3893
    %vm3949 = vweird.f32 %v3943
    %vm3950 = vmor %vm3948, %vm3949
    %v3951 = vsel %vm3950, %v3943, %v3947
    %v3952 = vand.u32 2147483647, %v3893
    %vm3953 = vcmp.eq.f32.partialorder %v3952, 8.507059e+37
    %v3954 = vand.u32 %v3893, 2147483648
    %v3955 = vor.u32 1.1754944e-38, %v3954
    %v3956 = vsel %vm3953, %v3955, %v3951
    %v3957 = vmul.f32 1.0, %v3956
    %v3958 = vrcp.pop %v3894
    %v3959 = vmul.f32 %v3894, %v3958
    %v3960 = vsub.f32 1.0, %v3959
    %v3961 = vmul.f32 %v3958, %v3960
    %v3962 = vadd.f32 %v3958, %v3961
    %vm3963 = vweird.f32 %v3894
    %vm3964 = vweird.f32 %v3958
    %vm3965 = vmor %vm3963, %vm3964
    %v3966 = vsel %vm3965, %v3958, %v3962
    %v3967 = vand.u32 2147483647, %v3894
    %vm3968 = vcmp.eq.f32.partialorder %v3967, 8.507059e+37
    %v3969 = vand.u32 %v3894, 2147483648
    %v3970 = vor.u32 1.1754944e-38, %v3969
    %v3971 = vsel %vm3968, %v3970, %v3966
    %v3972 = vmul.f32 1.0, %v3971
    %v3973 = vrcp.pop %v3895
    %v3974 = vmul.f32 %v3895, %v3973
    %v3975 = vsub.f32 1.0, %v3974
    %v3976 = vmul.f32 %v3973, %v3975
    %v3977 = vadd.f32 %v3973, %v3976
    %vm3978 = vweird.f32 %v3895
    %vm3979 = vweird.f32 %v3973
    %vm3980 = vmor %vm3978, %vm3979
    %v3981 = vsel %vm3980, %v3973, %v3977
    %v3982 = vand.u32 2147483647, %v3895
    %vm3983 = vcmp.eq.f32.partialorder %v3982, 8.507059e+37
    %v3984 = vand.u32 %v3895, 2147483648
    %v3985 = vor.u32 1.1754944e-38, %v3984
    %v3986 = vsel %vm3983, %v3985, %v3981
    %v3987 = vmul.f32 1.0, %v3986
    %v3988 = vrcp.pop %v3896
    %v3989 = vmul.f32 %v3896, %v3988
    %v3990 = vsub.f32 1.0, %v3989
    %v3991 = vmul.f32 %v3988, %v3990
    %v3992 = vadd.f32 %v3988, %v3991
    %vm3993 = vweird.f32 %v3896
    %vm3994 = vweird.f32 %v3988
    %vm3995 = vmor %vm3993, %vm3994
    %v3996 = vsel %vm3995, %v3988, %v3992
    %v3997 = vand.u32 2147483647, %v3896
    %vm3998 = vcmp.eq.f32.partialorder %v3997, 8.507059e+37
    %v3999 = vand.u32 %v3896, 2147483648
    %v4000 = vor.u32 1.1754944e-38, %v3999
    %v4001 = vsel %vm3998, %v4000, %v3996
    %v4002 = vmul.f32 1.0, %v4001
    %v4003 = vrcp.pop %v3897
    %v4004 = vmul.f32 %v3897, %v4003
    %v4005 = vsub.f32 1.0, %v4004
    %v4006 = vmul.f32 %v4003, %v4005
    %v4007 = vadd.f32 %v4003, %v4006
    %vm4008 = vweird.f32 %v3897
    %vm4009 = vweird.f32 %v4003
    %vm4010 = vmor %vm4008, %vm4009
    %v4011 = vsel %vm4010, %v4003, %v4007
    %v4012 = vand.u32 2147483647, %v3897
    %vm4013 = vcmp.eq.f32.partialorder %v4012, 8.507059e+37
    %v4014 = vand.u32 %v3897, 2147483648
    %v4015 = vor.u32 1.1754944e-38, %v4014
    %v4016 = vsel %vm4013, %v4015, %v4011
    %v4017 = vmul.f32 1.0, %v4016
    %v4018 = vmul.f32 %v3843, %v3912
    %v4019 = vmul.f32 %v3846, %v3927
    %v4020 = vmul.f32 %v3849, %v3942
    %v4021 = vmul.f32 %v3852, %v3957
    %v4022 = vmul.f32 %v3855, %v3972
    %v4023 = vmul.f32 %v3858, %v3987
    %v4024 = vmul.f32 %v3861, %v4002
    %v4025 = vmul.f32 %v3864, %v4017
    %v4026 = vperm.slane %v76, 0
    %v4028 = vsel %vm77, %v4018, 0
    %v4031 = vsel %vm77, %v4019, 0
    %v4034 = vsel %vm77, %v4020, 0
    %v4037 = vsel %vm77, %v4021, 0
    %v4040 = vsel %vm77, %v4022, 0
    %v4043 = vsel %vm77, %v4023, 0
    %v4046 = vsel %vm77, %v4024, 0
    %v4049 = vsel %vm77, %v4025, 0
    %4051 = vmatpush.msra.mxu0 0.0
    %4052 = vmatpush.msra.mxu0 0.0
    %4053 = vmatpush.msra.mxu0 0.0
    %4054 = vmatpush.msra.mxu0 0.0
    %4055 = vmatpush.msra.mxu0 0.0
    %4056 = vmatpush.msra.mxu0 0.0
    %4057 = vmatpush.msra.mxu0 0.0
    %4058 = vmatpush.msra.mxu0 0.0
    %4059 = vmatpush.msra.mxu0 0.0
    %4060 = vmatpush.msra.mxu0 0.0
    %4061 = vmatpush.msra.mxu0 0.0
    %4062 = vmatpush.msra.mxu0 0.0
    %4063 = vmatpush.msra.mxu0 %v72
    %4064 = vmatpush.msra.mxu0 %v71
    %4065 = vmatpush.msra.mxu0 %v70
    %4066 = vmatpush.msra.mxu0 %v69
    %4067 = vmatmul.f32.gmra.mxu0 %v4028
    %v4068 = vpop.f32.mrf.mxu0
    %v4069 = vadd.f32 %v4026, %v4068
    %4070 = vmatmul.f32.gmra.mxu0 %v4031
    %v4071 = vpop.f32.mrf.mxu0
    %v4072 = vadd.f32 %v4026, %v4071
    %4073 = vmatmul.f32.gmra.mxu0 %v4034
    %v4074 = vpop.f32.mrf.mxu0
    %v4075 = vadd.f32 %v4026, %v4074
    %4076 = vmatmul.f32.gmra.mxu0 %v4037
    %v4077 = vpop.f32.mrf.mxu0
    %v4078 = vadd.f32 %v4026, %v4077
    %4079 = vmatmul.f32.gmra.mxu0 %v4040
    %v4080 = vpop.f32.mrf.mxu0
    %v4081 = vadd.f32 %v4026, %v4080
    %4082 = vmatmul.f32.gmra.mxu0 %v4043
    %v4083 = vpop.f32.mrf.mxu0
    %v4084 = vadd.f32 %v4026, %v4083
    %4085 = vmatmul.f32.gmra.mxu0 %v4046
    %v4086 = vpop.f32.mrf.mxu0
    %v4087 = vadd.f32 %v4026, %v4086
    %4088 = vmatmul.f32.gmra.mxu0 %v4049
    %v4089 = vpop.f32.mrf.mxu0
    %v4090 = vadd.f32 %v4026, %v4089
    %4091 = vdwg.mxu0
    %v4092 = vadd.f32 %v17, %v4069
    %v4093 = vadd.f32 %v18, %v4072
    %v4094 = vadd.f32 %v19, %v4075
    %v4095 = vadd.f32 %v20, %v4078
    %v4096 = vadd.f32 %v21, %v4081
    %v4097 = vadd.f32 %v22, %v4084
    %v4098 = vadd.f32 %v23, %v4087
    %v4099 = vadd.f32 %v24, %v4090
    %4100 = vst.msk [vmem:[#allocation2] sm:$0xff] %vm77, %v4092
    %4101 = vst.msk [vmem:[#allocation2 + $0x8] sm:$0xff] %vm77, %v4093
    %4102 = vst.msk [vmem:[#allocation2 + $0x10] sm:$0xff] %vm77, %v4094
    %4103 = vst.msk [vmem:[#allocation2 + $0x18] sm:$0xff] %vm77, %v4095
    %4104 = vst.msk [vmem:[#allocation2 + $0x20] sm:$0xff] %vm77, %v4096
    %4105 = vst.msk [vmem:[#allocation2 + $0x28] sm:$0xff] %vm77, %v4097
    %4106 = vst.msk [vmem:[#allocation2 + $0x30] sm:$0xff] %vm77, %v4098
    %4107 = vst.msk [vmem:[#allocation2 + $0x38] sm:$0xff] %vm77, %v4099
    // Predicated region
    $region14: #{gcl_forward.1} parent=1 // pred_check
      _
    $region15: #{gcl_forward.1} parent=1 // pred_check_branch
      %4109 = sbr.rel (0) target = $region17
    $region16: #{gcl_forward.1} parent=1 // pred_region
      %4111 = vsyncadd [#allocation3], 0
      %s4112 = sshll.u32 [#allocation2], 4
      %s4113 = int_to_ptr.vmem [resolvable:$true] %s4112
      %s4114 = sshll.u32 %s3, 4
      %s4115 = int_to_ptr.hbm [resolvable:$true] %s4114
      %4120 = dma.vmem_to_hbm [thread:$0]  %s4113, 1024, %s4115, [#allocation3], 128, 128, 8
    $region17: #{gcl_forward.1} parent=1 // pred_fallthru
      _
    // Predicated region
    $region18: #{gcl_forward.1} parent=1 // pred_check
      _
    $region19: #{gcl_forward.1} parent=1 // pred_check_branch
      %4122 = sbr.rel (0) target = $region21
    $region20: #{gcl_forward.1} parent=1 // pred_region
      _
    $region21: #{gcl_forward.1} parent=1 // pred_fallthru
      _
    // Predicated region
    $region22: #{gcl_forward.1} parent=1 // pred_check
      _
    $region23: #{gcl_forward.1} parent=1 // pred_check_branch
      %4124 = sbr.rel (0) target = $region25
    $region24: #{gcl_forward.1} parent=1 // pred_region
      %4126 = dma.done [#allocation3], 1024
    $region25: #{gcl_forward.1} parent=1 // pred_fallthru
      _
    // Predicated region
    $region26: #{gcl_forward.1} parent=1 // pred_check
      _
    $region27: #{gcl_forward.1} parent=1 // pred_check_branch
      %4128 = sbr.rel (0) target = $region29
    $region28: #{gcl_forward.1} parent=1 // pred_region
      _
    $region29: #{gcl_forward.1} parent=1 // pred_fallthru
      _
    %4129 = vsyncpa [#allocation3], 1

</llo_original>
